<compile_context>
chip_gen: v5e
topology: v5e:2x2
jax: 0.10.0
libtpu: 0.0.40
codegen_flags: <defaults>
</compile_context>

<pallas_src>
import functools
import math

import jax
import jax.numpy as jnp
from jax import lax
from jax.experimental import pallas as pl
from jax.experimental.pallas import tpu as pltpu

MAXNORM = 1.0 - 1e-5  # Poincare-ball boundary eps


def _round_up(x, m):
    return (x + m - 1) // m * m


def _rff_kernel(e_ref, lam_ref, bias_ref, out_ref, en_scr, *, norm_const):
    # e_ref:   (tm, dim)   row tile of embeddings (f32), resident across j
    # lam_ref: (dim, tn)   column tile of Lambdas (f32)
    # bias_ref:(1,  tn)    bias slice (f32)
    # out_ref: (tm, tn)    output tile
    # en_scr:  (tm, dim)   normalized embeddings, cast once to the matmul dtype
    j = pl.program_id(1)

    @pl.when(j == 0)
    def _():
        e = e_ref[...]
        # Poincare-ball renorm: clip each row's L2 norm to MAXNORM.
        # rsqrt + min: one EUP op (vs sqrt + divide + select) and safe for
        # zero-norm rows (rsqrt(0) = inf -> min picks 1.0, no NaN).
        sumsq = jnp.sum(e * e, axis=-1, keepdims=True)
        scale = jnp.minimum(1.0, MAXNORM * lax.rsqrt(sumsq))
        en_scr[...] = (e * scale).astype(en_scr.dtype)

    # Single-pass MXU matmul (bf16 inputs by default), f32 accumulate.
    z = jnp.dot(en_scr[...], lam_ref[...].astype(en_scr.dtype),
                preferred_element_type=jnp.float32)
    z = z + bias_ref[...]
    out_ref[...] = (norm_const * jnp.cos(z)).astype(out_ref.dtype)


def rff_forward(e, lambdas, bias, *, tm=256, tn=None,
                matmul_dtype=jnp.bfloat16, out_dtype=jnp.float32):
    """Pallas implementation of RFF.forward().

    e:        (size, dim)        float32   manifold lookup-table weights
    lambdas:  (dim, HyLa_fdim)   float32   fixed random projection
    bias:     (HyLa_fdim,)       float32   fixed random phases
    returns:  (size, HyLa_fdim)  out_dtype
    """
    size, dim = e.shape
    fdim = lambdas.shape[1]
    norm_const = math.sqrt(2.0) / math.sqrt(dim)  # self.norm * sqrt(2)

    # ---- row tiling: large tiles, multiple of 8; pad rows if not divisible.
    tm = max(8, min(_round_up(tm, 8), _round_up(size, 8)))
    size_p = _round_up(size, tm)
    if size_p != size:
        e = jnp.pad(e, ((0, size_p - size), (0, 0)))

    # ---- column tiling: lane-dense output tiles. Use the full feature dim in
    # one step if it fits a conservative VMEM budget (safe on v5e/v6e/v7x with
    # vmem_limit_bytes=32MiB), else a large power-of-two multiple of 128.
    budget = 24 * 1024 * 1024

    def fits(tn_):
        # double-buffered e/Lambdas/bias/out tiles (f32) + the e_n scratch
        return (2 * 4 * (tm * dim + dim * tn_ + tn_ + tm * tn_)
                + 2 * tm * dim) <= budget

    if tn is None:
        if fits(fdim):
            tn = fdim                      # single column step, full fdim
        else:
            tn = 4096
            while tn > 128 and not fits(tn):
                tn //= 2
    fdim_p = _round_up(fdim, tn)
    if fdim_p != fdim:
        lambdas = jnp.pad(lambdas, ((0, 0), (0, fdim_p - fdim)))
        bias = jnp.pad(bias, (0, fdim_p - fdim))
    bias2d = bias.reshape(1, fdim_p)

    grid = (size_p // tm, fdim_p // tn)
    kernel = functools.partial(_rff_kernel, norm_const=norm_const)

    out = pl.pallas_call(
        kernel,
        out_shape=jax.ShapeDtypeStruct((size_p, fdim_p), out_dtype),
        grid_spec=pltpu.PrefetchScalarGridSpec(
            num_scalar_prefetch=0,
            grid=grid,
            in_specs=[
                # embedding row tile: block index constant across j -> one DMA
                pl.BlockSpec((tm, dim), lambda i, j: (i, 0)),
                pl.BlockSpec((dim, tn), lambda i, j: (0, j)),   # Lambdas tile
                pl.BlockSpec((1, tn), lambda i, j: (0, j)),     # bias slice
            ],
            out_specs=pl.BlockSpec((tm, tn), lambda i, j: (i, j)),
            scratch_shapes=[pltpu.VMEM((tm, dim), matmul_dtype)],
        ),
        compiler_params=pltpu.CompilerParams(
            dimension_semantics=("parallel", "arbitrary"),
            vmem_limit_bytes=32 * 1024 * 1024),
    )(e, lambdas, bias2d)

    if size_p != size or fdim_p != fdim:
        out = out[:size, :fdim]
    return out


def rff_reference(e, lambdas, bias):
    norm = jnp.sqrt(jnp.sum(e * e, axis=-1, keepdims=True))
    scale = jnp.where(norm > MAXNORM, MAXNORM / norm, 1.0)
    e_n = e * scale
    dim = e.shape[1]
    c = math.sqrt(2.0) / math.sqrt(dim)
    return c * jnp.cos(e_n @ lambdas + bias[None, :])


if __name__ == "__main__":
    # Small shapes consistent with the module: `size` points of `dim`-dim
    # embeddings mapped to HyLa_fdim random Fourier features.
    size, dim, hyla_fdim, scale = 128, 16, 256, 0.1

    key = jax.random.PRNGKey(0)
    k_lt, k_lam, k_bias = jax.random.split(key, 3)

    # manifold.init_weights: small uniform init of the lookup-table weights.
    lt_weight = jax.random.uniform(k_lt, (size, dim), jnp.float32,
                                   minval=-1e-3, maxval=1e-3)
    # Lambdas ~ N(0, scale), fixed (requires_grad=False).
    lambdas = scale * jax.random.normal(k_lam, (dim, hyla_fdim), jnp.float32)
    # bias ~ U(0, 2*pi), fixed.
    bias = jax.random.uniform(k_bias, (hyla_fdim,), jnp.float32,
                              minval=0.0, maxval=2.0 * math.pi)

    feats = rff_forward(lt_weight, lambdas, bias)
    feats = jax.block_until_ready(feats)

    ref = rff_reference(lt_weight, lambdas, bias)
    assert feats.shape == (size, hyla_fdim)
    assert bool(jnp.all(jnp.isfinite(feats)))
    # bf16 MXU inputs perturb the output at ~1e-5; tolerance accounts for that.
    assert jnp.allclose(feats, ref, atol=1e-4, rtol=1e-4), float(
        jnp.max(jnp.abs(feats - ref)))

    print("KERNEL_OK")
</pallas_src>

<mosaic_0001>
module attributes {stable_mosaic.version = 11 : i64} {
  func.func @_rff_kernel(%arg0: i32, %arg1: i32, %arg2: memref<128x16xf32, #tpu.memory_space<vmem>>, %arg3: memref<16x256xf32, #tpu.memory_space<vmem>>, %arg4: memref<1x256xf32, #tpu.memory_space<vmem>>, %arg5: memref<128x256xf32, #tpu.memory_space<vmem>>, %arg6: memref<128x16xbf16, #tpu.memory_space<vmem>>) attributes {dimension_semantics = [#tpu.dimension_semantics<parallel>, #tpu.dimension_semantics<arbitrary>], iteration_bounds = array<i64: 1, 1>, scalar_prefetch = 0 : i64, scratch_operands = 1 : i64, tpu.core_type = #tpu.core_type<tc>, window_params = [{transform_indices = @transform_0, window_bounds = array<i64: 128, 16>}, {transform_indices = @transform_1, window_bounds = array<i64: 16, 256>}, {transform_indices = @transform_2, window_bounds = array<i64: 1, 256>}, {transform_indices = @transform_3, window_bounds = array<i64: 128, 256>}]} {
    %c0_i32 = arith.constant 0 : i32
    %0 = arith.cmpi eq, %arg1, %c0_i32 : i32
    %1 = arith.extui %0 : i1 to i32
    %c0_i32_0 = arith.constant 0 : i32
    %2 = arith.cmpi ne, %1, %c0_i32_0 : i32
    scf.if %2 {
      %c0_9 = arith.constant 0 : index
      %c0_10 = arith.constant 0 : index
      %14 = vector.load %arg2[%c0_9, %c0_10] : memref<128x16xf32, #tpu.memory_space<vmem>>, vector<128x16xf32>
      %15 = arith.mulf %14, %14 : vector<128x16xf32>
      %cst_11 = arith.constant dense<0.000000e+00> : vector<128xf32>
      %16 = vector.multi_reduction <add>, %15, %cst_11 [1] : vector<128x16xf32> to vector<128xf32>
      %17 = vector.shape_cast %16 : vector<128xf32> to vector<128x1xf32>
      %18 = math.rsqrt %17 : vector<128x1xf32>
      %cst_12 = arith.constant 0.999989986 : f32
      %19 = vector.broadcast %cst_12 : f32 to vector<128x1xf32>
      %20 = arith.mulf %19, %18 : vector<128x1xf32>
      %cst_13 = arith.constant 1.000000e+00 : f32
      %21 = vector.broadcast %cst_13 : f32 to vector<128x1xf32>
      %22 = arith.minimumf %21, %20 : vector<128x1xf32>
      %23 = vector.broadcast %22 : vector<128x1xf32> to vector<128x16xf32>
      %24 = arith.mulf %14, %23 : vector<128x16xf32>
      %25 = arith.truncf %24 : vector<128x16xf32> to vector<128x16xbf16>
      %c0_14 = arith.constant 0 : index
      %c0_15 = arith.constant 0 : index
      %26 = vector.load %arg6[%c0_14, %c0_15] : memref<128x16xbf16, #tpu.memory_space<vmem>>, vector<128x16xbf16>
      tpu.vector_store %arg6[%c0_14, %c0_15], %25 {strides = array<i32>} : memref<128x16xbf16, #tpu.memory_space<vmem>>, vector<128x16xbf16>,
    } else {
    }
    %c0 = arith.constant 0 : index
    %c0_1 = arith.constant 0 : index
    %3 = vector.load %arg6[%c0, %c0_1] : memref<128x16xbf16, #tpu.memory_space<vmem>>, vector<128x16xbf16>
    %c0_2 = arith.constant 0 : index
    %c0_3 = arith.constant 0 : index
    %4 = vector.load %arg3[%c0_2, %c0_3] : memref<16x256xf32, #tpu.memory_space<vmem>>, vector<16x256xf32>
    %5 = arith.truncf %4 : vector<16x256xf32> to vector<16x256xbf16>
    %cst = arith.constant dense<0.000000e+00> : vector<128x256xf32>
    %6 = tpu.matmul %3, %5, %cst {dimension_numbers = #tpu.dot_dimension_numbers<[1], [0], [0], [1], [0, 0, 1, 1], [], []>} : vector<128x16xbf16>, vector<16x256xbf16>, vector<128x256xf32> -> vector<128x256xf32>
    %c0_4 = arith.constant 0 : index
    %c0_5 = arith.constant 0 : index
    %7 = vector.load %arg4[%c0_4, %c0_5] : memref<1x256xf32, #tpu.memory_space<vmem>>, vector<1x256xf32>
    %8 = vector.broadcast %7 : vector<1x256xf32> to vector<128x256xf32>
    %9 = arith.addf %6, %8 : vector<128x256xf32>
    %10 = math.cos %9 : vector<128x256xf32>
    %cst_6 = arith.constant 0.353553385 : f32
    %11 = vector.broadcast %cst_6 : f32 to vector<128x256xf32>
    %12 = arith.mulf %11, %10 : vector<128x256xf32>
    %c0_7 = arith.constant 0 : index
    %c0_8 = arith.constant 0 : index
    %13 = vector.load %arg5[%c0_7, %c0_8] : memref<128x256xf32, #tpu.memory_space<vmem>>, vector<128x256xf32>
    tpu.vector_store %arg5[%c0_7, %c0_8], %12 {strides = array<i32>} : memref<128x256xf32, #tpu.memory_space<vmem>>, vector<128x256xf32>,
    return
  }
  func.func @transform_0(%arg0: i32, %arg1: i32) -> (i32, i32) {
    %c0_i32 = arith.constant 0 : i32
    %c0_i32_0 = arith.constant 0 : i32
    return %arg0, %c0_i32 : i32, i32
  }
  func.func @transform_1(%arg0: i32, %arg1: i32) -> (i32, i32) {
    %c0_i32 = arith.constant 0 : i32
    %c0_i32_0 = arith.constant 0 : i32
    return %c0_i32, %arg1 : i32, i32
  }
  func.func @transform_2(%arg0: i32, %arg1: i32) -> (i32, i32) {
    %c0_i32 = arith.constant 0 : i32
    %c0_i32_0 = arith.constant 0 : i32
    return %c0_i32, %arg1 : i32, i32
  }
  func.func @transform_3(%arg0: i32, %arg1: i32) -> (i32, i32) {
    %c0_i32 = arith.constant 0 : i32
    return %arg0, %arg1 : i32, i32
  }
}

</mosaic_0001>

<llo_original>
// kernel: tpu_custom_call.1
$region0: #{tpu_custom_call.1}
  #allocation0 [shape = 'u32[]', space=smem, size = 0x4, offset = 0x4, fixed_abs, tag = 'smem constant byte address 0x4 - core index']
  #allocation1 [shape = 'u32[72,128]{1,0:T(1,128)}', space=vmem, size = 0x9000, scoped, tag = 'internal scratch']
  #allocation2 [shape = 'bf16[128,16]{1,0:T(8,128)(2,1)}', space=vmem, size = 0x8000, scoped, tag = 'scratch operand']
  %s0 = inlined_call_operand.vmem [shape: f32[128,16], index: 0, kind: input, shape index: {}]
  %s1 = inlined_call_operand.vmem [shape: f32[16,256], index: 1, kind: input, shape index: {}]
  %s2 = inlined_call_operand.vmem [shape: f32[1,256], index: 2, kind: input, shape index: {}]
  %s3 = inlined_call_operand.hbm [shape: f32[128,256], index: 3, kind: output, shape index: {}]
  %s4 = sld [smem:[#allocation0]]
  $region26: #{tpu_custom_call.1} parent=0
    _
  %s6 = ssub.s32 1, %s4
  %s7 = scalar_select 0, %s6, %s4
  $region1: #{tpu_custom_call.1} parent=0
    #allocation3 [shape = 'u8[131072]{0}', space=vmem, size = 0x20000, scoped, tag = 'output window, operand 0, single buffered']
    #allocation4 [shape = 's32[1]{0}', space=sflag, size = 0x4, scoped, tag = 'scoped memory for tpu_custom_call.1']
    %8 = vsyncpa [#allocation4], 0
    // Predicated region
    $region2: #{tpu_custom_call.1} parent=1 // pred_check
      _
    $region3: #{tpu_custom_call.1} parent=1 // pred_check_branch
      %10 = sbr.rel (0) target = $region5
    $region4: #{tpu_custom_call.1} parent=1 // pred_region
      _
    $region5: #{tpu_custom_call.1} parent=1 // pred_fallthru
      _
    // Predicated region
    $region6: #{tpu_custom_call.1} parent=1 // pred_check
      _
    $region7: #{tpu_custom_call.1} parent=1 // pred_check_branch
      %12 = sbr.rel (0) target = $region9
    $region8: #{tpu_custom_call.1} parent=1 // pred_region
      _
    $region9: #{tpu_custom_call.1} parent=1 // pred_fallthru
      _
    // Predicated region
    $region10: #{tpu_custom_call.1} parent=1 // pred_check
      _
    $region11: #{tpu_custom_call.1} parent=1 // pred_check_branch
      %14 = sbr.rel (0) target = $region13
    $region12: #{tpu_custom_call.1} parent=1 // pred_region
      _
    $region13: #{tpu_custom_call.1} parent=1 // pred_fallthru
      _
    %p16 = scmp.eq.s32.totalorder 0, 0
    // Predicated region
    $region14: #{tpu_custom_call.1} parent=1 // pred_check
      %p17 = pneg %p16
    $region15: #{tpu_custom_call.1} parent=1 // pred_check_branch
      %19 = sbr.rel (%p17) target = $region17
    $region16: #{tpu_custom_call.1} parent=1 // pred_region
      %v20 = vld [vmem:[%s0] sm:$0xff]
      %v21 = vld [vmem:[%s0 + $0x8] sm:$0xff]
      %v22 = vld [vmem:[%s0 + $0x10] sm:$0xff]
      %v23 = vld [vmem:[%s0 + $0x18] sm:$0xff]
      %v24 = vld [vmem:[%s0 + $0x20] sm:$0xff]
      %v25 = vld [vmem:[%s0 + $0x28] sm:$0xff]
      %v26 = vld [vmem:[%s0 + $0x30] sm:$0xff]
      %v27 = vld [vmem:[%s0 + $0x38] sm:$0xff]
      %v28 = vld [vmem:[%s0 + $0x40] sm:$0xff]
      %v29 = vld [vmem:[%s0 + $0x48] sm:$0xff]
      %v30 = vld [vmem:[%s0 + $0x50] sm:$0xff]
      %v31 = vld [vmem:[%s0 + $0x58] sm:$0xff]
      %v32 = vld [vmem:[%s0 + $0x60] sm:$0xff]
      %v33 = vld [vmem:[%s0 + $0x68] sm:$0xff]
      %v34 = vld [vmem:[%s0 + $0x70] sm:$0xff]
      %v35 = vld [vmem:[%s0 + $0x78] sm:$0xff]
      %v36 = vmul.f32 %v20, %v20
      %v37 = vmul.f32 %v21, %v21
      %v38 = vmul.f32 %v22, %v22
      %v39 = vmul.f32 %v23, %v23
      %v40 = vmul.f32 %v24, %v24
      %v41 = vmul.f32 %v25, %v25
      %v42 = vmul.f32 %v26, %v26
      %v43 = vmul.f32 %v27, %v27
      %v44 = vmul.f32 %v28, %v28
      %v45 = vmul.f32 %v29, %v29
      %v46 = vmul.f32 %v30, %v30
      %v47 = vmul.f32 %v31, %v31
      %v48 = vmul.f32 %v32, %v32
      %v49 = vmul.f32 %v33, %v33
      %v50 = vmul.f32 %v34, %v34
      %v51 = vmul.f32 %v35, %v35
      %vm52 = vcmask 130048
      %v53 = vsel %vm52, %v36, 0.0
      %54 = vadd.xlane.f32.xlu0 %v53
      %v55 = vpop.xlane.xlu0 %54
      %v56 = vsel %vm52, %v37, 0.0
      %57 = vadd.xlane.f32.xlu0 %v56
      %v58 = vpop.xlane.xlu0 %57
      %v59 = vsel %vm52, %v38, 0.0
      %60 = vadd.xlane.f32.xlu0 %v59
      %v61 = vpop.xlane.xlu0 %60
      %v62 = vsel %vm52, %v39, 0.0
      %63 = vadd.xlane.f32.xlu0 %v62
      %v64 = vpop.xlane.xlu0 %63
      %v65 = vsel %vm52, %v40, 0.0
      %66 = vadd.xlane.f32.xlu0 %v65
      %v67 = vpop.xlane.xlu0 %66
      %v68 = vsel %vm52, %v41, 0.0
      %69 = vadd.xlane.f32.xlu0 %v68
      %v70 = vpop.xlane.xlu0 %69
      %v71 = vsel %vm52, %v42, 0.0
      %72 = vadd.xlane.f32.xlu0 %v71
      %v73 = vpop.xlane.xlu0 %72
      %v74 = vsel %vm52, %v43, 0.0
      %75 = vadd.xlane.f32.xlu0 %v74
      %v76 = vpop.xlane.xlu0 %75
      %v77 = vsel %vm52, %v44, 0.0
      %78 = vadd.xlane.f32.xlu0 %v77
      %v79 = vpop.xlane.xlu0 %78
      %v80 = vsel %vm52, %v45, 0.0
      %81 = vadd.xlane.f32.xlu0 %v80
      %v82 = vpop.xlane.xlu0 %81
      %v83 = vsel %vm52, %v46, 0.0
      %84 = vadd.xlane.f32.xlu0 %v83
      %v85 = vpop.xlane.xlu0 %84
      %v86 = vsel %vm52, %v47, 0.0
      %87 = vadd.xlane.f32.xlu0 %v86
      %v88 = vpop.xlane.xlu0 %87
      %v89 = vsel %vm52, %v48, 0.0
      %90 = vadd.xlane.f32.xlu0 %v89
      %v91 = vpop.xlane.xlu0 %90
      %v92 = vsel %vm52, %v49, 0.0
      %93 = vadd.xlane.f32.xlu0 %v92
      %v94 = vpop.xlane.xlu0 %93
      %v95 = vsel %vm52, %v50, 0.0
      %96 = vadd.xlane.f32.xlu0 %v95
      %v97 = vpop.xlane.xlu0 %96
      %v98 = vsel %vm52, %v51, 0.0
      %99 = vadd.xlane.f32.xlu0 %v98
      %v100 = vpop.xlane.xlu0 %99
      %v101 = vrsqrt.pop %v55
      %v102 = vmul.f32 %v101, %v55
      %v103 = vmul.f32 %v102, %v101
      %v104 = vmul.f32 0.5, %v103
      %v105 = vsub.f32 1.5, %v104
      %v106 = vmul.f32 %v101, %v105
      %vm107 = vweird.f32 %v55
      %vm108 = vweird.f32 %v101
      %vm109 = vmor %vm107, %vm108
      %v110 = vsel %vm109, %v101, %v106
      %v111 = vrsqrt.pop %v58
      %v112 = vmul.f32 %v111, %v58
      %v113 = vmul.f32 %v112, %v111
      %v114 = vmul.f32 0.5, %v113
      %v115 = vsub.f32 1.5, %v114
      %v116 = vmul.f32 %v111, %v115
      %vm117 = vweird.f32 %v58
      %vm118 = vweird.f32 %v111
      %vm119 = vmor %vm117, %vm118
      %v120 = vsel %vm119, %v111, %v116
      %v121 = vrsqrt.pop %v61
      %v122 = vmul.f32 %v121, %v61
      %v123 = vmul.f32 %v122, %v121
      %v124 = vmul.f32 0.5, %v123
      %v125 = vsub.f32 1.5, %v124
      %v126 = vmul.f32 %v121, %v125
      %vm127 = vweird.f32 %v61
      %vm128 = vweird.f32 %v121
      %vm129 = vmor %vm127, %vm128
      %v130 = vsel %vm129, %v121, %v126
      %v131 = vrsqrt.pop %v64
      %v132 = vmul.f32 %v131, %v64
      %v133 = vmul.f32 %v132, %v131
      %v134 = vmul.f32 0.5, %v133
      %v135 = vsub.f32 1.5, %v134
      %v136 = vmul.f32 %v131, %v135
      %vm137 = vweird.f32 %v64
      %vm138 = vweird.f32 %v131
      %vm139 = vmor %vm137, %vm138
      %v140 = vsel %vm139, %v131, %v136
      %v141 = vrsqrt.pop %v67
      %v142 = vmul.f32 %v141, %v67
      %v143 = vmul.f32 %v142, %v141
      %v144 = vmul.f32 0.5, %v143
      %v145 = vsub.f32 1.5, %v144
      %v146 = vmul.f32 %v141, %v145
      %vm147 = vweird.f32 %v67
      %vm148 = vweird.f32 %v141
      %vm149 = vmor %vm147, %vm148
      %v150 = vsel %vm149, %v141, %v146
      %v151 = vrsqrt.pop %v70
      %v152 = vmul.f32 %v151, %v70
      %v153 = vmul.f32 %v152, %v151
      %v154 = vmul.f32 0.5, %v153
      %v155 = vsub.f32 1.5, %v154
      %v156 = vmul.f32 %v151, %v155
      %vm157 = vweird.f32 %v70
      %vm158 = vweird.f32 %v151
      %vm159 = vmor %vm157, %vm158
      %v160 = vsel %vm159, %v151, %v156
      %v161 = vrsqrt.pop %v73
      %v162 = vmul.f32 %v161, %v73
      %v163 = vmul.f32 %v162, %v161
      %v164 = vmul.f32 0.5, %v163
      %v165 = vsub.f32 1.5, %v164
      %v166 = vmul.f32 %v161, %v165
      %vm167 = vweird.f32 %v73
      %vm168 = vweird.f32 %v161
      %vm169 = vmor %vm167, %vm168
      %v170 = vsel %vm169, %v161, %v166
      %v171 = vrsqrt.pop %v76
      %v172 = vmul.f32 %v171, %v76
      %v173 = vmul.f32 %v172, %v171
      %v174 = vmul.f32 0.5, %v173
      %v175 = vsub.f32 1.5, %v174
      %v176 = vmul.f32 %v171, %v175
      %vm177 = vweird.f32 %v76
      %vm178 = vweird.f32 %v171
      %vm179 = vmor %vm177, %vm178
      %v180 = vsel %vm179, %v171, %v176
      %v181 = vrsqrt.pop %v79
      %v182 = vmul.f32 %v181, %v79
      %v183 = vmul.f32 %v182, %v181
      %v184 = vmul.f32 0.5, %v183
      %v185 = vsub.f32 1.5, %v184
      %v186 = vmul.f32 %v181, %v185
      %vm187 = vweird.f32 %v79
      %vm188 = vweird.f32 %v181
      %vm189 = vmor %vm187, %vm188
      %v190 = vsel %vm189, %v181, %v186
      %v191 = vrsqrt.pop %v82
      %v192 = vmul.f32 %v191, %v82
      %v193 = vmul.f32 %v192, %v191
      %v194 = vmul.f32 0.5, %v193
      %v195 = vsub.f32 1.5, %v194
      %v196 = vmul.f32 %v191, %v195
      %vm197 = vweird.f32 %v82
      %vm198 = vweird.f32 %v191
      %vm199 = vmor %vm197, %vm198
      %v200 = vsel %vm199, %v191, %v196
      %v201 = vrsqrt.pop %v85
      %v202 = vmul.f32 %v201, %v85
      %v203 = vmul.f32 %v202, %v201
      %v204 = vmul.f32 0.5, %v203
      %v205 = vsub.f32 1.5, %v204
      %v206 = vmul.f32 %v201, %v205
      %vm207 = vweird.f32 %v85
      %vm208 = vweird.f32 %v201
      %vm209 = vmor %vm207, %vm208
      %v210 = vsel %vm209, %v201, %v206
      %v211 = vrsqrt.pop %v88
      %v212 = vmul.f32 %v211, %v88
      %v213 = vmul.f32 %v212, %v211
      %v214 = vmul.f32 0.5, %v213
      %v215 = vsub.f32 1.5, %v214
      %v216 = vmul.f32 %v211, %v215
      %vm217 = vweird.f32 %v88
      %vm218 = vweird.f32 %v211
      %vm219 = vmor %vm217, %vm218
      %v220 = vsel %vm219, %v211, %v216
      %v221 = vrsqrt.pop %v91
      %v222 = vmul.f32 %v221, %v91
      %v223 = vmul.f32 %v222, %v221
      %v224 = vmul.f32 0.5, %v223
      %v225 = vsub.f32 1.5, %v224
      %v226 = vmul.f32 %v221, %v225
      %vm227 = vweird.f32 %v91
      %vm228 = vweird.f32 %v221
      %vm229 = vmor %vm227, %vm228
      %v230 = vsel %vm229, %v221, %v226
      %v231 = vrsqrt.pop %v94
      %v232 = vmul.f32 %v231, %v94
      %v233 = vmul.f32 %v232, %v231
      %v234 = vmul.f32 0.5, %v233
      %v235 = vsub.f32 1.5, %v234
      %v236 = vmul.f32 %v231, %v235
      %vm237 = vweird.f32 %v94
      %vm238 = vweird.f32 %v231
      %vm239 = vmor %vm237, %vm238
      %v240 = vsel %vm239, %v231, %v236
      %v241 = vrsqrt.pop %v97
      %v242 = vmul.f32 %v241, %v97
      %v243 = vmul.f32 %v242, %v241
      %v244 = vmul.f32 0.5, %v243
      %v245 = vsub.f32 1.5, %v244
      %v246 = vmul.f32 %v241, %v245
      %vm247 = vweird.f32 %v97
      %vm248 = vweird.f32 %v241
      %vm249 = vmor %vm247, %vm248
      %v250 = vsel %vm249, %v241, %v246
      %v251 = vrsqrt.pop %v100
      %v252 = vmul.f32 %v251, %v100
      %v253 = vmul.f32 %v252, %v251
      %v254 = vmul.f32 0.5, %v253
      %v255 = vsub.f32 1.5, %v254
      %v256 = vmul.f32 %v251, %v255
      %vm257 = vweird.f32 %v100
      %vm258 = vweird.f32 %v251
      %vm259 = vmor %vm257, %vm258
      %v260 = vsel %vm259, %v251, %v256
      %v261 = vmul.f32 %v110, 0.99999
      %v262 = vmul.f32 %v120, 0.99999
      %v263 = vmul.f32 %v130, 0.99999
      %v264 = vmul.f32 %v140, 0.99999
      %v265 = vmul.f32 %v150, 0.99999
      %v266 = vmul.f32 %v160, 0.99999
      %v267 = vmul.f32 %v170, 0.99999
      %v268 = vmul.f32 %v180, 0.99999
      %v269 = vmul.f32 %v190, 0.99999
      %v270 = vmul.f32 %v200, 0.99999
      %v271 = vmul.f32 %v210, 0.99999
      %v272 = vmul.f32 %v220, 0.99999
      %v273 = vmul.f32 %v230, 0.99999
      %v274 = vmul.f32 %v240, 0.99999
      %v275 = vmul.f32 %v250, 0.99999
      %v276 = vmul.f32 %v260, 0.99999
      %v277 = vmin.f32 %v261, 1.0
      %v278 = vmin.f32 %v262, 1.0
      %v279 = vmin.f32 %v263, 1.0
      %v280 = vmin.f32 %v264, 1.0
      %v281 = vmin.f32 %v265, 1.0
      %v282 = vmin.f32 %v266, 1.0
      %v283 = vmin.f32 %v267, 1.0
      %v284 = vmin.f32 %v268, 1.0
      %v285 = vmin.f32 %v269, 1.0
      %v286 = vmin.f32 %v270, 1.0
      %v287 = vmin.f32 %v271, 1.0
      %v288 = vmin.f32 %v272, 1.0
      %v289 = vmin.f32 %v273, 1.0
      %v290 = vmin.f32 %v274, 1.0
      %v291 = vmin.f32 %v275, 1.0
      %v292 = vmin.f32 %v276, 1.0
      %v293 = vmul.f32 %v20, %v277
      %v294 = vmul.f32 %v21, %v278
      %v295 = vmul.f32 %v22, %v279
      %v296 = vmul.f32 %v23, %v280
      %v297 = vmul.f32 %v24, %v281
      %v298 = vmul.f32 %v25, %v282
      %v299 = vmul.f32 %v26, %v283
      %v300 = vmul.f32 %v27, %v284
      %v301 = vmul.f32 %v28, %v285
      %v302 = vmul.f32 %v29, %v286
      %v303 = vmul.f32 %v30, %v287
      %v304 = vmul.f32 %v31, %v288
      %v305 = vmul.f32 %v32, %v289
      %v306 = vmul.f32 %v33, %v290
      %v307 = vmul.f32 %v34, %v291
      %v308 = vmul.f32 %v35, %v292
      %v309 = vpack.c.bf16 %v293, %v293
      %v310 = vpack.c.bf16 %v294, %v294
      %v311 = vpack.c.bf16 %v295, %v295
      %v312 = vpack.c.bf16 %v296, %v296
      %v313 = vpack.c.bf16 %v297, %v297
      %v314 = vpack.c.bf16 %v298, %v298
      %v315 = vpack.c.bf16 %v299, %v299
      %v316 = vpack.c.bf16 %v300, %v300
      %v317 = vpack.c.bf16 %v301, %v301
      %v318 = vpack.c.bf16 %v302, %v302
      %v319 = vpack.c.bf16 %v303, %v303
      %v320 = vpack.c.bf16 %v304, %v304
      %v321 = vpack.c.bf16 %v305, %v305
      %v322 = vpack.c.bf16 %v306, %v306
      %v323 = vpack.c.bf16 %v307, %v307
      %v324 = vpack.c.bf16 %v308, %v308
      %vm325 = vcmask 125952
      %326 = vst.msk [vmem:[#allocation2] sm:$0xf] %vm325, %v309
      %327 = vst.msk [vmem:[#allocation2 + $0x4] sm:$0xf] %vm325, %v310
      %328 = vst.msk [vmem:[#allocation2 + $0x8] sm:$0xf] %vm325, %v311
      %329 = vst.msk [vmem:[#allocation2 + $0xc] sm:$0xf] %vm325, %v312
      %330 = vst.msk [vmem:[#allocation2 + $0x10] sm:$0xf] %vm325, %v313
      %331 = vst.msk [vmem:[#allocation2 + $0x14] sm:$0xf] %vm325, %v314
      %332 = vst.msk [vmem:[#allocation2 + $0x18] sm:$0xf] %vm325, %v315
      %333 = vst.msk [vmem:[#allocation2 + $0x1c] sm:$0xf] %vm325, %v316
      %334 = vst.msk [vmem:[#allocation2 + $0x20] sm:$0xf] %vm325, %v317
      %335 = vst.msk [vmem:[#allocation2 + $0x24] sm:$0xf] %vm325, %v318
      %336 = vst.msk [vmem:[#allocation2 + $0x28] sm:$0xf] %vm325, %v319
      %337 = vst.msk [vmem:[#allocation2 + $0x2c] sm:$0xf] %vm325, %v320
      %338 = vst.msk [vmem:[#allocation2 + $0x30] sm:$0xf] %vm325, %v321
      %339 = vst.msk [vmem:[#allocation2 + $0x34] sm:$0xf] %vm325, %v322
      %340 = vst.msk [vmem:[#allocation2 + $0x38] sm:$0xf] %vm325, %v323
      %341 = vst.msk [vmem:[#allocation2 + $0x3c] sm:$0xf] %vm325, %v324
    $region17: #{tpu_custom_call.1} parent=1 // pred_fallthru
      _
    %v342 = vld [vmem:[#allocation2] sm:$0xf]
    %v343 = vld [vmem:[#allocation2 + $0x4] sm:$0xf]
    %v344 = vld [vmem:[#allocation2 + $0x8] sm:$0xf]
    %v345 = vld [vmem:[#allocation2 + $0xc] sm:$0xf]
    %v346 = vld [vmem:[#allocation2 + $0x10] sm:$0xf]
    %v347 = vld [vmem:[#allocation2 + $0x14] sm:$0xf]
    %v348 = vld [vmem:[#allocation2 + $0x18] sm:$0xf]
    %v349 = vld [vmem:[#allocation2 + $0x1c] sm:$0xf]
    %v350 = vld [vmem:[#allocation2 + $0x20] sm:$0xf]
    %v351 = vld [vmem:[#allocation2 + $0x24] sm:$0xf]
    %v352 = vld [vmem:[#allocation2 + $0x28] sm:$0xf]
    %v353 = vld [vmem:[#allocation2 + $0x2c] sm:$0xf]
    %v354 = vld [vmem:[#allocation2 + $0x30] sm:$0xf]
    %v355 = vld [vmem:[#allocation2 + $0x34] sm:$0xf]
    %v356 = vld [vmem:[#allocation2 + $0x38] sm:$0xf]
    %v357 = vld [vmem:[#allocation2 + $0x3c] sm:$0xf]
    %v358 = vld [vmem:[%s1] sm:$0xff]
    %v359 = vld [vmem:[%s1 + $0x8] sm:$0xff]
    %v360 = vld [vmem:[%s1 + $0x10] sm:$0xff]
    %v361 = vld [vmem:[%s1 + $0x18] sm:$0xff]
    %v362 = vpack.c.bf16 %v360, %v358
    %v363 = vpack.c.bf16 %v361, %v359
    %v364 = vld [vmem:[%s2] sm:$0x3]
    %v366 = vperm.slane %v364, 0
    %v367 = vperm.slane %v364, 1
    %v386 = vunpack.c.l.b16 %v342
    %v387 = vunpack.c.l.b16 %v343
    %v388 = vunpack.c.l.b16 %v344
    %v389 = vunpack.c.l.b16 %v345
    %v390 = vunpack.c.l.b16 %v346
    %v391 = vunpack.c.l.b16 %v347
    %v392 = vunpack.c.l.b16 %v348
    %v393 = vunpack.c.l.b16 %v349
    %v394 = vunpack.c.l.b16 %v350
    %v395 = vunpack.c.l.b16 %v351
    %v396 = vunpack.c.l.b16 %v352
    %v397 = vunpack.c.l.b16 %v353
    %v398 = vunpack.c.l.b16 %v354
    %v399 = vunpack.c.l.b16 %v355
    %v400 = vunpack.c.l.b16 %v356
    %v401 = vunpack.c.l.b16 %v357
    %v402 = vpack.c.b16 %v387, %v386
    %v403 = vpack.c.b16 %v389, %v388
    %v404 = vpack.c.b16 %v391, %v390
    %v405 = vpack.c.b16 %v393, %v392
    %v406 = vpack.c.b16 %v395, %v394
    %v407 = vpack.c.b16 %v397, %v396
    %v408 = vpack.c.b16 %v399, %v398
    %v409 = vpack.c.b16 %v401, %v400
    %vm410 = vcmask 130048
    %v412 = vsel %vm410, %v402, 0
    %v415 = vsel %vm410, %v403, 0
    %v418 = vsel %vm410, %v404, 0
    %v421 = vsel %vm410, %v405, 0
    %v424 = vsel %vm410, %v406, 0
    %v427 = vsel %vm410, %v407, 0
    %v430 = vsel %vm410, %v408, 0
    %v433 = vsel %vm410, %v409, 0
    %435 = vmatpush.bf16.msra.mxu0 0
    %436 = vmatpush.bf16.msra.mxu0 0
    %437 = vmatpush.bf16.msra.mxu0 0
    %438 = vmatpush.bf16.msra.mxu0 0
    %439 = vmatpush.bf16.msra.mxu0 0
    %440 = vmatpush.bf16.msra.mxu0 0
    %441 = vmatpush.bf16.msra.mxu0 0
    %442 = vmatpush.bf16.msra.mxu0 %v362
    %443 = vmatmul.bf16.gmra.mxu0 %v412
    %v444 = vpop.f32.mrf.mxu0
    %v445 = vadd.f32 %v366, %v444
    %v446 = vpop.f32.mrf.mxu0
    %v447 = vadd.f32 %v366, %v446
    %448 = vmatmul.bf16.gmra.mxu0 %v415
    %v449 = vpop.f32.mrf.mxu0
    %v450 = vadd.f32 %v366, %v449
    %v451 = vpop.f32.mrf.mxu0
    %v452 = vadd.f32 %v366, %v451
    %453 = vmatmul.bf16.gmra.mxu0 %v418
    %v454 = vpop.f32.mrf.mxu0
    %v455 = vadd.f32 %v366, %v454
    %v456 = vpop.f32.mrf.mxu0
    %v457 = vadd.f32 %v366, %v456
    %458 = vmatmul.bf16.gmra.mxu0 %v421
    %v459 = vpop.f32.mrf.mxu0
    %v460 = vadd.f32 %v366, %v459
    %v461 = vpop.f32.mrf.mxu0
    %v462 = vadd.f32 %v366, %v461
    %463 = vmatmul.bf16.gmra.mxu0 %v424
    %v464 = vpop.f32.mrf.mxu0
    %v465 = vadd.f32 %v366, %v464
    %v466 = vpop.f32.mrf.mxu0
    %v467 = vadd.f32 %v366, %v466
    %468 = vmatmul.bf16.gmra.mxu0 %v427
    %v469 = vpop.f32.mrf.mxu0
    %v470 = vadd.f32 %v366, %v469
    %v471 = vpop.f32.mrf.mxu0
    %v472 = vadd.f32 %v366, %v471
    %473 = vmatmul.bf16.gmra.mxu0 %v430
    %v474 = vpop.f32.mrf.mxu0
    %v475 = vadd.f32 %v366, %v474
    %v476 = vpop.f32.mrf.mxu0
    %v477 = vadd.f32 %v366, %v476
    %478 = vmatmul.bf16.gmra.mxu0 %v433
    %v479 = vpop.f32.mrf.mxu0
    %v480 = vadd.f32 %v366, %v479
    %v481 = vpop.f32.mrf.mxu0
    %v482 = vadd.f32 %v366, %v481
    %483 = vdwg.mxu0
    %484 = vmatpush.bf16.msra.mxu0 0
    %485 = vmatpush.bf16.msra.mxu0 0
    %486 = vmatpush.bf16.msra.mxu0 0
    %487 = vmatpush.bf16.msra.mxu0 0
    %488 = vmatpush.bf16.msra.mxu0 0
    %489 = vmatpush.bf16.msra.mxu0 0
    %490 = vmatpush.bf16.msra.mxu0 0
    %491 = vmatpush.bf16.msra.mxu0 %v363
    %492 = vmatmul.bf16.gmra.mxu0 %v412
    %v493 = vpop.f32.mrf.mxu0
    %v494 = vadd.f32 %v367, %v493
    %v495 = vpop.f32.mrf.mxu0
    %v496 = vadd.f32 %v367, %v495
    %497 = vmatmul.bf16.gmra.mxu0 %v415
    %v498 = vpop.f32.mrf.mxu0
    %v499 = vadd.f32 %v367, %v498
    %v500 = vpop.f32.mrf.mxu0
    %v501 = vadd.f32 %v367, %v500
    %502 = vmatmul.bf16.gmra.mxu0 %v418
    %v503 = vpop.f32.mrf.mxu0
    %v504 = vadd.f32 %v367, %v503
    %v505 = vpop.f32.mrf.mxu0
    %v506 = vadd.f32 %v367, %v505
    %507 = vmatmul.bf16.gmra.mxu0 %v421
    %v508 = vpop.f32.mrf.mxu0
    %v509 = vadd.f32 %v367, %v508
    %v510 = vpop.f32.mrf.mxu0
    %v511 = vadd.f32 %v367, %v510
    %512 = vmatmul.bf16.gmra.mxu0 %v424
    %v513 = vpop.f32.mrf.mxu0
    %v514 = vadd.f32 %v367, %v513
    %v515 = vpop.f32.mrf.mxu0
    %v516 = vadd.f32 %v367, %v515
    %517 = vmatmul.bf16.gmra.mxu0 %v427
    %v518 = vpop.f32.mrf.mxu0
    %v519 = vadd.f32 %v367, %v518
    %v520 = vpop.f32.mrf.mxu0
    %v521 = vadd.f32 %v367, %v520
    %522 = vmatmul.bf16.gmra.mxu0 %v430
    %v523 = vpop.f32.mrf.mxu0
    %v524 = vadd.f32 %v367, %v523
    %v525 = vpop.f32.mrf.mxu0
    %v526 = vadd.f32 %v367, %v525
    %527 = vmatmul.bf16.gmra.mxu0 %v433
    %v528 = vpop.f32.mrf.mxu0
    %v529 = vadd.f32 %v367, %v528
    %v530 = vpop.f32.mrf.mxu0
    %v531 = vadd.f32 %v367, %v530
    %532 = vdwg.mxu0
    %v533 = vand.u32 2147483647, %v445
    %vm534 = vcmp.le.f32.partialorder %v533, 0.7853982
    %vm535 = vcmp.lt.s32.totalorder %v445, 0
    %v536 = vand.u32 %v445, 2139095040
    %v537 = vshrl.u32 %v536, 23
    %v538 = vsub.s32 %v537, 127
    %v539 = vand.u32 2147483647, %v445
    %v540 = vand.u32 %v539, 8388607
    %v541 = vor.u32 %v540, 8388608
    %v542 = vsub.s32 0, %v541
    %v543 = vadd.s32 %v538, 1
    %vm544 = vcmp.gt.s32.totalorder %v543, 0
    %v545 = vsel %vm544, %v543, 0
    %v546 = vshrl.u32 %v545, 5
    %v547 = vand.u32 %v545, 31
    %v548 = vsub.s32 32, %v547
    %v549 = vshrl.u32 683565275, %v548
    %v550 = vshll.u32 683565275, %v547
    %v551 = vshrl.u32 2475754826, %v548
    %v552 = vor.u32 %v550, %v551
    %v553 = vshll.u32 2475754826, %v547
    %v554 = vshrl.u32 2131351028, %v548
    %v555 = vor.u32 %v553, %v554
    %v556 = vshll.u32 2131351028, %v547
    %v557 = vshrl.u32 2102212464, %v548
    %v558 = vor.u32 %v556, %v557
    %v559 = vshll.u32 2102212464, %v547
    %v560 = vshrl.u32 920167782, %v548
    %v561 = vor.u32 %v559, %v560
    %v562 = vshll.u32 920167782, %v547
    %v563 = vshrl.u32 1326507024, %v548
    %v564 = vor.u32 %v562, %v563
    %vm565 = vcmp.lt.s32.totalorder %v546, 1
    %vm566 = vcmp.lt.s32.totalorder %v546, 2
    %vm567 = vcmp.lt.s32.totalorder %v546, 3
    %vm568 = vcmp.lt.s32.totalorder %v546, 4
    %v569 = vsel %vm565, %v549, %v552
    %v570 = vsel %vm568, %v558, 2102212464
    %v571 = vsel %vm567, %v555, %v570
    %v572 = vsel %vm566, %v569, %v571
    %v573 = vsel %vm565, %v552, %v555
    %v574 = vsel %vm568, %v561, 920167782
    %v575 = vsel %vm567, %v558, %v574
    %v576 = vsel %vm566, %v573, %v575
    %v577 = vsel %vm565, %v555, %v558
    %v578 = vsel %vm568, %v564, 1326507024
    %v579 = vsel %vm567, %v561, %v578
    %v580 = vsel %vm566, %v577, %v579
    %v581 = vshll.u32 %v541, 8
    %v582 = vand.u32 %v581, 65535
    %v583 = vshrl.u32 %v581, 16
    %v584 = vand.u32 %v580, 65535
    %v585 = vshrl.u32 %v580, 16
    %v586 = vmul.u32 %v582, %v584
    %v587 = vmul.u32 %v582, %v585
    %v588 = vmul.u32 %v583, %v584
    %v589 = vmul.u32 %v583, %v585
    %v590 = vshll.u32 %v587, 16
    %v591 = vshrl.u32 %v587, 16
    %v592 = vshll.u32 %v588, 16
    %v593 = vshrl.u32 %v588, 16
    %vm594 = vc.u32 %v586, %v590
    %v595 = vsel %vm594, 1, 0
    %v596 = vadd.s32 %v586, %v590
    %v597 = vadd.s32 %v589, %v595
    %vm598 = vc.u32 %v596, %v592
    %v599 = vsel %vm598, 1, 0
    %v600 = vadd.s32 %v596, %v592
    %v601 = vadd.s32 %v597, %v599
    %v602 = vadd.s32 %v601, %v591
    %v603 = vadd.s32 %v602, %v593
    %v604 = vand.u32 %v581, 65535
    %v605 = vshrl.u32 %v581, 16
    %v606 = vand.u32 %v576, 65535
    %v607 = vshrl.u32 %v576, 16
    %v608 = vmul.u32 %v604, %v606
    %v609 = vmul.u32 %v604, %v607
    %v610 = vmul.u32 %v605, %v606
    %v611 = vmul.u32 %v605, %v607
    %v612 = vshll.u32 %v609, 16
    %v613 = vshrl.u32 %v609, 16
    %v614 = vshll.u32 %v610, 16
    %v615 = vshrl.u32 %v610, 16
    %vm616 = vc.u32 %v608, %v612
    %v617 = vsel %vm616, 1, 0
    %v618 = vadd.s32 %v608, %v612
    %v619 = vadd.s32 %v611, %v617
    %vm620 = vc.u32 %v618, %v614
    %v621 = vsel %vm620, 1, 0
    %v622 = vadd.s32 %v618, %v614
    %v623 = vadd.s32 %v619, %v621
    %v624 = vadd.s32 %v623, %v613
    %v625 = vadd.s32 %v624, %v615
    %v626 = vmul.u32 %v581, %v572
    %v627 = vadd.s32 %v603, %v622
    %vm628 = vc.u32 %v603, %v622
    %v629 = vadd.s32 %v625, 1
    %v630 = vsel %vm628, %v629, %v625
    %v631 = vadd.s32 %v626, %v630
    %v632 = vadd.s32 %v631, 536870912
    %v633 = vshrl.u32 %v632, 30
    %v634 = vshll.u32 %v633, 30
    %v635 = vsub.s32 %v631, %v634
    %vm636 = vcmp.lt.s32.totalorder %v635, 0
    %v637 = vsub.s32 0, %v635
    %v638 = vsel %vm636, %v637, %v635
    %v639 = vclz %v638
    %v640 = vsub.s32 %v639, 2
    %vm641 = vcmp.gt.s32.totalorder 0, %v640
    %v642 = vsel %vm641, 0, %v640
    %v643 = vsub.s32 32, %v642
    %v644 = vshll.u32 %v635, %v642
    %v645 = vshrl.u32 %v627, %v643
    %v646 = vor.u32 %v644, %v645
    %v647 = vsub.s32 4294967266, %v642
    %v648 = vadd.s32 %v647, 127
    %v649 = vshll.u32 %v648, 23
    %v650 = vor.u32 4788187, %v649
    %v651 = vand.u32 2147483647, %v650
    %v653 = vcvt.s32.f32 %v646
    %v654 = vmul.f32 %v653, %v651
    %v655 = vxor.u32 %v654, 2147483648
    %v656 = vsel %vm535, %v655, %v654
    %v657 = vsub.s32 4, %v633
    %v658 = vsel %vm535, %v657, %v633
    %v659 = vsel %vm534, %v445, %v656
    %v660 = vsel %vm534, 0, %v658
    %v661 = vmul.f32 %v659, %v659
    %v662 = vmul.f32 %v661, -0.001358992
    %v663 = vadd.f32 %v662, 0.041655596
    %v664 = vmul.f32 %v661, %v663
    %v665 = vadd.f32 %v664, -0.4999988
    %v666 = vmul.f32 %v661, %v665
    %v667 = vadd.f32 1.0, %v666
    %v668 = vmul.f32 %v659, %v659
    %v669 = vmul.f32 %v668, -0.00019511016
    %v670 = vadd.f32 %v669, 0.008332121
    %v671 = vmul.f32 %v668, %v670
    %v672 = vadd.f32 %v671, -0.16666654
    %v673 = vmul.f32 %v668, %v672
    %v674 = vadd.f32 %v673, 1.0
    %v675 = vmul.f32 %v674, %v659
    %vm676 = vweird.f32 %v445
    %v677 = vand.u32 %v660, 3
    %vm678 = vcmp.lt.s32.totalorder %v677, 2
    %vm679 = vcmp.eq.s32.totalorder %v677, 0
    %v680 = vxor.u32 %v675, 2147483648
    %v681 = vsel %vm679, %v667, %v680
    %vm682 = vcmp.eq.s32.totalorder %v677, 2
    %v683 = vxor.u32 %v667, 2147483648
    %v684 = vsel %vm682, %v683, %v675
    %v685 = vsel %vm678, %v681, %v684
    %v686 = vsel %vm676, nan, %v685
    %v687 = vand.u32 2147483647, %v494
    %vm688 = vcmp.le.f32.partialorder %v687, 0.7853982
    %vm689 = vcmp.lt.s32.totalorder %v494, 0
    %v690 = vand.u32 %v494, 2139095040
    %v691 = vshrl.u32 %v690, 23
    %v692 = vsub.s32 %v691, 127
    %v693 = vand.u32 2147483647, %v494
    %v694 = vand.u32 %v693, 8388607
    %v695 = vor.u32 %v694, 8388608
    %v696 = vsub.s32 0, %v695
    %v697 = vadd.s32 %v692, 1
    %vm698 = vcmp.gt.s32.totalorder %v697, 0
    %v699 = vsel %vm698, %v697, 0
    %v700 = vshrl.u32 %v699, 5
    %v701 = vand.u32 %v699, 31
    %v702 = vsub.s32 32, %v701
    %v703 = vshrl.u32 683565275, %v702
    %v704 = vshll.u32 683565275, %v701
    %v705 = vshrl.u32 2475754826, %v702
    %v706 = vor.u32 %v704, %v705
    %v707 = vshll.u32 2475754826, %v701
    %v708 = vshrl.u32 2131351028, %v702
    %v709 = vor.u32 %v707, %v708
    %v710 = vshll.u32 2131351028, %v701
    %v711 = vshrl.u32 2102212464, %v702
    %v712 = vor.u32 %v710, %v711
    %v713 = vshll.u32 2102212464, %v701
    %v714 = vshrl.u32 920167782, %v702
    %v715 = vor.u32 %v713, %v714
    %v716 = vshll.u32 920167782, %v701
    %v717 = vshrl.u32 1326507024, %v702
    %v718 = vor.u32 %v716, %v717
    %vm719 = vcmp.lt.s32.totalorder %v700, 1
    %vm720 = vcmp.lt.s32.totalorder %v700, 2
    %vm721 = vcmp.lt.s32.totalorder %v700, 3
    %vm722 = vcmp.lt.s32.totalorder %v700, 4
    %v723 = vsel %vm719, %v703, %v706
    %v724 = vsel %vm722, %v712, 2102212464
    %v725 = vsel %vm721, %v709, %v724
    %v726 = vsel %vm720, %v723, %v725
    %v727 = vsel %vm719, %v706, %v709
    %v728 = vsel %vm722, %v715, 920167782
    %v729 = vsel %vm721, %v712, %v728
    %v730 = vsel %vm720, %v727, %v729
    %v731 = vsel %vm719, %v709, %v712
    %v732 = vsel %vm722, %v718, 1326507024
    %v733 = vsel %vm721, %v715, %v732
    %v734 = vsel %vm720, %v731, %v733
    %v735 = vshll.u32 %v695, 8
    %v736 = vand.u32 %v735, 65535
    %v737 = vshrl.u32 %v735, 16
    %v738 = vand.u32 %v734, 65535
    %v739 = vshrl.u32 %v734, 16
    %v740 = vmul.u32 %v736, %v738
    %v741 = vmul.u32 %v736, %v739
    %v742 = vmul.u32 %v737, %v738
    %v743 = vmul.u32 %v737, %v739
    %v744 = vshll.u32 %v741, 16
    %v745 = vshrl.u32 %v741, 16
    %v746 = vshll.u32 %v742, 16
    %v747 = vshrl.u32 %v742, 16
    %vm748 = vc.u32 %v740, %v744
    %v749 = vsel %vm748, 1, 0
    %v750 = vadd.s32 %v740, %v744
    %v751 = vadd.s32 %v743, %v749
    %vm752 = vc.u32 %v750, %v746
    %v753 = vsel %vm752, 1, 0
    %v754 = vadd.s32 %v750, %v746
    %v755 = vadd.s32 %v751, %v753
    %v756 = vadd.s32 %v755, %v745
    %v757 = vadd.s32 %v756, %v747
    %v758 = vand.u32 %v735, 65535
    %v759 = vshrl.u32 %v735, 16
    %v760 = vand.u32 %v730, 65535
    %v761 = vshrl.u32 %v730, 16
    %v762 = vmul.u32 %v758, %v760
    %v763 = vmul.u32 %v758, %v761
    %v764 = vmul.u32 %v759, %v760
    %v765 = vmul.u32 %v759, %v761
    %v766 = vshll.u32 %v763, 16
    %v767 = vshrl.u32 %v763, 16
    %v768 = vshll.u32 %v764, 16
    %v769 = vshrl.u32 %v764, 16
    %vm770 = vc.u32 %v762, %v766
    %v771 = vsel %vm770, 1, 0
    %v772 = vadd.s32 %v762, %v766
    %v773 = vadd.s32 %v765, %v771
    %vm774 = vc.u32 %v772, %v768
    %v775 = vsel %vm774, 1, 0
    %v776 = vadd.s32 %v772, %v768
    %v777 = vadd.s32 %v773, %v775
    %v778 = vadd.s32 %v777, %v767
    %v779 = vadd.s32 %v778, %v769
    %v780 = vmul.u32 %v735, %v726
    %v781 = vadd.s32 %v757, %v776
    %vm782 = vc.u32 %v757, %v776
    %v783 = vadd.s32 %v779, 1
    %v784 = vsel %vm782, %v783, %v779
    %v785 = vadd.s32 %v780, %v784
    %v786 = vadd.s32 %v785, 536870912
    %v787 = vshrl.u32 %v786, 30
    %v788 = vshll.u32 %v787, 30
    %v789 = vsub.s32 %v785, %v788
    %vm790 = vcmp.lt.s32.totalorder %v789, 0
    %v791 = vsub.s32 0, %v789
    %v792 = vsel %vm790, %v791, %v789
    %v793 = vclz %v792
    %v794 = vsub.s32 %v793, 2
    %vm795 = vcmp.gt.s32.totalorder 0, %v794
    %v796 = vsel %vm795, 0, %v794
    %v797 = vsub.s32 32, %v796
    %v798 = vshll.u32 %v789, %v796
    %v799 = vshrl.u32 %v781, %v797
    %v800 = vor.u32 %v798, %v799
    %v801 = vsub.s32 4294967266, %v796
    %v802 = vadd.s32 %v801, 127
    %v803 = vshll.u32 %v802, 23
    %v804 = vor.u32 4788187, %v803
    %v805 = vand.u32 2147483647, %v804
    %v807 = vcvt.s32.f32 %v800
    %v808 = vmul.f32 %v807, %v805
    %v809 = vxor.u32 %v808, 2147483648
    %v810 = vsel %vm689, %v809, %v808
    %v811 = vsub.s32 4, %v787
    %v812 = vsel %vm689, %v811, %v787
    %v813 = vsel %vm688, %v494, %v810
    %v814 = vsel %vm688, 0, %v812
    %v815 = vmul.f32 %v813, %v813
    %v816 = vmul.f32 %v815, -0.001358992
    %v817 = vadd.f32 %v816, 0.041655596
    %v818 = vmul.f32 %v815, %v817
    %v819 = vadd.f32 %v818, -0.4999988
    %v820 = vmul.f32 %v815, %v819
    %v821 = vadd.f32 1.0, %v820
    %v822 = vmul.f32 %v813, %v813
    %v823 = vmul.f32 %v822, -0.00019511016
    %v824 = vadd.f32 %v823, 0.008332121
    %v825 = vmul.f32 %v822, %v824
    %v826 = vadd.f32 %v825, -0.16666654
    %v827 = vmul.f32 %v822, %v826
    %v828 = vadd.f32 %v827, 1.0
    %v829 = vmul.f32 %v828, %v813
    %vm830 = vweird.f32 %v494
    %v831 = vand.u32 %v814, 3
    %vm832 = vcmp.lt.s32.totalorder %v831, 2
    %vm833 = vcmp.eq.s32.totalorder %v831, 0
    %v834 = vxor.u32 %v829, 2147483648
    %v835 = vsel %vm833, %v821, %v834
    %vm836 = vcmp.eq.s32.totalorder %v831, 2
    %v837 = vxor.u32 %v821, 2147483648
    %v838 = vsel %vm836, %v837, %v829
    %v839 = vsel %vm832, %v835, %v838
    %v840 = vsel %vm830, nan, %v839
    %v841 = vand.u32 2147483647, %v447
    %vm842 = vcmp.le.f32.partialorder %v841, 0.7853982
    %vm843 = vcmp.lt.s32.totalorder %v447, 0
    %v844 = vand.u32 %v447, 2139095040
    %v845 = vshrl.u32 %v844, 23
    %v846 = vsub.s32 %v845, 127
    %v847 = vand.u32 2147483647, %v447
    %v848 = vand.u32 %v847, 8388607
    %v849 = vor.u32 %v848, 8388608
    %v850 = vsub.s32 0, %v849
    %v851 = vadd.s32 %v846, 1
    %vm852 = vcmp.gt.s32.totalorder %v851, 0
    %v853 = vsel %vm852, %v851, 0
    %v854 = vshrl.u32 %v853, 5
    %v855 = vand.u32 %v853, 31
    %v856 = vsub.s32 32, %v855
    %v857 = vshrl.u32 683565275, %v856
    %v858 = vshll.u32 683565275, %v855
    %v859 = vshrl.u32 2475754826, %v856
    %v860 = vor.u32 %v858, %v859
    %v861 = vshll.u32 2475754826, %v855
    %v862 = vshrl.u32 2131351028, %v856
    %v863 = vor.u32 %v861, %v862
    %v864 = vshll.u32 2131351028, %v855
    %v865 = vshrl.u32 2102212464, %v856
    %v866 = vor.u32 %v864, %v865
    %v867 = vshll.u32 2102212464, %v855
    %v868 = vshrl.u32 920167782, %v856
    %v869 = vor.u32 %v867, %v868
    %v870 = vshll.u32 920167782, %v855
    %v871 = vshrl.u32 1326507024, %v856
    %v872 = vor.u32 %v870, %v871
    %vm873 = vcmp.lt.s32.totalorder %v854, 1
    %vm874 = vcmp.lt.s32.totalorder %v854, 2
    %vm875 = vcmp.lt.s32.totalorder %v854, 3
    %vm876 = vcmp.lt.s32.totalorder %v854, 4
    %v877 = vsel %vm873, %v857, %v860
    %v878 = vsel %vm876, %v866, 2102212464
    %v879 = vsel %vm875, %v863, %v878
    %v880 = vsel %vm874, %v877, %v879
    %v881 = vsel %vm873, %v860, %v863
    %v882 = vsel %vm876, %v869, 920167782
    %v883 = vsel %vm875, %v866, %v882
    %v884 = vsel %vm874, %v881, %v883
    %v885 = vsel %vm873, %v863, %v866
    %v886 = vsel %vm876, %v872, 1326507024
    %v887 = vsel %vm875, %v869, %v886
    %v888 = vsel %vm874, %v885, %v887
    %v889 = vshll.u32 %v849, 8
    %v890 = vand.u32 %v889, 65535
    %v891 = vshrl.u32 %v889, 16
    %v892 = vand.u32 %v888, 65535
    %v893 = vshrl.u32 %v888, 16
    %v894 = vmul.u32 %v890, %v892
    %v895 = vmul.u32 %v890, %v893
    %v896 = vmul.u32 %v891, %v892
    %v897 = vmul.u32 %v891, %v893
    %v898 = vshll.u32 %v895, 16
    %v899 = vshrl.u32 %v895, 16
    %v900 = vshll.u32 %v896, 16
    %v901 = vshrl.u32 %v896, 16
    %vm902 = vc.u32 %v894, %v898
    %v903 = vsel %vm902, 1, 0
    %v904 = vadd.s32 %v894, %v898
    %v905 = vadd.s32 %v897, %v903
    %vm906 = vc.u32 %v904, %v900
    %v907 = vsel %vm906, 1, 0
    %v908 = vadd.s32 %v904, %v900
    %v909 = vadd.s32 %v905, %v907
    %v910 = vadd.s32 %v909, %v899
    %v911 = vadd.s32 %v910, %v901
    %v912 = vand.u32 %v889, 65535
    %v913 = vshrl.u32 %v889, 16
    %v914 = vand.u32 %v884, 65535
    %v915 = vshrl.u32 %v884, 16
    %v916 = vmul.u32 %v912, %v914
    %v917 = vmul.u32 %v912, %v915
    %v918 = vmul.u32 %v913, %v914
    %v919 = vmul.u32 %v913, %v915
    %v920 = vshll.u32 %v917, 16
    %v921 = vshrl.u32 %v917, 16
    %v922 = vshll.u32 %v918, 16
    %v923 = vshrl.u32 %v918, 16
    %vm924 = vc.u32 %v916, %v920
    %v925 = vsel %vm924, 1, 0
    %v926 = vadd.s32 %v916, %v920
    %v927 = vadd.s32 %v919, %v925
    %vm928 = vc.u32 %v926, %v922
    %v929 = vsel %vm928, 1, 0
    %v930 = vadd.s32 %v926, %v922
    %v931 = vadd.s32 %v927, %v929
    %v932 = vadd.s32 %v931, %v921
    %v933 = vadd.s32 %v932, %v923
    %v934 = vmul.u32 %v889, %v880
    %v935 = vadd.s32 %v911, %v930
    %vm936 = vc.u32 %v911, %v930
    %v937 = vadd.s32 %v933, 1
    %v938 = vsel %vm936, %v937, %v933
    %v939 = vadd.s32 %v934, %v938
    %v940 = vadd.s32 %v939, 536870912
    %v941 = vshrl.u32 %v940, 30
    %v942 = vshll.u32 %v941, 30
    %v943 = vsub.s32 %v939, %v942
    %vm944 = vcmp.lt.s32.totalorder %v943, 0
    %v945 = vsub.s32 0, %v943
    %v946 = vsel %vm944, %v945, %v943
    %v947 = vclz %v946
    %v948 = vsub.s32 %v947, 2
    %vm949 = vcmp.gt.s32.totalorder 0, %v948
    %v950 = vsel %vm949, 0, %v948
    %v951 = vsub.s32 32, %v950
    %v952 = vshll.u32 %v943, %v950
    %v953 = vshrl.u32 %v935, %v951
    %v954 = vor.u32 %v952, %v953
    %v955 = vsub.s32 4294967266, %v950
    %v956 = vadd.s32 %v955, 127
    %v957 = vshll.u32 %v956, 23
    %v958 = vor.u32 4788187, %v957
    %v959 = vand.u32 2147483647, %v958
    %v961 = vcvt.s32.f32 %v954
    %v962 = vmul.f32 %v961, %v959
    %v963 = vxor.u32 %v962, 2147483648
    %v964 = vsel %vm843, %v963, %v962
    %v965 = vsub.s32 4, %v941
    %v966 = vsel %vm843, %v965, %v941
    %v967 = vsel %vm842, %v447, %v964
    %v968 = vsel %vm842, 0, %v966
    %v969 = vmul.f32 %v967, %v967
    %v970 = vmul.f32 %v969, -0.001358992
    %v971 = vadd.f32 %v970, 0.041655596
    %v972 = vmul.f32 %v969, %v971
    %v973 = vadd.f32 %v972, -0.4999988
    %v974 = vmul.f32 %v969, %v973
    %v975 = vadd.f32 1.0, %v974
    %v976 = vmul.f32 %v967, %v967
    %v977 = vmul.f32 %v976, -0.00019511016
    %v978 = vadd.f32 %v977, 0.008332121
    %v979 = vmul.f32 %v976, %v978
    %v980 = vadd.f32 %v979, -0.16666654
    %v981 = vmul.f32 %v976, %v980
    %v982 = vadd.f32 %v981, 1.0
    %v983 = vmul.f32 %v982, %v967
    %vm984 = vweird.f32 %v447
    %v985 = vand.u32 %v968, 3
    %vm986 = vcmp.lt.s32.totalorder %v985, 2
    %vm987 = vcmp.eq.s32.totalorder %v985, 0
    %v988 = vxor.u32 %v983, 2147483648
    %v989 = vsel %vm987, %v975, %v988
    %vm990 = vcmp.eq.s32.totalorder %v985, 2
    %v991 = vxor.u32 %v975, 2147483648
    %v992 = vsel %vm990, %v991, %v983
    %v993 = vsel %vm986, %v989, %v992
    %v994 = vsel %vm984, nan, %v993
    %v995 = vand.u32 2147483647, %v496
    %vm996 = vcmp.le.f32.partialorder %v995, 0.7853982
    %vm997 = vcmp.lt.s32.totalorder %v496, 0
    %v998 = vand.u32 %v496, 2139095040
    %v999 = vshrl.u32 %v998, 23
    %v1000 = vsub.s32 %v999, 127
    %v1001 = vand.u32 2147483647, %v496
    %v1002 = vand.u32 %v1001, 8388607
    %v1003 = vor.u32 %v1002, 8388608
    %v1004 = vsub.s32 0, %v1003
    %v1005 = vadd.s32 %v1000, 1
    %vm1006 = vcmp.gt.s32.totalorder %v1005, 0
    %v1007 = vsel %vm1006, %v1005, 0
    %v1008 = vshrl.u32 %v1007, 5
    %v1009 = vand.u32 %v1007, 31
    %v1010 = vsub.s32 32, %v1009
    %v1011 = vshrl.u32 683565275, %v1010
    %v1012 = vshll.u32 683565275, %v1009
    %v1013 = vshrl.u32 2475754826, %v1010
    %v1014 = vor.u32 %v1012, %v1013
    %v1015 = vshll.u32 2475754826, %v1009
    %v1016 = vshrl.u32 2131351028, %v1010
    %v1017 = vor.u32 %v1015, %v1016
    %v1018 = vshll.u32 2131351028, %v1009
    %v1019 = vshrl.u32 2102212464, %v1010
    %v1020 = vor.u32 %v1018, %v1019
    %v1021 = vshll.u32 2102212464, %v1009
    %v1022 = vshrl.u32 920167782, %v1010
    %v1023 = vor.u32 %v1021, %v1022
    %v1024 = vshll.u32 920167782, %v1009
    %v1025 = vshrl.u32 1326507024, %v1010
    %v1026 = vor.u32 %v1024, %v1025
    %vm1027 = vcmp.lt.s32.totalorder %v1008, 1
    %vm1028 = vcmp.lt.s32.totalorder %v1008, 2
    %vm1029 = vcmp.lt.s32.totalorder %v1008, 3
    %vm1030 = vcmp.lt.s32.totalorder %v1008, 4
    %v1031 = vsel %vm1027, %v1011, %v1014
    %v1032 = vsel %vm1030, %v1020, 2102212464
    %v1033 = vsel %vm1029, %v1017, %v1032
    %v1034 = vsel %vm1028, %v1031, %v1033
    %v1035 = vsel %vm1027, %v1014, %v1017
    %v1036 = vsel %vm1030, %v1023, 920167782
    %v1037 = vsel %vm1029, %v1020, %v1036
    %v1038 = vsel %vm1028, %v1035, %v1037
    %v1039 = vsel %vm1027, %v1017, %v1020
    %v1040 = vsel %vm1030, %v1026, 1326507024
    %v1041 = vsel %vm1029, %v1023, %v1040
    %v1042 = vsel %vm1028, %v1039, %v1041
    %v1043 = vshll.u32 %v1003, 8
    %v1044 = vand.u32 %v1043, 65535
    %v1045 = vshrl.u32 %v1043, 16
    %v1046 = vand.u32 %v1042, 65535
    %v1047 = vshrl.u32 %v1042, 16
    %v1048 = vmul.u32 %v1044, %v1046
    %v1049 = vmul.u32 %v1044, %v1047
    %v1050 = vmul.u32 %v1045, %v1046
    %v1051 = vmul.u32 %v1045, %v1047
    %v1052 = vshll.u32 %v1049, 16
    %v1053 = vshrl.u32 %v1049, 16
    %v1054 = vshll.u32 %v1050, 16
    %v1055 = vshrl.u32 %v1050, 16
    %vm1056 = vc.u32 %v1048, %v1052
    %v1057 = vsel %vm1056, 1, 0
    %v1058 = vadd.s32 %v1048, %v1052
    %v1059 = vadd.s32 %v1051, %v1057
    %vm1060 = vc.u32 %v1058, %v1054
    %v1061 = vsel %vm1060, 1, 0
    %v1062 = vadd.s32 %v1058, %v1054
    %v1063 = vadd.s32 %v1059, %v1061
    %v1064 = vadd.s32 %v1063, %v1053
    %v1065 = vadd.s32 %v1064, %v1055
    %v1066 = vand.u32 %v1043, 65535
    %v1067 = vshrl.u32 %v1043, 16
    %v1068 = vand.u32 %v1038, 65535
    %v1069 = vshrl.u32 %v1038, 16
    %v1070 = vmul.u32 %v1066, %v1068
    %v1071 = vmul.u32 %v1066, %v1069
    %v1072 = vmul.u32 %v1067, %v1068
    %v1073 = vmul.u32 %v1067, %v1069
    %v1074 = vshll.u32 %v1071, 16
    %v1075 = vshrl.u32 %v1071, 16
    %v1076 = vshll.u32 %v1072, 16
    %v1077 = vshrl.u32 %v1072, 16
    %vm1078 = vc.u32 %v1070, %v1074
    %v1079 = vsel %vm1078, 1, 0
    %v1080 = vadd.s32 %v1070, %v1074
    %v1081 = vadd.s32 %v1073, %v1079
    %vm1082 = vc.u32 %v1080, %v1076
    %v1083 = vsel %vm1082, 1, 0
    %v1084 = vadd.s32 %v1080, %v1076
    %v1085 = vadd.s32 %v1081, %v1083
    %v1086 = vadd.s32 %v1085, %v1075
    %v1087 = vadd.s32 %v1086, %v1077
    %v1088 = vmul.u32 %v1043, %v1034
    %v1089 = vadd.s32 %v1065, %v1084
    %vm1090 = vc.u32 %v1065, %v1084
    %v1091 = vadd.s32 %v1087, 1
    %v1092 = vsel %vm1090, %v1091, %v1087
    %v1093 = vadd.s32 %v1088, %v1092
    %v1094 = vadd.s32 %v1093, 536870912
    %v1095 = vshrl.u32 %v1094, 30
    %v1096 = vshll.u32 %v1095, 30
    %v1097 = vsub.s32 %v1093, %v1096
    %vm1098 = vcmp.lt.s32.totalorder %v1097, 0
    %v1099 = vsub.s32 0, %v1097
    %v1100 = vsel %vm1098, %v1099, %v1097
    %v1101 = vclz %v1100
    %v1102 = vsub.s32 %v1101, 2
    %vm1103 = vcmp.gt.s32.totalorder 0, %v1102
    %v1104 = vsel %vm1103, 0, %v1102
    %v1105 = vsub.s32 32, %v1104
    %v1106 = vshll.u32 %v1097, %v1104
    %v1107 = vshrl.u32 %v1089, %v1105
    %v1108 = vor.u32 %v1106, %v1107
    %v1109 = vsub.s32 4294967266, %v1104
    %v1110 = vadd.s32 %v1109, 127
    %v1111 = vshll.u32 %v1110, 23
    %v1112 = vor.u32 4788187, %v1111
    %v1113 = vand.u32 2147483647, %v1112
    %v1115 = vcvt.s32.f32 %v1108
    %v1116 = vmul.f32 %v1115, %v1113
    %v1117 = vxor.u32 %v1116, 2147483648
    %v1118 = vsel %vm997, %v1117, %v1116
    %v1119 = vsub.s32 4, %v1095
    %v1120 = vsel %vm997, %v1119, %v1095
    %v1121 = vsel %vm996, %v496, %v1118
    %v1122 = vsel %vm996, 0, %v1120
    %v1123 = vmul.f32 %v1121, %v1121
    %v1124 = vmul.f32 %v1123, -0.001358992
    %v1125 = vadd.f32 %v1124, 0.041655596
    %v1126 = vmul.f32 %v1123, %v1125
    %v1127 = vadd.f32 %v1126, -0.4999988
    %v1128 = vmul.f32 %v1123, %v1127
    %v1129 = vadd.f32 1.0, %v1128
    %v1130 = vmul.f32 %v1121, %v1121
    %v1131 = vmul.f32 %v1130, -0.00019511016
    %v1132 = vadd.f32 %v1131, 0.008332121
    %v1133 = vmul.f32 %v1130, %v1132
    %v1134 = vadd.f32 %v1133, -0.16666654
    %v1135 = vmul.f32 %v1130, %v1134
    %v1136 = vadd.f32 %v1135, 1.0
    %v1137 = vmul.f32 %v1136, %v1121
    %vm1138 = vweird.f32 %v496
    %v1139 = vand.u32 %v1122, 3
    %vm1140 = vcmp.lt.s32.totalorder %v1139, 2
    %vm1141 = vcmp.eq.s32.totalorder %v1139, 0
    %v1142 = vxor.u32 %v1137, 2147483648
    %v1143 = vsel %vm1141, %v1129, %v1142
    %vm1144 = vcmp.eq.s32.totalorder %v1139, 2
    %v1145 = vxor.u32 %v1129, 2147483648
    %v1146 = vsel %vm1144, %v1145, %v1137
    %v1147 = vsel %vm1140, %v1143, %v1146
    %v1148 = vsel %vm1138, nan, %v1147
    %v1149 = vand.u32 2147483647, %v450
    %vm1150 = vcmp.le.f32.partialorder %v1149, 0.7853982
    %vm1151 = vcmp.lt.s32.totalorder %v450, 0
    %v1152 = vand.u32 %v450, 2139095040
    %v1153 = vshrl.u32 %v1152, 23
    %v1154 = vsub.s32 %v1153, 127
    %v1155 = vand.u32 2147483647, %v450
    %v1156 = vand.u32 %v1155, 8388607
    %v1157 = vor.u32 %v1156, 8388608
    %v1158 = vsub.s32 0, %v1157
    %v1159 = vadd.s32 %v1154, 1
    %vm1160 = vcmp.gt.s32.totalorder %v1159, 0
    %v1161 = vsel %vm1160, %v1159, 0
    %v1162 = vshrl.u32 %v1161, 5
    %v1163 = vand.u32 %v1161, 31
    %v1164 = vsub.s32 32, %v1163
    %v1165 = vshrl.u32 683565275, %v1164
    %v1166 = vshll.u32 683565275, %v1163
    %v1167 = vshrl.u32 2475754826, %v1164
    %v1168 = vor.u32 %v1166, %v1167
    %v1169 = vshll.u32 2475754826, %v1163
    %v1170 = vshrl.u32 2131351028, %v1164
    %v1171 = vor.u32 %v1169, %v1170
    %v1172 = vshll.u32 2131351028, %v1163
    %v1173 = vshrl.u32 2102212464, %v1164
    %v1174 = vor.u32 %v1172, %v1173
    %v1175 = vshll.u32 2102212464, %v1163
    %v1176 = vshrl.u32 920167782, %v1164
    %v1177 = vor.u32 %v1175, %v1176
    %v1178 = vshll.u32 920167782, %v1163
    %v1179 = vshrl.u32 1326507024, %v1164
    %v1180 = vor.u32 %v1178, %v1179
    %vm1181 = vcmp.lt.s32.totalorder %v1162, 1
    %vm1182 = vcmp.lt.s32.totalorder %v1162, 2
    %vm1183 = vcmp.lt.s32.totalorder %v1162, 3
    %vm1184 = vcmp.lt.s32.totalorder %v1162, 4
    %v1185 = vsel %vm1181, %v1165, %v1168
    %v1186 = vsel %vm1184, %v1174, 2102212464
    %v1187 = vsel %vm1183, %v1171, %v1186
    %v1188 = vsel %vm1182, %v1185, %v1187
    %v1189 = vsel %vm1181, %v1168, %v1171
    %v1190 = vsel %vm1184, %v1177, 920167782
    %v1191 = vsel %vm1183, %v1174, %v1190
    %v1192 = vsel %vm1182, %v1189, %v1191
    %v1193 = vsel %vm1181, %v1171, %v1174
    %v1194 = vsel %vm1184, %v1180, 1326507024
    %v1195 = vsel %vm1183, %v1177, %v1194
    %v1196 = vsel %vm1182, %v1193, %v1195
    %v1197 = vshll.u32 %v1157, 8
    %v1198 = vand.u32 %v1197, 65535
    %v1199 = vshrl.u32 %v1197, 16
    %v1200 = vand.u32 %v1196, 65535
    %v1201 = vshrl.u32 %v1196, 16
    %v1202 = vmul.u32 %v1198, %v1200
    %v1203 = vmul.u32 %v1198, %v1201
    %v1204 = vmul.u32 %v1199, %v1200
    %v1205 = vmul.u32 %v1199, %v1201
    %v1206 = vshll.u32 %v1203, 16
    %v1207 = vshrl.u32 %v1203, 16
    %v1208 = vshll.u32 %v1204, 16
    %v1209 = vshrl.u32 %v1204, 16
    %vm1210 = vc.u32 %v1202, %v1206
    %v1211 = vsel %vm1210, 1, 0
    %v1212 = vadd.s32 %v1202, %v1206
    %v1213 = vadd.s32 %v1205, %v1211
    %vm1214 = vc.u32 %v1212, %v1208
    %v1215 = vsel %vm1214, 1, 0
    %v1216 = vadd.s32 %v1212, %v1208
    %v1217 = vadd.s32 %v1213, %v1215
    %v1218 = vadd.s32 %v1217, %v1207
    %v1219 = vadd.s32 %v1218, %v1209
    %v1220 = vand.u32 %v1197, 65535
    %v1221 = vshrl.u32 %v1197, 16
    %v1222 = vand.u32 %v1192, 65535
    %v1223 = vshrl.u32 %v1192, 16
    %v1224 = vmul.u32 %v1220, %v1222
    %v1225 = vmul.u32 %v1220, %v1223
    %v1226 = vmul.u32 %v1221, %v1222
    %v1227 = vmul.u32 %v1221, %v1223
    %v1228 = vshll.u32 %v1225, 16
    %v1229 = vshrl.u32 %v1225, 16
    %v1230 = vshll.u32 %v1226, 16
    %v1231 = vshrl.u32 %v1226, 16
    %vm1232 = vc.u32 %v1224, %v1228
    %v1233 = vsel %vm1232, 1, 0
    %v1234 = vadd.s32 %v1224, %v1228
    %v1235 = vadd.s32 %v1227, %v1233
    %vm1236 = vc.u32 %v1234, %v1230
    %v1237 = vsel %vm1236, 1, 0
    %v1238 = vadd.s32 %v1234, %v1230
    %v1239 = vadd.s32 %v1235, %v1237
    %v1240 = vadd.s32 %v1239, %v1229
    %v1241 = vadd.s32 %v1240, %v1231
    %v1242 = vmul.u32 %v1197, %v1188
    %v1243 = vadd.s32 %v1219, %v1238
    %vm1244 = vc.u32 %v1219, %v1238
    %v1245 = vadd.s32 %v1241, 1
    %v1246 = vsel %vm1244, %v1245, %v1241
    %v1247 = vadd.s32 %v1242, %v1246
    %v1248 = vadd.s32 %v1247, 536870912
    %v1249 = vshrl.u32 %v1248, 30
    %v1250 = vshll.u32 %v1249, 30
    %v1251 = vsub.s32 %v1247, %v1250
    %vm1252 = vcmp.lt.s32.totalorder %v1251, 0
    %v1253 = vsub.s32 0, %v1251
    %v1254 = vsel %vm1252, %v1253, %v1251
    %v1255 = vclz %v1254
    %v1256 = vsub.s32 %v1255, 2
    %vm1257 = vcmp.gt.s32.totalorder 0, %v1256
    %v1258 = vsel %vm1257, 0, %v1256
    %v1259 = vsub.s32 32, %v1258
    %v1260 = vshll.u32 %v1251, %v1258
    %v1261 = vshrl.u32 %v1243, %v1259
    %v1262 = vor.u32 %v1260, %v1261
    %v1263 = vsub.s32 4294967266, %v1258
    %v1264 = vadd.s32 %v1263, 127
    %v1265 = vshll.u32 %v1264, 23
    %v1266 = vor.u32 4788187, %v1265
    %v1267 = vand.u32 2147483647, %v1266
    %v1269 = vcvt.s32.f32 %v1262
    %v1270 = vmul.f32 %v1269, %v1267
    %v1271 = vxor.u32 %v1270, 2147483648
    %v1272 = vsel %vm1151, %v1271, %v1270
    %v1273 = vsub.s32 4, %v1249
    %v1274 = vsel %vm1151, %v1273, %v1249
    %v1275 = vsel %vm1150, %v450, %v1272
    %v1276 = vsel %vm1150, 0, %v1274
    %v1277 = vmul.f32 %v1275, %v1275
    %v1278 = vmul.f32 %v1277, -0.001358992
    %v1279 = vadd.f32 %v1278, 0.041655596
    %v1280 = vmul.f32 %v1277, %v1279
    %v1281 = vadd.f32 %v1280, -0.4999988
    %v1282 = vmul.f32 %v1277, %v1281
    %v1283 = vadd.f32 1.0, %v1282
    %v1284 = vmul.f32 %v1275, %v1275
    %v1285 = vmul.f32 %v1284, -0.00019511016
    %v1286 = vadd.f32 %v1285, 0.008332121
    %v1287 = vmul.f32 %v1284, %v1286
    %v1288 = vadd.f32 %v1287, -0.16666654
    %v1289 = vmul.f32 %v1284, %v1288
    %v1290 = vadd.f32 %v1289, 1.0
    %v1291 = vmul.f32 %v1290, %v1275
    %vm1292 = vweird.f32 %v450
    %v1293 = vand.u32 %v1276, 3
    %vm1294 = vcmp.lt.s32.totalorder %v1293, 2
    %vm1295 = vcmp.eq.s32.totalorder %v1293, 0
    %v1296 = vxor.u32 %v1291, 2147483648
    %v1297 = vsel %vm1295, %v1283, %v1296
    %vm1298 = vcmp.eq.s32.totalorder %v1293, 2
    %v1299 = vxor.u32 %v1283, 2147483648
    %v1300 = vsel %vm1298, %v1299, %v1291
    %v1301 = vsel %vm1294, %v1297, %v1300
    %v1302 = vsel %vm1292, nan, %v1301
    %v1303 = vand.u32 2147483647, %v499
    %vm1304 = vcmp.le.f32.partialorder %v1303, 0.7853982
    %vm1305 = vcmp.lt.s32.totalorder %v499, 0
    %v1306 = vand.u32 %v499, 2139095040
    %v1307 = vshrl.u32 %v1306, 23
    %v1308 = vsub.s32 %v1307, 127
    %v1309 = vand.u32 2147483647, %v499
    %v1310 = vand.u32 %v1309, 8388607
    %v1311 = vor.u32 %v1310, 8388608
    %v1312 = vsub.s32 0, %v1311
    %v1313 = vadd.s32 %v1308, 1
    %vm1314 = vcmp.gt.s32.totalorder %v1313, 0
    %v1315 = vsel %vm1314, %v1313, 0
    %v1316 = vshrl.u32 %v1315, 5
    %v1317 = vand.u32 %v1315, 31
    %v1318 = vsub.s32 32, %v1317
    %v1319 = vshrl.u32 683565275, %v1318
    %v1320 = vshll.u32 683565275, %v1317
    %v1321 = vshrl.u32 2475754826, %v1318
    %v1322 = vor.u32 %v1320, %v1321
    %v1323 = vshll.u32 2475754826, %v1317
    %v1324 = vshrl.u32 2131351028, %v1318
    %v1325 = vor.u32 %v1323, %v1324
    %v1326 = vshll.u32 2131351028, %v1317
    %v1327 = vshrl.u32 2102212464, %v1318
    %v1328 = vor.u32 %v1326, %v1327
    %v1329 = vshll.u32 2102212464, %v1317
    %v1330 = vshrl.u32 920167782, %v1318
    %v1331 = vor.u32 %v1329, %v1330
    %v1332 = vshll.u32 920167782, %v1317
    %v1333 = vshrl.u32 1326507024, %v1318
    %v1334 = vor.u32 %v1332, %v1333
    %vm1335 = vcmp.lt.s32.totalorder %v1316, 1
    %vm1336 = vcmp.lt.s32.totalorder %v1316, 2
    %vm1337 = vcmp.lt.s32.totalorder %v1316, 3
    %vm1338 = vcmp.lt.s32.totalorder %v1316, 4
    %v1339 = vsel %vm1335, %v1319, %v1322
    %v1340 = vsel %vm1338, %v1328, 2102212464
    %v1341 = vsel %vm1337, %v1325, %v1340
    %v1342 = vsel %vm1336, %v1339, %v1341
    %v1343 = vsel %vm1335, %v1322, %v1325
    %v1344 = vsel %vm1338, %v1331, 920167782
    %v1345 = vsel %vm1337, %v1328, %v1344
    %v1346 = vsel %vm1336, %v1343, %v1345
    %v1347 = vsel %vm1335, %v1325, %v1328
    %v1348 = vsel %vm1338, %v1334, 1326507024
    %v1349 = vsel %vm1337, %v1331, %v1348
    %v1350 = vsel %vm1336, %v1347, %v1349
    %v1351 = vshll.u32 %v1311, 8
    %v1352 = vand.u32 %v1351, 65535
    %v1353 = vshrl.u32 %v1351, 16
    %v1354 = vand.u32 %v1350, 65535
    %v1355 = vshrl.u32 %v1350, 16
    %v1356 = vmul.u32 %v1352, %v1354
    %v1357 = vmul.u32 %v1352, %v1355
    %v1358 = vmul.u32 %v1353, %v1354
    %v1359 = vmul.u32 %v1353, %v1355
    %v1360 = vshll.u32 %v1357, 16
    %v1361 = vshrl.u32 %v1357, 16
    %v1362 = vshll.u32 %v1358, 16
    %v1363 = vshrl.u32 %v1358, 16
    %vm1364 = vc.u32 %v1356, %v1360
    %v1365 = vsel %vm1364, 1, 0
    %v1366 = vadd.s32 %v1356, %v1360
    %v1367 = vadd.s32 %v1359, %v1365
    %vm1368 = vc.u32 %v1366, %v1362
    %v1369 = vsel %vm1368, 1, 0
    %v1370 = vadd.s32 %v1366, %v1362
    %v1371 = vadd.s32 %v1367, %v1369
    %v1372 = vadd.s32 %v1371, %v1361
    %v1373 = vadd.s32 %v1372, %v1363
    %v1374 = vand.u32 %v1351, 65535
    %v1375 = vshrl.u32 %v1351, 16
    %v1376 = vand.u32 %v1346, 65535
    %v1377 = vshrl.u32 %v1346, 16
    %v1378 = vmul.u32 %v1374, %v1376
    %v1379 = vmul.u32 %v1374, %v1377
    %v1380 = vmul.u32 %v1375, %v1376
    %v1381 = vmul.u32 %v1375, %v1377
    %v1382 = vshll.u32 %v1379, 16
    %v1383 = vshrl.u32 %v1379, 16
    %v1384 = vshll.u32 %v1380, 16
    %v1385 = vshrl.u32 %v1380, 16
    %vm1386 = vc.u32 %v1378, %v1382
    %v1387 = vsel %vm1386, 1, 0
    %v1388 = vadd.s32 %v1378, %v1382
    %v1389 = vadd.s32 %v1381, %v1387
    %vm1390 = vc.u32 %v1388, %v1384
    %v1391 = vsel %vm1390, 1, 0
    %v1392 = vadd.s32 %v1388, %v1384
    %v1393 = vadd.s32 %v1389, %v1391
    %v1394 = vadd.s32 %v1393, %v1383
    %v1395 = vadd.s32 %v1394, %v1385
    %v1396 = vmul.u32 %v1351, %v1342
    %v1397 = vadd.s32 %v1373, %v1392
    %vm1398 = vc.u32 %v1373, %v1392
    %v1399 = vadd.s32 %v1395, 1
    %v1400 = vsel %vm1398, %v1399, %v1395
    %v1401 = vadd.s32 %v1396, %v1400
    %v1402 = vadd.s32 %v1401, 536870912
    %v1403 = vshrl.u32 %v1402, 30
    %v1404 = vshll.u32 %v1403, 30
    %v1405 = vsub.s32 %v1401, %v1404
    %vm1406 = vcmp.lt.s32.totalorder %v1405, 0
    %v1407 = vsub.s32 0, %v1405
    %v1408 = vsel %vm1406, %v1407, %v1405
    %v1409 = vclz %v1408
    %v1410 = vsub.s32 %v1409, 2
    %vm1411 = vcmp.gt.s32.totalorder 0, %v1410
    %v1412 = vsel %vm1411, 0, %v1410
    %v1413 = vsub.s32 32, %v1412
    %v1414 = vshll.u32 %v1405, %v1412
    %v1415 = vshrl.u32 %v1397, %v1413
    %v1416 = vor.u32 %v1414, %v1415
    %v1417 = vsub.s32 4294967266, %v1412
    %v1418 = vadd.s32 %v1417, 127
    %v1419 = vshll.u32 %v1418, 23
    %v1420 = vor.u32 4788187, %v1419
    %v1421 = vand.u32 2147483647, %v1420
    %v1423 = vcvt.s32.f32 %v1416
    %v1424 = vmul.f32 %v1423, %v1421
    %v1425 = vxor.u32 %v1424, 2147483648
    %v1426 = vsel %vm1305, %v1425, %v1424
    %v1427 = vsub.s32 4, %v1403
    %v1428 = vsel %vm1305, %v1427, %v1403
    %v1429 = vsel %vm1304, %v499, %v1426
    %v1430 = vsel %vm1304, 0, %v1428
    %v1431 = vmul.f32 %v1429, %v1429
    %v1432 = vmul.f32 %v1431, -0.001358992
    %v1433 = vadd.f32 %v1432, 0.041655596
    %v1434 = vmul.f32 %v1431, %v1433
    %v1435 = vadd.f32 %v1434, -0.4999988
    %v1436 = vmul.f32 %v1431, %v1435
    %v1437 = vadd.f32 1.0, %v1436
    %v1438 = vmul.f32 %v1429, %v1429
    %v1439 = vmul.f32 %v1438, -0.00019511016
    %v1440 = vadd.f32 %v1439, 0.008332121
    %v1441 = vmul.f32 %v1438, %v1440
    %v1442 = vadd.f32 %v1441, -0.16666654
    %v1443 = vmul.f32 %v1438, %v1442
    %v1444 = vadd.f32 %v1443, 1.0
    %v1445 = vmul.f32 %v1444, %v1429
    %vm1446 = vweird.f32 %v499
    %v1447 = vand.u32 %v1430, 3
    %vm1448 = vcmp.lt.s32.totalorder %v1447, 2
    %vm1449 = vcmp.eq.s32.totalorder %v1447, 0
    %v1450 = vxor.u32 %v1445, 2147483648
    %v1451 = vsel %vm1449, %v1437, %v1450
    %vm1452 = vcmp.eq.s32.totalorder %v1447, 2
    %v1453 = vxor.u32 %v1437, 2147483648
    %v1454 = vsel %vm1452, %v1453, %v1445
    %v1455 = vsel %vm1448, %v1451, %v1454
    %v1456 = vsel %vm1446, nan, %v1455
    %v1457 = vand.u32 2147483647, %v452
    %vm1458 = vcmp.le.f32.partialorder %v1457, 0.7853982
    %vm1459 = vcmp.lt.s32.totalorder %v452, 0
    %v1460 = vand.u32 %v452, 2139095040
    %v1461 = vshrl.u32 %v1460, 23
    %v1462 = vsub.s32 %v1461, 127
    %v1463 = vand.u32 2147483647, %v452
    %v1464 = vand.u32 %v1463, 8388607
    %v1465 = vor.u32 %v1464, 8388608
    %v1466 = vsub.s32 0, %v1465
    %v1467 = vadd.s32 %v1462, 1
    %vm1468 = vcmp.gt.s32.totalorder %v1467, 0
    %v1469 = vsel %vm1468, %v1467, 0
    %v1470 = vshrl.u32 %v1469, 5
    %v1471 = vand.u32 %v1469, 31
    %v1472 = vsub.s32 32, %v1471
    %v1473 = vshrl.u32 683565275, %v1472
    %v1474 = vshll.u32 683565275, %v1471
    %v1475 = vshrl.u32 2475754826, %v1472
    %v1476 = vor.u32 %v1474, %v1475
    %v1477 = vshll.u32 2475754826, %v1471
    %v1478 = vshrl.u32 2131351028, %v1472
    %v1479 = vor.u32 %v1477, %v1478
    %v1480 = vshll.u32 2131351028, %v1471
    %v1481 = vshrl.u32 2102212464, %v1472
    %v1482 = vor.u32 %v1480, %v1481
    %v1483 = vshll.u32 2102212464, %v1471
    %v1484 = vshrl.u32 920167782, %v1472
    %v1485 = vor.u32 %v1483, %v1484
    %v1486 = vshll.u32 920167782, %v1471
    %v1487 = vshrl.u32 1326507024, %v1472
    %v1488 = vor.u32 %v1486, %v1487
    %vm1489 = vcmp.lt.s32.totalorder %v1470, 1
    %vm1490 = vcmp.lt.s32.totalorder %v1470, 2
    %vm1491 = vcmp.lt.s32.totalorder %v1470, 3
    %vm1492 = vcmp.lt.s32.totalorder %v1470, 4
    %v1493 = vsel %vm1489, %v1473, %v1476
    %v1494 = vsel %vm1492, %v1482, 2102212464
    %v1495 = vsel %vm1491, %v1479, %v1494
    %v1496 = vsel %vm1490, %v1493, %v1495
    %v1497 = vsel %vm1489, %v1476, %v1479
    %v1498 = vsel %vm1492, %v1485, 920167782
    %v1499 = vsel %vm1491, %v1482, %v1498
    %v1500 = vsel %vm1490, %v1497, %v1499
    %v1501 = vsel %vm1489, %v1479, %v1482
    %v1502 = vsel %vm1492, %v1488, 1326507024
    %v1503 = vsel %vm1491, %v1485, %v1502
    %v1504 = vsel %vm1490, %v1501, %v1503
    %v1505 = vshll.u32 %v1465, 8
    %v1506 = vand.u32 %v1505, 65535
    %v1507 = vshrl.u32 %v1505, 16
    %v1508 = vand.u32 %v1504, 65535
    %v1509 = vshrl.u32 %v1504, 16
    %v1510 = vmul.u32 %v1506, %v1508
    %v1511 = vmul.u32 %v1506, %v1509
    %v1512 = vmul.u32 %v1507, %v1508
    %v1513 = vmul.u32 %v1507, %v1509
    %v1514 = vshll.u32 %v1511, 16
    %v1515 = vshrl.u32 %v1511, 16
    %v1516 = vshll.u32 %v1512, 16
    %v1517 = vshrl.u32 %v1512, 16
    %vm1518 = vc.u32 %v1510, %v1514
    %v1519 = vsel %vm1518, 1, 0
    %v1520 = vadd.s32 %v1510, %v1514
    %v1521 = vadd.s32 %v1513, %v1519
    %vm1522 = vc.u32 %v1520, %v1516
    %v1523 = vsel %vm1522, 1, 0
    %v1524 = vadd.s32 %v1520, %v1516
    %v1525 = vadd.s32 %v1521, %v1523
    %v1526 = vadd.s32 %v1525, %v1515
    %v1527 = vadd.s32 %v1526, %v1517
    %v1528 = vand.u32 %v1505, 65535
    %v1529 = vshrl.u32 %v1505, 16
    %v1530 = vand.u32 %v1500, 65535
    %v1531 = vshrl.u32 %v1500, 16
    %v1532 = vmul.u32 %v1528, %v1530
    %v1533 = vmul.u32 %v1528, %v1531
    %v1534 = vmul.u32 %v1529, %v1530
    %v1535 = vmul.u32 %v1529, %v1531
    %v1536 = vshll.u32 %v1533, 16
    %v1537 = vshrl.u32 %v1533, 16
    %v1538 = vshll.u32 %v1534, 16
    %v1539 = vshrl.u32 %v1534, 16
    %vm1540 = vc.u32 %v1532, %v1536
    %v1541 = vsel %vm1540, 1, 0
    %v1542 = vadd.s32 %v1532, %v1536
    %v1543 = vadd.s32 %v1535, %v1541
    %vm1544 = vc.u32 %v1542, %v1538
    %v1545 = vsel %vm1544, 1, 0
    %v1546 = vadd.s32 %v1542, %v1538
    %v1547 = vadd.s32 %v1543, %v1545
    %v1548 = vadd.s32 %v1547, %v1537
    %v1549 = vadd.s32 %v1548, %v1539
    %v1550 = vmul.u32 %v1505, %v1496
    %v1551 = vadd.s32 %v1527, %v1546
    %vm1552 = vc.u32 %v1527, %v1546
    %v1553 = vadd.s32 %v1549, 1
    %v1554 = vsel %vm1552, %v1553, %v1549
    %v1555 = vadd.s32 %v1550, %v1554
    %v1556 = vadd.s32 %v1555, 536870912
    %v1557 = vshrl.u32 %v1556, 30
    %v1558 = vshll.u32 %v1557, 30
    %v1559 = vsub.s32 %v1555, %v1558
    %vm1560 = vcmp.lt.s32.totalorder %v1559, 0
    %v1561 = vsub.s32 0, %v1559
    %v1562 = vsel %vm1560, %v1561, %v1559
    %v1563 = vclz %v1562
    %v1564 = vsub.s32 %v1563, 2
    %vm1565 = vcmp.gt.s32.totalorder 0, %v1564
    %v1566 = vsel %vm1565, 0, %v1564
    %v1567 = vsub.s32 32, %v1566
    %v1568 = vshll.u32 %v1559, %v1566
    %v1569 = vshrl.u32 %v1551, %v1567
    %v1570 = vor.u32 %v1568, %v1569
    %v1571 = vsub.s32 4294967266, %v1566
    %v1572 = vadd.s32 %v1571, 127
    %v1573 = vshll.u32 %v1572, 23
    %v1574 = vor.u32 4788187, %v1573
    %v1575 = vand.u32 2147483647, %v1574
    %v1577 = vcvt.s32.f32 %v1570
    %v1578 = vmul.f32 %v1577, %v1575
    %v1579 = vxor.u32 %v1578, 2147483648
    %v1580 = vsel %vm1459, %v1579, %v1578
    %v1581 = vsub.s32 4, %v1557
    %v1582 = vsel %vm1459, %v1581, %v1557
    %v1583 = vsel %vm1458, %v452, %v1580
    %v1584 = vsel %vm1458, 0, %v1582
    %v1585 = vmul.f32 %v1583, %v1583
    %v1586 = vmul.f32 %v1585, -0.001358992
    %v1587 = vadd.f32 %v1586, 0.041655596
    %v1588 = vmul.f32 %v1585, %v1587
    %v1589 = vadd.f32 %v1588, -0.4999988
    %v1590 = vmul.f32 %v1585, %v1589
    %v1591 = vadd.f32 1.0, %v1590
    %v1592 = vmul.f32 %v1583, %v1583
    %v1593 = vmul.f32 %v1592, -0.00019511016
    %v1594 = vadd.f32 %v1593, 0.008332121
    %v1595 = vmul.f32 %v1592, %v1594
    %v1596 = vadd.f32 %v1595, -0.16666654
    %v1597 = vmul.f32 %v1592, %v1596
    %v1598 = vadd.f32 %v1597, 1.0
    %v1599 = vmul.f32 %v1598, %v1583
    %vm1600 = vweird.f32 %v452
    %v1601 = vand.u32 %v1584, 3
    %vm1602 = vcmp.lt.s32.totalorder %v1601, 2
    %vm1603 = vcmp.eq.s32.totalorder %v1601, 0
    %v1604 = vxor.u32 %v1599, 2147483648
    %v1605 = vsel %vm1603, %v1591, %v1604
    %vm1606 = vcmp.eq.s32.totalorder %v1601, 2
    %v1607 = vxor.u32 %v1591, 2147483648
    %v1608 = vsel %vm1606, %v1607, %v1599
    %v1609 = vsel %vm1602, %v1605, %v1608
    %v1610 = vsel %vm1600, nan, %v1609
    %v1611 = vand.u32 2147483647, %v501
    %vm1612 = vcmp.le.f32.partialorder %v1611, 0.7853982
    %vm1613 = vcmp.lt.s32.totalorder %v501, 0
    %v1614 = vand.u32 %v501, 2139095040
    %v1615 = vshrl.u32 %v1614, 23
    %v1616 = vsub.s32 %v1615, 127
    %v1617 = vand.u32 2147483647, %v501
    %v1618 = vand.u32 %v1617, 8388607
    %v1619 = vor.u32 %v1618, 8388608
    %v1620 = vsub.s32 0, %v1619
    %v1621 = vadd.s32 %v1616, 1
    %vm1622 = vcmp.gt.s32.totalorder %v1621, 0
    %v1623 = vsel %vm1622, %v1621, 0
    %v1624 = vshrl.u32 %v1623, 5
    %v1625 = vand.u32 %v1623, 31
    %v1626 = vsub.s32 32, %v1625
    %v1627 = vshrl.u32 683565275, %v1626
    %v1628 = vshll.u32 683565275, %v1625
    %v1629 = vshrl.u32 2475754826, %v1626
    %v1630 = vor.u32 %v1628, %v1629
    %v1631 = vshll.u32 2475754826, %v1625
    %v1632 = vshrl.u32 2131351028, %v1626
    %v1633 = vor.u32 %v1631, %v1632
    %v1634 = vshll.u32 2131351028, %v1625
    %v1635 = vshrl.u32 2102212464, %v1626
    %v1636 = vor.u32 %v1634, %v1635
    %v1637 = vshll.u32 2102212464, %v1625
    %v1638 = vshrl.u32 920167782, %v1626
    %v1639 = vor.u32 %v1637, %v1638
    %v1640 = vshll.u32 920167782, %v1625
    %v1641 = vshrl.u32 1326507024, %v1626
    %v1642 = vor.u32 %v1640, %v1641
    %vm1643 = vcmp.lt.s32.totalorder %v1624, 1
    %vm1644 = vcmp.lt.s32.totalorder %v1624, 2
    %vm1645 = vcmp.lt.s32.totalorder %v1624, 3
    %vm1646 = vcmp.lt.s32.totalorder %v1624, 4
    %v1647 = vsel %vm1643, %v1627, %v1630
    %v1648 = vsel %vm1646, %v1636, 2102212464
    %v1649 = vsel %vm1645, %v1633, %v1648
    %v1650 = vsel %vm1644, %v1647, %v1649
    %v1651 = vsel %vm1643, %v1630, %v1633
    %v1652 = vsel %vm1646, %v1639, 920167782
    %v1653 = vsel %vm1645, %v1636, %v1652
    %v1654 = vsel %vm1644, %v1651, %v1653
    %v1655 = vsel %vm1643, %v1633, %v1636
    %v1656 = vsel %vm1646, %v1642, 1326507024
    %v1657 = vsel %vm1645, %v1639, %v1656
    %v1658 = vsel %vm1644, %v1655, %v1657
    %v1659 = vshll.u32 %v1619, 8
    %v1660 = vand.u32 %v1659, 65535
    %v1661 = vshrl.u32 %v1659, 16
    %v1662 = vand.u32 %v1658, 65535
    %v1663 = vshrl.u32 %v1658, 16
    %v1664 = vmul.u32 %v1660, %v1662
    %v1665 = vmul.u32 %v1660, %v1663
    %v1666 = vmul.u32 %v1661, %v1662
    %v1667 = vmul.u32 %v1661, %v1663
    %v1668 = vshll.u32 %v1665, 16
    %v1669 = vshrl.u32 %v1665, 16
    %v1670 = vshll.u32 %v1666, 16
    %v1671 = vshrl.u32 %v1666, 16
    %vm1672 = vc.u32 %v1664, %v1668
    %v1673 = vsel %vm1672, 1, 0
    %v1674 = vadd.s32 %v1664, %v1668
    %v1675 = vadd.s32 %v1667, %v1673
    %vm1676 = vc.u32 %v1674, %v1670
    %v1677 = vsel %vm1676, 1, 0
    %v1678 = vadd.s32 %v1674, %v1670
    %v1679 = vadd.s32 %v1675, %v1677
    %v1680 = vadd.s32 %v1679, %v1669
    %v1681 = vadd.s32 %v1680, %v1671
    %v1682 = vand.u32 %v1659, 65535
    %v1683 = vshrl.u32 %v1659, 16
    %v1684 = vand.u32 %v1654, 65535
    %v1685 = vshrl.u32 %v1654, 16
    %v1686 = vmul.u32 %v1682, %v1684
    %v1687 = vmul.u32 %v1682, %v1685
    %v1688 = vmul.u32 %v1683, %v1684
    %v1689 = vmul.u32 %v1683, %v1685
    %v1690 = vshll.u32 %v1687, 16
    %v1691 = vshrl.u32 %v1687, 16
    %v1692 = vshll.u32 %v1688, 16
    %v1693 = vshrl.u32 %v1688, 16
    %vm1694 = vc.u32 %v1686, %v1690
    %v1695 = vsel %vm1694, 1, 0
    %v1696 = vadd.s32 %v1686, %v1690
    %v1697 = vadd.s32 %v1689, %v1695
    %vm1698 = vc.u32 %v1696, %v1692
    %v1699 = vsel %vm1698, 1, 0
    %v1700 = vadd.s32 %v1696, %v1692
    %v1701 = vadd.s32 %v1697, %v1699
    %v1702 = vadd.s32 %v1701, %v1691
    %v1703 = vadd.s32 %v1702, %v1693
    %v1704 = vmul.u32 %v1659, %v1650
    %v1705 = vadd.s32 %v1681, %v1700
    %vm1706 = vc.u32 %v1681, %v1700
    %v1707 = vadd.s32 %v1703, 1
    %v1708 = vsel %vm1706, %v1707, %v1703
    %v1709 = vadd.s32 %v1704, %v1708
    %v1710 = vadd.s32 %v1709, 536870912
    %v1711 = vshrl.u32 %v1710, 30
    %v1712 = vshll.u32 %v1711, 30
    %v1713 = vsub.s32 %v1709, %v1712
    %vm1714 = vcmp.lt.s32.totalorder %v1713, 0
    %v1715 = vsub.s32 0, %v1713
    %v1716 = vsel %vm1714, %v1715, %v1713
    %v1717 = vclz %v1716
    %v1718 = vsub.s32 %v1717, 2
    %vm1719 = vcmp.gt.s32.totalorder 0, %v1718
    %v1720 = vsel %vm1719, 0, %v1718
    %v1721 = vsub.s32 32, %v1720
    %v1722 = vshll.u32 %v1713, %v1720
    %v1723 = vshrl.u32 %v1705, %v1721
    %v1724 = vor.u32 %v1722, %v1723
    %v1725 = vsub.s32 4294967266, %v1720
    %v1726 = vadd.s32 %v1725, 127
    %v1727 = vshll.u32 %v1726, 23
    %v1728 = vor.u32 4788187, %v1727
    %v1729 = vand.u32 2147483647, %v1728
    %v1731 = vcvt.s32.f32 %v1724
    %v1732 = vmul.f32 %v1731, %v1729
    %v1733 = vxor.u32 %v1732, 2147483648
    %v1734 = vsel %vm1613, %v1733, %v1732
    %v1735 = vsub.s32 4, %v1711
    %v1736 = vsel %vm1613, %v1735, %v1711
    %v1737 = vsel %vm1612, %v501, %v1734
    %v1738 = vsel %vm1612, 0, %v1736
    %v1739 = vmul.f32 %v1737, %v1737
    %v1740 = vmul.f32 %v1739, -0.001358992
    %v1741 = vadd.f32 %v1740, 0.041655596
    %v1742 = vmul.f32 %v1739, %v1741
    %v1743 = vadd.f32 %v1742, -0.4999988
    %v1744 = vmul.f32 %v1739, %v1743
    %v1745 = vadd.f32 1.0, %v1744
    %v1746 = vmul.f32 %v1737, %v1737
    %v1747 = vmul.f32 %v1746, -0.00019511016
    %v1748 = vadd.f32 %v1747, 0.008332121
    %v1749 = vmul.f32 %v1746, %v1748
    %v1750 = vadd.f32 %v1749, -0.16666654
    %v1751 = vmul.f32 %v1746, %v1750
    %v1752 = vadd.f32 %v1751, 1.0
    %v1753 = vmul.f32 %v1752, %v1737
    %vm1754 = vweird.f32 %v501
    %v1755 = vand.u32 %v1738, 3
    %vm1756 = vcmp.lt.s32.totalorder %v1755, 2
    %vm1757 = vcmp.eq.s32.totalorder %v1755, 0
    %v1758 = vxor.u32 %v1753, 2147483648
    %v1759 = vsel %vm1757, %v1745, %v1758
    %vm1760 = vcmp.eq.s32.totalorder %v1755, 2
    %v1761 = vxor.u32 %v1745, 2147483648
    %v1762 = vsel %vm1760, %v1761, %v1753
    %v1763 = vsel %vm1756, %v1759, %v1762
    %v1764 = vsel %vm1754, nan, %v1763
    %v1765 = vand.u32 2147483647, %v455
    %vm1766 = vcmp.le.f32.partialorder %v1765, 0.7853982
    %vm1767 = vcmp.lt.s32.totalorder %v455, 0
    %v1768 = vand.u32 %v455, 2139095040
    %v1769 = vshrl.u32 %v1768, 23
    %v1770 = vsub.s32 %v1769, 127
    %v1771 = vand.u32 2147483647, %v455
    %v1772 = vand.u32 %v1771, 8388607
    %v1773 = vor.u32 %v1772, 8388608
    %v1774 = vsub.s32 0, %v1773
    %v1775 = vadd.s32 %v1770, 1
    %vm1776 = vcmp.gt.s32.totalorder %v1775, 0
    %v1777 = vsel %vm1776, %v1775, 0
    %v1778 = vshrl.u32 %v1777, 5
    %v1779 = vand.u32 %v1777, 31
    %v1780 = vsub.s32 32, %v1779
    %v1781 = vshrl.u32 683565275, %v1780
    %v1782 = vshll.u32 683565275, %v1779
    %v1783 = vshrl.u32 2475754826, %v1780
    %v1784 = vor.u32 %v1782, %v1783
    %v1785 = vshll.u32 2475754826, %v1779
    %v1786 = vshrl.u32 2131351028, %v1780
    %v1787 = vor.u32 %v1785, %v1786
    %v1788 = vshll.u32 2131351028, %v1779
    %v1789 = vshrl.u32 2102212464, %v1780
    %v1790 = vor.u32 %v1788, %v1789
    %v1791 = vshll.u32 2102212464, %v1779
    %v1792 = vshrl.u32 920167782, %v1780
    %v1793 = vor.u32 %v1791, %v1792
    %v1794 = vshll.u32 920167782, %v1779
    %v1795 = vshrl.u32 1326507024, %v1780
    %v1796 = vor.u32 %v1794, %v1795
    %vm1797 = vcmp.lt.s32.totalorder %v1778, 1
    %vm1798 = vcmp.lt.s32.totalorder %v1778, 2
    %vm1799 = vcmp.lt.s32.totalorder %v1778, 3
    %vm1800 = vcmp.lt.s32.totalorder %v1778, 4
    %v1801 = vsel %vm1797, %v1781, %v1784
    %v1802 = vsel %vm1800, %v1790, 2102212464
    %v1803 = vsel %vm1799, %v1787, %v1802
    %v1804 = vsel %vm1798, %v1801, %v1803
    %v1805 = vsel %vm1797, %v1784, %v1787
    %v1806 = vsel %vm1800, %v1793, 920167782
    %v1807 = vsel %vm1799, %v1790, %v1806
    %v1808 = vsel %vm1798, %v1805, %v1807
    %v1809 = vsel %vm1797, %v1787, %v1790
    %v1810 = vsel %vm1800, %v1796, 1326507024
    %v1811 = vsel %vm1799, %v1793, %v1810
    %v1812 = vsel %vm1798, %v1809, %v1811
    %v1813 = vshll.u32 %v1773, 8
    %v1814 = vand.u32 %v1813, 65535
    %v1815 = vshrl.u32 %v1813, 16
    %v1816 = vand.u32 %v1812, 65535
    %v1817 = vshrl.u32 %v1812, 16
    %v1818 = vmul.u32 %v1814, %v1816
    %v1819 = vmul.u32 %v1814, %v1817
    %v1820 = vmul.u32 %v1815, %v1816
    %v1821 = vmul.u32 %v1815, %v1817
    %v1822 = vshll.u32 %v1819, 16
    %v1823 = vshrl.u32 %v1819, 16
    %v1824 = vshll.u32 %v1820, 16
    %v1825 = vshrl.u32 %v1820, 16
    %vm1826 = vc.u32 %v1818, %v1822
    %v1827 = vsel %vm1826, 1, 0
    %v1828 = vadd.s32 %v1818, %v1822
    %v1829 = vadd.s32 %v1821, %v1827
    %vm1830 = vc.u32 %v1828, %v1824
    %v1831 = vsel %vm1830, 1, 0
    %v1832 = vadd.s32 %v1828, %v1824
    %v1833 = vadd.s32 %v1829, %v1831
    %v1834 = vadd.s32 %v1833, %v1823
    %v1835 = vadd.s32 %v1834, %v1825
    %v1836 = vand.u32 %v1813, 65535
    %v1837 = vshrl.u32 %v1813, 16
    %v1838 = vand.u32 %v1808, 65535
    %v1839 = vshrl.u32 %v1808, 16
    %v1840 = vmul.u32 %v1836, %v1838
    %v1841 = vmul.u32 %v1836, %v1839
    %v1842 = vmul.u32 %v1837, %v1838
    %v1843 = vmul.u32 %v1837, %v1839
    %v1844 = vshll.u32 %v1841, 16
    %v1845 = vshrl.u32 %v1841, 16
    %v1846 = vshll.u32 %v1842, 16
    %v1847 = vshrl.u32 %v1842, 16
    %vm1848 = vc.u32 %v1840, %v1844
    %v1849 = vsel %vm1848, 1, 0
    %v1850 = vadd.s32 %v1840, %v1844
    %v1851 = vadd.s32 %v1843, %v1849
    %vm1852 = vc.u32 %v1850, %v1846
    %v1853 = vsel %vm1852, 1, 0
    %v1854 = vadd.s32 %v1850, %v1846
    %v1855 = vadd.s32 %v1851, %v1853
    %v1856 = vadd.s32 %v1855, %v1845
    %v1857 = vadd.s32 %v1856, %v1847
    %v1858 = vmul.u32 %v1813, %v1804
    %v1859 = vadd.s32 %v1835, %v1854
    %vm1860 = vc.u32 %v1835, %v1854
    %v1861 = vadd.s32 %v1857, 1
    %v1862 = vsel %vm1860, %v1861, %v1857
    %v1863 = vadd.s32 %v1858, %v1862
    %v1864 = vadd.s32 %v1863, 536870912
    %v1865 = vshrl.u32 %v1864, 30
    %v1866 = vshll.u32 %v1865, 30
    %v1867 = vsub.s32 %v1863, %v1866
    %vm1868 = vcmp.lt.s32.totalorder %v1867, 0
    %v1869 = vsub.s32 0, %v1867
    %v1870 = vsel %vm1868, %v1869, %v1867
    %v1871 = vclz %v1870
    %v1872 = vsub.s32 %v1871, 2
    %vm1873 = vcmp.gt.s32.totalorder 0, %v1872
    %v1874 = vsel %vm1873, 0, %v1872
    %v1875 = vsub.s32 32, %v1874
    %v1876 = vshll.u32 %v1867, %v1874
    %v1877 = vshrl.u32 %v1859, %v1875
    %v1878 = vor.u32 %v1876, %v1877
    %v1879 = vsub.s32 4294967266, %v1874
    %v1880 = vadd.s32 %v1879, 127
    %v1881 = vshll.u32 %v1880, 23
    %v1882 = vor.u32 4788187, %v1881
    %v1883 = vand.u32 2147483647, %v1882
    %v1885 = vcvt.s32.f32 %v1878
    %v1886 = vmul.f32 %v1885, %v1883
    %v1887 = vxor.u32 %v1886, 2147483648
    %v1888 = vsel %vm1767, %v1887, %v1886
    %v1889 = vsub.s32 4, %v1865
    %v1890 = vsel %vm1767, %v1889, %v1865
    %v1891 = vsel %vm1766, %v455, %v1888
    %v1892 = vsel %vm1766, 0, %v1890
    %v1893 = vmul.f32 %v1891, %v1891
    %v1894 = vmul.f32 %v1893, -0.001358992
    %v1895 = vadd.f32 %v1894, 0.041655596
    %v1896 = vmul.f32 %v1893, %v1895
    %v1897 = vadd.f32 %v1896, -0.4999988
    %v1898 = vmul.f32 %v1893, %v1897
    %v1899 = vadd.f32 1.0, %v1898
    %v1900 = vmul.f32 %v1891, %v1891
    %v1901 = vmul.f32 %v1900, -0.00019511016
    %v1902 = vadd.f32 %v1901, 0.008332121
    %v1903 = vmul.f32 %v1900, %v1902
    %v1904 = vadd.f32 %v1903, -0.16666654
    %v1905 = vmul.f32 %v1900, %v1904
    %v1906 = vadd.f32 %v1905, 1.0
    %v1907 = vmul.f32 %v1906, %v1891
    %vm1908 = vweird.f32 %v455
    %v1909 = vand.u32 %v1892, 3
    %vm1910 = vcmp.lt.s32.totalorder %v1909, 2
    %vm1911 = vcmp.eq.s32.totalorder %v1909, 0
    %v1912 = vxor.u32 %v1907, 2147483648
    %v1913 = vsel %vm1911, %v1899, %v1912
    %vm1914 = vcmp.eq.s32.totalorder %v1909, 2
    %v1915 = vxor.u32 %v1899, 2147483648
    %v1916 = vsel %vm1914, %v1915, %v1907
    %v1917 = vsel %vm1910, %v1913, %v1916
    %v1918 = vsel %vm1908, nan, %v1917
    %v1919 = vand.u32 2147483647, %v504
    %vm1920 = vcmp.le.f32.partialorder %v1919, 0.7853982
    %vm1921 = vcmp.lt.s32.totalorder %v504, 0
    %v1922 = vand.u32 %v504, 2139095040
    %v1923 = vshrl.u32 %v1922, 23
    %v1924 = vsub.s32 %v1923, 127
    %v1925 = vand.u32 2147483647, %v504
    %v1926 = vand.u32 %v1925, 8388607
    %v1927 = vor.u32 %v1926, 8388608
    %v1928 = vsub.s32 0, %v1927
    %v1929 = vadd.s32 %v1924, 1
    %vm1930 = vcmp.gt.s32.totalorder %v1929, 0
    %v1931 = vsel %vm1930, %v1929, 0
    %v1932 = vshrl.u32 %v1931, 5
    %v1933 = vand.u32 %v1931, 31
    %v1934 = vsub.s32 32, %v1933
    %v1935 = vshrl.u32 683565275, %v1934
    %v1936 = vshll.u32 683565275, %v1933
    %v1937 = vshrl.u32 2475754826, %v1934
    %v1938 = vor.u32 %v1936, %v1937
    %v1939 = vshll.u32 2475754826, %v1933
    %v1940 = vshrl.u32 2131351028, %v1934
    %v1941 = vor.u32 %v1939, %v1940
    %v1942 = vshll.u32 2131351028, %v1933
    %v1943 = vshrl.u32 2102212464, %v1934
    %v1944 = vor.u32 %v1942, %v1943
    %v1945 = vshll.u32 2102212464, %v1933
    %v1946 = vshrl.u32 920167782, %v1934
    %v1947 = vor.u32 %v1945, %v1946
    %v1948 = vshll.u32 920167782, %v1933
    %v1949 = vshrl.u32 1326507024, %v1934
    %v1950 = vor.u32 %v1948, %v1949
    %vm1951 = vcmp.lt.s32.totalorder %v1932, 1
    %vm1952 = vcmp.lt.s32.totalorder %v1932, 2
    %vm1953 = vcmp.lt.s32.totalorder %v1932, 3
    %vm1954 = vcmp.lt.s32.totalorder %v1932, 4
    %v1955 = vsel %vm1951, %v1935, %v1938
    %v1956 = vsel %vm1954, %v1944, 2102212464
    %v1957 = vsel %vm1953, %v1941, %v1956
    %v1958 = vsel %vm1952, %v1955, %v1957
    %v1959 = vsel %vm1951, %v1938, %v1941
    %v1960 = vsel %vm1954, %v1947, 920167782
    %v1961 = vsel %vm1953, %v1944, %v1960
    %v1962 = vsel %vm1952, %v1959, %v1961
    %v1963 = vsel %vm1951, %v1941, %v1944
    %v1964 = vsel %vm1954, %v1950, 1326507024
    %v1965 = vsel %vm1953, %v1947, %v1964
    %v1966 = vsel %vm1952, %v1963, %v1965
    %v1967 = vshll.u32 %v1927, 8
    %v1968 = vand.u32 %v1967, 65535
    %v1969 = vshrl.u32 %v1967, 16
    %v1970 = vand.u32 %v1966, 65535
    %v1971 = vshrl.u32 %v1966, 16
    %v1972 = vmul.u32 %v1968, %v1970
    %v1973 = vmul.u32 %v1968, %v1971
    %v1974 = vmul.u32 %v1969, %v1970
    %v1975 = vmul.u32 %v1969, %v1971
    %v1976 = vshll.u32 %v1973, 16
    %v1977 = vshrl.u32 %v1973, 16
    %v1978 = vshll.u32 %v1974, 16
    %v1979 = vshrl.u32 %v1974, 16
    %vm1980 = vc.u32 %v1972, %v1976
    %v1981 = vsel %vm1980, 1, 0
    %v1982 = vadd.s32 %v1972, %v1976
    %v1983 = vadd.s32 %v1975, %v1981
    %vm1984 = vc.u32 %v1982, %v1978
    %v1985 = vsel %vm1984, 1, 0
    %v1986 = vadd.s32 %v1982, %v1978
    %v1987 = vadd.s32 %v1983, %v1985
    %v1988 = vadd.s32 %v1987, %v1977
    %v1989 = vadd.s32 %v1988, %v1979
    %v1990 = vand.u32 %v1967, 65535
    %v1991 = vshrl.u32 %v1967, 16
    %v1992 = vand.u32 %v1962, 65535
    %v1993 = vshrl.u32 %v1962, 16
    %v1994 = vmul.u32 %v1990, %v1992
    %v1995 = vmul.u32 %v1990, %v1993
    %v1996 = vmul.u32 %v1991, %v1992
    %v1997 = vmul.u32 %v1991, %v1993
    %v1998 = vshll.u32 %v1995, 16
    %v1999 = vshrl.u32 %v1995, 16
    %v2000 = vshll.u32 %v1996, 16
    %v2001 = vshrl.u32 %v1996, 16
    %vm2002 = vc.u32 %v1994, %v1998
    %v2003 = vsel %vm2002, 1, 0
    %v2004 = vadd.s32 %v1994, %v1998
    %v2005 = vadd.s32 %v1997, %v2003
    %vm2006 = vc.u32 %v2004, %v2000
    %v2007 = vsel %vm2006, 1, 0
    %v2008 = vadd.s32 %v2004, %v2000
    %v2009 = vadd.s32 %v2005, %v2007
    %v2010 = vadd.s32 %v2009, %v1999
    %v2011 = vadd.s32 %v2010, %v2001
    %v2012 = vmul.u32 %v1967, %v1958
    %v2013 = vadd.s32 %v1989, %v2008
    %vm2014 = vc.u32 %v1989, %v2008
    %v2015 = vadd.s32 %v2011, 1
    %v2016 = vsel %vm2014, %v2015, %v2011
    %v2017 = vadd.s32 %v2012, %v2016
    %v2018 = vadd.s32 %v2017, 536870912
    %v2019 = vshrl.u32 %v2018, 30
    %v2020 = vshll.u32 %v2019, 30
    %v2021 = vsub.s32 %v2017, %v2020
    %vm2022 = vcmp.lt.s32.totalorder %v2021, 0
    %v2023 = vsub.s32 0, %v2021
    %v2024 = vsel %vm2022, %v2023, %v2021
    %v2025 = vclz %v2024
    %v2026 = vsub.s32 %v2025, 2
    %vm2027 = vcmp.gt.s32.totalorder 0, %v2026
    %v2028 = vsel %vm2027, 0, %v2026
    %v2029 = vsub.s32 32, %v2028
    %v2030 = vshll.u32 %v2021, %v2028
    %v2031 = vshrl.u32 %v2013, %v2029
    %v2032 = vor.u32 %v2030, %v2031
    %v2033 = vsub.s32 4294967266, %v2028
    %v2034 = vadd.s32 %v2033, 127
    %v2035 = vshll.u32 %v2034, 23
    %v2036 = vor.u32 4788187, %v2035
    %v2037 = vand.u32 2147483647, %v2036
    %v2039 = vcvt.s32.f32 %v2032
    %v2040 = vmul.f32 %v2039, %v2037
    %v2041 = vxor.u32 %v2040, 2147483648
    %v2042 = vsel %vm1921, %v2041, %v2040
    %v2043 = vsub.s32 4, %v2019
    %v2044 = vsel %vm1921, %v2043, %v2019
    %v2045 = vsel %vm1920, %v504, %v2042
    %v2046 = vsel %vm1920, 0, %v2044
    %v2047 = vmul.f32 %v2045, %v2045
    %v2048 = vmul.f32 %v2047, -0.001358992
    %v2049 = vadd.f32 %v2048, 0.041655596
    %v2050 = vmul.f32 %v2047, %v2049
    %v2051 = vadd.f32 %v2050, -0.4999988
    %v2052 = vmul.f32 %v2047, %v2051
    %v2053 = vadd.f32 1.0, %v2052
    %v2054 = vmul.f32 %v2045, %v2045
    %v2055 = vmul.f32 %v2054, -0.00019511016
    %v2056 = vadd.f32 %v2055, 0.008332121
    %v2057 = vmul.f32 %v2054, %v2056
    %v2058 = vadd.f32 %v2057, -0.16666654
    %v2059 = vmul.f32 %v2054, %v2058
    %v2060 = vadd.f32 %v2059, 1.0
    %v2061 = vmul.f32 %v2060, %v2045
    %vm2062 = vweird.f32 %v504
    %v2063 = vand.u32 %v2046, 3
    %vm2064 = vcmp.lt.s32.totalorder %v2063, 2
    %vm2065 = vcmp.eq.s32.totalorder %v2063, 0
    %v2066 = vxor.u32 %v2061, 2147483648
    %v2067 = vsel %vm2065, %v2053, %v2066
    %vm2068 = vcmp.eq.s32.totalorder %v2063, 2
    %v2069 = vxor.u32 %v2053, 2147483648
    %v2070 = vsel %vm2068, %v2069, %v2061
    %v2071 = vsel %vm2064, %v2067, %v2070
    %v2072 = vsel %vm2062, nan, %v2071
    %v2073 = vand.u32 2147483647, %v457
    %vm2074 = vcmp.le.f32.partialorder %v2073, 0.7853982
    %vm2075 = vcmp.lt.s32.totalorder %v457, 0
    %v2076 = vand.u32 %v457, 2139095040
    %v2077 = vshrl.u32 %v2076, 23
    %v2078 = vsub.s32 %v2077, 127
    %v2079 = vand.u32 2147483647, %v457
    %v2080 = vand.u32 %v2079, 8388607
    %v2081 = vor.u32 %v2080, 8388608
    %v2082 = vsub.s32 0, %v2081
    %v2083 = vadd.s32 %v2078, 1
    %vm2084 = vcmp.gt.s32.totalorder %v2083, 0
    %v2085 = vsel %vm2084, %v2083, 0
    %v2086 = vshrl.u32 %v2085, 5
    %v2087 = vand.u32 %v2085, 31
    %v2088 = vsub.s32 32, %v2087
    %v2089 = vshrl.u32 683565275, %v2088
    %v2090 = vshll.u32 683565275, %v2087
    %v2091 = vshrl.u32 2475754826, %v2088
    %v2092 = vor.u32 %v2090, %v2091
    %v2093 = vshll.u32 2475754826, %v2087
    %v2094 = vshrl.u32 2131351028, %v2088
    %v2095 = vor.u32 %v2093, %v2094
    %v2096 = vshll.u32 2131351028, %v2087
    %v2097 = vshrl.u32 2102212464, %v2088
    %v2098 = vor.u32 %v2096, %v2097
    %v2099 = vshll.u32 2102212464, %v2087
    %v2100 = vshrl.u32 920167782, %v2088
    %v2101 = vor.u32 %v2099, %v2100
    %v2102 = vshll.u32 920167782, %v2087
    %v2103 = vshrl.u32 1326507024, %v2088
    %v2104 = vor.u32 %v2102, %v2103
    %vm2105 = vcmp.lt.s32.totalorder %v2086, 1
    %vm2106 = vcmp.lt.s32.totalorder %v2086, 2
    %vm2107 = vcmp.lt.s32.totalorder %v2086, 3
    %vm2108 = vcmp.lt.s32.totalorder %v2086, 4
    %v2109 = vsel %vm2105, %v2089, %v2092
    %v2110 = vsel %vm2108, %v2098, 2102212464
    %v2111 = vsel %vm2107, %v2095, %v2110
    %v2112 = vsel %vm2106, %v2109, %v2111
    %v2113 = vsel %vm2105, %v2092, %v2095
    %v2114 = vsel %vm2108, %v2101, 920167782
    %v2115 = vsel %vm2107, %v2098, %v2114
    %v2116 = vsel %vm2106, %v2113, %v2115
    %v2117 = vsel %vm2105, %v2095, %v2098
    %v2118 = vsel %vm2108, %v2104, 1326507024
    %v2119 = vsel %vm2107, %v2101, %v2118
    %v2120 = vsel %vm2106, %v2117, %v2119
    %v2121 = vshll.u32 %v2081, 8
    %v2122 = vand.u32 %v2121, 65535
    %v2123 = vshrl.u32 %v2121, 16
    %v2124 = vand.u32 %v2120, 65535
    %v2125 = vshrl.u32 %v2120, 16
    %v2126 = vmul.u32 %v2122, %v2124
    %v2127 = vmul.u32 %v2122, %v2125
    %v2128 = vmul.u32 %v2123, %v2124
    %v2129 = vmul.u32 %v2123, %v2125
    %v2130 = vshll.u32 %v2127, 16
    %v2131 = vshrl.u32 %v2127, 16
    %v2132 = vshll.u32 %v2128, 16
    %v2133 = vshrl.u32 %v2128, 16
    %vm2134 = vc.u32 %v2126, %v2130
    %v2135 = vsel %vm2134, 1, 0
    %v2136 = vadd.s32 %v2126, %v2130
    %v2137 = vadd.s32 %v2129, %v2135
    %vm2138 = vc.u32 %v2136, %v2132
    %v2139 = vsel %vm2138, 1, 0
    %v2140 = vadd.s32 %v2136, %v2132
    %v2141 = vadd.s32 %v2137, %v2139
    %v2142 = vadd.s32 %v2141, %v2131
    %v2143 = vadd.s32 %v2142, %v2133
    %v2144 = vand.u32 %v2121, 65535
    %v2145 = vshrl.u32 %v2121, 16
    %v2146 = vand.u32 %v2116, 65535
    %v2147 = vshrl.u32 %v2116, 16
    %v2148 = vmul.u32 %v2144, %v2146
    %v2149 = vmul.u32 %v2144, %v2147
    %v2150 = vmul.u32 %v2145, %v2146
    %v2151 = vmul.u32 %v2145, %v2147
    %v2152 = vshll.u32 %v2149, 16
    %v2153 = vshrl.u32 %v2149, 16
    %v2154 = vshll.u32 %v2150, 16
    %v2155 = vshrl.u32 %v2150, 16
    %vm2156 = vc.u32 %v2148, %v2152
    %v2157 = vsel %vm2156, 1, 0
    %v2158 = vadd.s32 %v2148, %v2152
    %v2159 = vadd.s32 %v2151, %v2157
    %vm2160 = vc.u32 %v2158, %v2154
    %v2161 = vsel %vm2160, 1, 0
    %v2162 = vadd.s32 %v2158, %v2154
    %v2163 = vadd.s32 %v2159, %v2161
    %v2164 = vadd.s32 %v2163, %v2153
    %v2165 = vadd.s32 %v2164, %v2155
    %v2166 = vmul.u32 %v2121, %v2112
    %v2167 = vadd.s32 %v2143, %v2162
    %vm2168 = vc.u32 %v2143, %v2162
    %v2169 = vadd.s32 %v2165, 1
    %v2170 = vsel %vm2168, %v2169, %v2165
    %v2171 = vadd.s32 %v2166, %v2170
    %v2172 = vadd.s32 %v2171, 536870912
    %v2173 = vshrl.u32 %v2172, 30
    %v2174 = vshll.u32 %v2173, 30
    %v2175 = vsub.s32 %v2171, %v2174
    %vm2176 = vcmp.lt.s32.totalorder %v2175, 0
    %v2177 = vsub.s32 0, %v2175
    %v2178 = vsel %vm2176, %v2177, %v2175
    %v2179 = vclz %v2178
    %v2180 = vsub.s32 %v2179, 2
    %vm2181 = vcmp.gt.s32.totalorder 0, %v2180
    %v2182 = vsel %vm2181, 0, %v2180
    %v2183 = vsub.s32 32, %v2182
    %v2184 = vshll.u32 %v2175, %v2182
    %v2185 = vshrl.u32 %v2167, %v2183
    %v2186 = vor.u32 %v2184, %v2185
    %v2187 = vsub.s32 4294967266, %v2182
    %v2188 = vadd.s32 %v2187, 127
    %v2189 = vshll.u32 %v2188, 23
    %v2190 = vor.u32 4788187, %v2189
    %v2191 = vand.u32 2147483647, %v2190
    %v2193 = vcvt.s32.f32 %v2186
    %v2194 = vmul.f32 %v2193, %v2191
    %v2195 = vxor.u32 %v2194, 2147483648
    %v2196 = vsel %vm2075, %v2195, %v2194
    %v2197 = vsub.s32 4, %v2173
    %v2198 = vsel %vm2075, %v2197, %v2173
    %v2199 = vsel %vm2074, %v457, %v2196
    %v2200 = vsel %vm2074, 0, %v2198
    %v2201 = vmul.f32 %v2199, %v2199
    %v2202 = vmul.f32 %v2201, -0.001358992
    %v2203 = vadd.f32 %v2202, 0.041655596
    %v2204 = vmul.f32 %v2201, %v2203
    %v2205 = vadd.f32 %v2204, -0.4999988
    %v2206 = vmul.f32 %v2201, %v2205
    %v2207 = vadd.f32 1.0, %v2206
    %v2208 = vmul.f32 %v2199, %v2199
    %v2209 = vmul.f32 %v2208, -0.00019511016
    %v2210 = vadd.f32 %v2209, 0.008332121
    %v2211 = vmul.f32 %v2208, %v2210
    %v2212 = vadd.f32 %v2211, -0.16666654
    %v2213 = vmul.f32 %v2208, %v2212
    %v2214 = vadd.f32 %v2213, 1.0
    %v2215 = vmul.f32 %v2214, %v2199
    %vm2216 = vweird.f32 %v457
    %v2217 = vand.u32 %v2200, 3
    %vm2218 = vcmp.lt.s32.totalorder %v2217, 2
    %vm2219 = vcmp.eq.s32.totalorder %v2217, 0
    %v2220 = vxor.u32 %v2215, 2147483648
    %v2221 = vsel %vm2219, %v2207, %v2220
    %vm2222 = vcmp.eq.s32.totalorder %v2217, 2
    %v2223 = vxor.u32 %v2207, 2147483648
    %v2224 = vsel %vm2222, %v2223, %v2215
    %v2225 = vsel %vm2218, %v2221, %v2224
    %v2226 = vsel %vm2216, nan, %v2225
    %v2227 = vand.u32 2147483647, %v506
    %vm2228 = vcmp.le.f32.partialorder %v2227, 0.7853982
    %vm2229 = vcmp.lt.s32.totalorder %v506, 0
    %v2230 = vand.u32 %v506, 2139095040
    %v2231 = vshrl.u32 %v2230, 23
    %v2232 = vsub.s32 %v2231, 127
    %v2233 = vand.u32 2147483647, %v506
    %v2234 = vand.u32 %v2233, 8388607
    %v2235 = vor.u32 %v2234, 8388608
    %v2236 = vsub.s32 0, %v2235
    %v2237 = vadd.s32 %v2232, 1
    %vm2238 = vcmp.gt.s32.totalorder %v2237, 0
    %v2239 = vsel %vm2238, %v2237, 0
    %v2240 = vshrl.u32 %v2239, 5
    %v2241 = vand.u32 %v2239, 31
    %v2242 = vsub.s32 32, %v2241
    %v2243 = vshrl.u32 683565275, %v2242
    %v2244 = vshll.u32 683565275, %v2241
    %v2245 = vshrl.u32 2475754826, %v2242
    %v2246 = vor.u32 %v2244, %v2245
    %v2247 = vshll.u32 2475754826, %v2241
    %v2248 = vshrl.u32 2131351028, %v2242
    %v2249 = vor.u32 %v2247, %v2248
    %v2250 = vshll.u32 2131351028, %v2241
    %v2251 = vshrl.u32 2102212464, %v2242
    %v2252 = vor.u32 %v2250, %v2251
    %v2253 = vshll.u32 2102212464, %v2241
    %v2254 = vshrl.u32 920167782, %v2242
    %v2255 = vor.u32 %v2253, %v2254
    %v2256 = vshll.u32 920167782, %v2241
    %v2257 = vshrl.u32 1326507024, %v2242
    %v2258 = vor.u32 %v2256, %v2257
    %vm2259 = vcmp.lt.s32.totalorder %v2240, 1
    %vm2260 = vcmp.lt.s32.totalorder %v2240, 2
    %vm2261 = vcmp.lt.s32.totalorder %v2240, 3
    %vm2262 = vcmp.lt.s32.totalorder %v2240, 4
    %v2263 = vsel %vm2259, %v2243, %v2246
    %v2264 = vsel %vm2262, %v2252, 2102212464
    %v2265 = vsel %vm2261, %v2249, %v2264
    %v2266 = vsel %vm2260, %v2263, %v2265
    %v2267 = vsel %vm2259, %v2246, %v2249
    %v2268 = vsel %vm2262, %v2255, 920167782
    %v2269 = vsel %vm2261, %v2252, %v2268
    %v2270 = vsel %vm2260, %v2267, %v2269
    %v2271 = vsel %vm2259, %v2249, %v2252
    %v2272 = vsel %vm2262, %v2258, 1326507024
    %v2273 = vsel %vm2261, %v2255, %v2272
    %v2274 = vsel %vm2260, %v2271, %v2273
    %v2275 = vshll.u32 %v2235, 8
    %v2276 = vand.u32 %v2275, 65535
    %v2277 = vshrl.u32 %v2275, 16
    %v2278 = vand.u32 %v2274, 65535
    %v2279 = vshrl.u32 %v2274, 16
    %v2280 = vmul.u32 %v2276, %v2278
    %v2281 = vmul.u32 %v2276, %v2279
    %v2282 = vmul.u32 %v2277, %v2278
    %v2283 = vmul.u32 %v2277, %v2279
    %v2284 = vshll.u32 %v2281, 16
    %v2285 = vshrl.u32 %v2281, 16
    %v2286 = vshll.u32 %v2282, 16
    %v2287 = vshrl.u32 %v2282, 16
    %vm2288 = vc.u32 %v2280, %v2284
    %v2289 = vsel %vm2288, 1, 0
    %v2290 = vadd.s32 %v2280, %v2284
    %v2291 = vadd.s32 %v2283, %v2289
    %vm2292 = vc.u32 %v2290, %v2286
    %v2293 = vsel %vm2292, 1, 0
    %v2294 = vadd.s32 %v2290, %v2286
    %v2295 = vadd.s32 %v2291, %v2293
    %v2296 = vadd.s32 %v2295, %v2285
    %v2297 = vadd.s32 %v2296, %v2287
    %v2298 = vand.u32 %v2275, 65535
    %v2299 = vshrl.u32 %v2275, 16
    %v2300 = vand.u32 %v2270, 65535
    %v2301 = vshrl.u32 %v2270, 16
    %v2302 = vmul.u32 %v2298, %v2300
    %v2303 = vmul.u32 %v2298, %v2301
    %v2304 = vmul.u32 %v2299, %v2300
    %v2305 = vmul.u32 %v2299, %v2301
    %v2306 = vshll.u32 %v2303, 16
    %v2307 = vshrl.u32 %v2303, 16
    %v2308 = vshll.u32 %v2304, 16
    %v2309 = vshrl.u32 %v2304, 16
    %vm2310 = vc.u32 %v2302, %v2306
    %v2311 = vsel %vm2310, 1, 0
    %v2312 = vadd.s32 %v2302, %v2306
    %v2313 = vadd.s32 %v2305, %v2311
    %vm2314 = vc.u32 %v2312, %v2308
    %v2315 = vsel %vm2314, 1, 0
    %v2316 = vadd.s32 %v2312, %v2308
    %v2317 = vadd.s32 %v2313, %v2315
    %v2318 = vadd.s32 %v2317, %v2307
    %v2319 = vadd.s32 %v2318, %v2309
    %v2320 = vmul.u32 %v2275, %v2266
    %v2321 = vadd.s32 %v2297, %v2316
    %vm2322 = vc.u32 %v2297, %v2316
    %v2323 = vadd.s32 %v2319, 1
    %v2324 = vsel %vm2322, %v2323, %v2319
    %v2325 = vadd.s32 %v2320, %v2324
    %v2326 = vadd.s32 %v2325, 536870912
    %v2327 = vshrl.u32 %v2326, 30
    %v2328 = vshll.u32 %v2327, 30
    %v2329 = vsub.s32 %v2325, %v2328
    %vm2330 = vcmp.lt.s32.totalorder %v2329, 0
    %v2331 = vsub.s32 0, %v2329
    %v2332 = vsel %vm2330, %v2331, %v2329
    %v2333 = vclz %v2332
    %v2334 = vsub.s32 %v2333, 2
    %vm2335 = vcmp.gt.s32.totalorder 0, %v2334
    %v2336 = vsel %vm2335, 0, %v2334
    %v2337 = vsub.s32 32, %v2336
    %v2338 = vshll.u32 %v2329, %v2336
    %v2339 = vshrl.u32 %v2321, %v2337
    %v2340 = vor.u32 %v2338, %v2339
    %v2341 = vsub.s32 4294967266, %v2336
    %v2342 = vadd.s32 %v2341, 127
    %v2343 = vshll.u32 %v2342, 23
    %v2344 = vor.u32 4788187, %v2343
    %v2345 = vand.u32 2147483647, %v2344
    %v2347 = vcvt.s32.f32 %v2340
    %v2348 = vmul.f32 %v2347, %v2345
    %v2349 = vxor.u32 %v2348, 2147483648
    %v2350 = vsel %vm2229, %v2349, %v2348
    %v2351 = vsub.s32 4, %v2327
    %v2352 = vsel %vm2229, %v2351, %v2327
    %v2353 = vsel %vm2228, %v506, %v2350
    %v2354 = vsel %vm2228, 0, %v2352
    %v2355 = vmul.f32 %v2353, %v2353
    %v2356 = vmul.f32 %v2355, -0.001358992
    %v2357 = vadd.f32 %v2356, 0.041655596
    %v2358 = vmul.f32 %v2355, %v2357
    %v2359 = vadd.f32 %v2358, -0.4999988
    %v2360 = vmul.f32 %v2355, %v2359
    %v2361 = vadd.f32 1.0, %v2360
    %v2362 = vmul.f32 %v2353, %v2353
    %v2363 = vmul.f32 %v2362, -0.00019511016
    %v2364 = vadd.f32 %v2363, 0.008332121
    %v2365 = vmul.f32 %v2362, %v2364
    %v2366 = vadd.f32 %v2365, -0.16666654
    %v2367 = vmul.f32 %v2362, %v2366
    %v2368 = vadd.f32 %v2367, 1.0
    %v2369 = vmul.f32 %v2368, %v2353
    %vm2370 = vweird.f32 %v506
    %v2371 = vand.u32 %v2354, 3
    %vm2372 = vcmp.lt.s32.totalorder %v2371, 2
    %vm2373 = vcmp.eq.s32.totalorder %v2371, 0
    %v2374 = vxor.u32 %v2369, 2147483648
    %v2375 = vsel %vm2373, %v2361, %v2374
    %vm2376 = vcmp.eq.s32.totalorder %v2371, 2
    %v2377 = vxor.u32 %v2361, 2147483648
    %v2378 = vsel %vm2376, %v2377, %v2369
    %v2379 = vsel %vm2372, %v2375, %v2378
    %v2380 = vsel %vm2370, nan, %v2379
    %v2381 = vand.u32 2147483647, %v460
    %vm2382 = vcmp.le.f32.partialorder %v2381, 0.7853982
    %vm2383 = vcmp.lt.s32.totalorder %v460, 0
    %v2384 = vand.u32 %v460, 2139095040
    %v2385 = vshrl.u32 %v2384, 23
    %v2386 = vsub.s32 %v2385, 127
    %v2387 = vand.u32 2147483647, %v460
    %v2388 = vand.u32 %v2387, 8388607
    %v2389 = vor.u32 %v2388, 8388608
    %v2390 = vsub.s32 0, %v2389
    %v2391 = vadd.s32 %v2386, 1
    %vm2392 = vcmp.gt.s32.totalorder %v2391, 0
    %v2393 = vsel %vm2392, %v2391, 0
    %v2394 = vshrl.u32 %v2393, 5
    %v2395 = vand.u32 %v2393, 31
    %v2396 = vsub.s32 32, %v2395
    %v2397 = vshrl.u32 683565275, %v2396
    %v2398 = vshll.u32 683565275, %v2395
    %v2399 = vshrl.u32 2475754826, %v2396
    %v2400 = vor.u32 %v2398, %v2399
    %v2401 = vshll.u32 2475754826, %v2395
    %v2402 = vshrl.u32 2131351028, %v2396
    %v2403 = vor.u32 %v2401, %v2402
    %v2404 = vshll.u32 2131351028, %v2395
    %v2405 = vshrl.u32 2102212464, %v2396
    %v2406 = vor.u32 %v2404, %v2405
    %v2407 = vshll.u32 2102212464, %v2395
    %v2408 = vshrl.u32 920167782, %v2396
    %v2409 = vor.u32 %v2407, %v2408
    %v2410 = vshll.u32 920167782, %v2395
    %v2411 = vshrl.u32 1326507024, %v2396
    %v2412 = vor.u32 %v2410, %v2411
    %vm2413 = vcmp.lt.s32.totalorder %v2394, 1
    %vm2414 = vcmp.lt.s32.totalorder %v2394, 2
    %vm2415 = vcmp.lt.s32.totalorder %v2394, 3
    %vm2416 = vcmp.lt.s32.totalorder %v2394, 4
    %v2417 = vsel %vm2413, %v2397, %v2400
    %v2418 = vsel %vm2416, %v2406, 2102212464
    %v2419 = vsel %vm2415, %v2403, %v2418
    %v2420 = vsel %vm2414, %v2417, %v2419
    %v2421 = vsel %vm2413, %v2400, %v2403
    %v2422 = vsel %vm2416, %v2409, 920167782
    %v2423 = vsel %vm2415, %v2406, %v2422
    %v2424 = vsel %vm2414, %v2421, %v2423
    %v2425 = vsel %vm2413, %v2403, %v2406
    %v2426 = vsel %vm2416, %v2412, 1326507024
    %v2427 = vsel %vm2415, %v2409, %v2426
    %v2428 = vsel %vm2414, %v2425, %v2427
    %v2429 = vshll.u32 %v2389, 8
    %v2430 = vand.u32 %v2429, 65535
    %v2431 = vshrl.u32 %v2429, 16
    %v2432 = vand.u32 %v2428, 65535
    %v2433 = vshrl.u32 %v2428, 16
    %v2434 = vmul.u32 %v2430, %v2432
    %v2435 = vmul.u32 %v2430, %v2433
    %v2436 = vmul.u32 %v2431, %v2432
    %v2437 = vmul.u32 %v2431, %v2433
    %v2438 = vshll.u32 %v2435, 16
    %v2439 = vshrl.u32 %v2435, 16
    %v2440 = vshll.u32 %v2436, 16
    %v2441 = vshrl.u32 %v2436, 16
    %vm2442 = vc.u32 %v2434, %v2438
    %v2443 = vsel %vm2442, 1, 0
    %v2444 = vadd.s32 %v2434, %v2438
    %v2445 = vadd.s32 %v2437, %v2443
    %vm2446 = vc.u32 %v2444, %v2440
    %v2447 = vsel %vm2446, 1, 0
    %v2448 = vadd.s32 %v2444, %v2440
    %v2449 = vadd.s32 %v2445, %v2447
    %v2450 = vadd.s32 %v2449, %v2439
    %v2451 = vadd.s32 %v2450, %v2441
    %v2452 = vand.u32 %v2429, 65535
    %v2453 = vshrl.u32 %v2429, 16
    %v2454 = vand.u32 %v2424, 65535
    %v2455 = vshrl.u32 %v2424, 16
    %v2456 = vmul.u32 %v2452, %v2454
    %v2457 = vmul.u32 %v2452, %v2455
    %v2458 = vmul.u32 %v2453, %v2454
    %v2459 = vmul.u32 %v2453, %v2455
    %v2460 = vshll.u32 %v2457, 16
    %v2461 = vshrl.u32 %v2457, 16
    %v2462 = vshll.u32 %v2458, 16
    %v2463 = vshrl.u32 %v2458, 16
    %vm2464 = vc.u32 %v2456, %v2460
    %v2465 = vsel %vm2464, 1, 0
    %v2466 = vadd.s32 %v2456, %v2460
    %v2467 = vadd.s32 %v2459, %v2465
    %vm2468 = vc.u32 %v2466, %v2462
    %v2469 = vsel %vm2468, 1, 0
    %v2470 = vadd.s32 %v2466, %v2462
    %v2471 = vadd.s32 %v2467, %v2469
    %v2472 = vadd.s32 %v2471, %v2461
    %v2473 = vadd.s32 %v2472, %v2463
    %v2474 = vmul.u32 %v2429, %v2420
    %v2475 = vadd.s32 %v2451, %v2470
    %vm2476 = vc.u32 %v2451, %v2470
    %v2477 = vadd.s32 %v2473, 1
    %v2478 = vsel %vm2476, %v2477, %v2473
    %v2479 = vadd.s32 %v2474, %v2478
    %v2480 = vadd.s32 %v2479, 536870912
    %v2481 = vshrl.u32 %v2480, 30
    %v2482 = vshll.u32 %v2481, 30
    %v2483 = vsub.s32 %v2479, %v2482
    %vm2484 = vcmp.lt.s32.totalorder %v2483, 0
    %v2485 = vsub.s32 0, %v2483
    %v2486 = vsel %vm2484, %v2485, %v2483
    %v2487 = vclz %v2486
    %v2488 = vsub.s32 %v2487, 2
    %vm2489 = vcmp.gt.s32.totalorder 0, %v2488
    %v2490 = vsel %vm2489, 0, %v2488
    %v2491 = vsub.s32 32, %v2490
    %v2492 = vshll.u32 %v2483, %v2490
    %v2493 = vshrl.u32 %v2475, %v2491
    %v2494 = vor.u32 %v2492, %v2493
    %v2495 = vsub.s32 4294967266, %v2490
    %v2496 = vadd.s32 %v2495, 127
    %v2497 = vshll.u32 %v2496, 23
    %v2498 = vor.u32 4788187, %v2497
    %v2499 = vand.u32 2147483647, %v2498
    %v2501 = vcvt.s32.f32 %v2494
    %v2502 = vmul.f32 %v2501, %v2499
    %v2503 = vxor.u32 %v2502, 2147483648
    %v2504 = vsel %vm2383, %v2503, %v2502
    %v2505 = vsub.s32 4, %v2481
    %v2506 = vsel %vm2383, %v2505, %v2481
    %v2507 = vsel %vm2382, %v460, %v2504
    %v2508 = vsel %vm2382, 0, %v2506
    %v2509 = vmul.f32 %v2507, %v2507
    %v2510 = vmul.f32 %v2509, -0.001358992
    %v2511 = vadd.f32 %v2510, 0.041655596
    %v2512 = vmul.f32 %v2509, %v2511
    %v2513 = vadd.f32 %v2512, -0.4999988
    %v2514 = vmul.f32 %v2509, %v2513
    %v2515 = vadd.f32 1.0, %v2514
    %v2516 = vmul.f32 %v2507, %v2507
    %v2517 = vmul.f32 %v2516, -0.00019511016
    %v2518 = vadd.f32 %v2517, 0.008332121
    %v2519 = vmul.f32 %v2516, %v2518
    %v2520 = vadd.f32 %v2519, -0.16666654
    %v2521 = vmul.f32 %v2516, %v2520
    %v2522 = vadd.f32 %v2521, 1.0
    %v2523 = vmul.f32 %v2522, %v2507
    %vm2524 = vweird.f32 %v460
    %v2525 = vand.u32 %v2508, 3
    %vm2526 = vcmp.lt.s32.totalorder %v2525, 2
    %vm2527 = vcmp.eq.s32.totalorder %v2525, 0
    %v2528 = vxor.u32 %v2523, 2147483648
    %v2529 = vsel %vm2527, %v2515, %v2528
    %vm2530 = vcmp.eq.s32.totalorder %v2525, 2
    %v2531 = vxor.u32 %v2515, 2147483648
    %v2532 = vsel %vm2530, %v2531, %v2523
    %v2533 = vsel %vm2526, %v2529, %v2532
    %v2534 = vsel %vm2524, nan, %v2533
    %v2535 = vand.u32 2147483647, %v509
    %vm2536 = vcmp.le.f32.partialorder %v2535, 0.7853982
    %vm2537 = vcmp.lt.s32.totalorder %v509, 0
    %v2538 = vand.u32 %v509, 2139095040
    %v2539 = vshrl.u32 %v2538, 23
    %v2540 = vsub.s32 %v2539, 127
    %v2541 = vand.u32 2147483647, %v509
    %v2542 = vand.u32 %v2541, 8388607
    %v2543 = vor.u32 %v2542, 8388608
    %v2544 = vsub.s32 0, %v2543
    %v2545 = vadd.s32 %v2540, 1
    %vm2546 = vcmp.gt.s32.totalorder %v2545, 0
    %v2547 = vsel %vm2546, %v2545, 0
    %v2548 = vshrl.u32 %v2547, 5
    %v2549 = vand.u32 %v2547, 31
    %v2550 = vsub.s32 32, %v2549
    %v2551 = vshrl.u32 683565275, %v2550
    %v2552 = vshll.u32 683565275, %v2549
    %v2553 = vshrl.u32 2475754826, %v2550
    %v2554 = vor.u32 %v2552, %v2553
    %v2555 = vshll.u32 2475754826, %v2549
    %v2556 = vshrl.u32 2131351028, %v2550
    %v2557 = vor.u32 %v2555, %v2556
    %v2558 = vshll.u32 2131351028, %v2549
    %v2559 = vshrl.u32 2102212464, %v2550
    %v2560 = vor.u32 %v2558, %v2559
    %v2561 = vshll.u32 2102212464, %v2549
    %v2562 = vshrl.u32 920167782, %v2550
    %v2563 = vor.u32 %v2561, %v2562
    %v2564 = vshll.u32 920167782, %v2549
    %v2565 = vshrl.u32 1326507024, %v2550
    %v2566 = vor.u32 %v2564, %v2565
    %vm2567 = vcmp.lt.s32.totalorder %v2548, 1
    %vm2568 = vcmp.lt.s32.totalorder %v2548, 2
    %vm2569 = vcmp.lt.s32.totalorder %v2548, 3
    %vm2570 = vcmp.lt.s32.totalorder %v2548, 4
    %v2571 = vsel %vm2567, %v2551, %v2554
    %v2572 = vsel %vm2570, %v2560, 2102212464
    %v2573 = vsel %vm2569, %v2557, %v2572
    %v2574 = vsel %vm2568, %v2571, %v2573
    %v2575 = vsel %vm2567, %v2554, %v2557
    %v2576 = vsel %vm2570, %v2563, 920167782
    %v2577 = vsel %vm2569, %v2560, %v2576
    %v2578 = vsel %vm2568, %v2575, %v2577
    %v2579 = vsel %vm2567, %v2557, %v2560
    %v2580 = vsel %vm2570, %v2566, 1326507024
    %v2581 = vsel %vm2569, %v2563, %v2580
    %v2582 = vsel %vm2568, %v2579, %v2581
    %v2583 = vshll.u32 %v2543, 8
    %v2584 = vand.u32 %v2583, 65535
    %v2585 = vshrl.u32 %v2583, 16
    %v2586 = vand.u32 %v2582, 65535
    %v2587 = vshrl.u32 %v2582, 16
    %v2588 = vmul.u32 %v2584, %v2586
    %v2589 = vmul.u32 %v2584, %v2587
    %v2590 = vmul.u32 %v2585, %v2586
    %v2591 = vmul.u32 %v2585, %v2587
    %v2592 = vshll.u32 %v2589, 16
    %v2593 = vshrl.u32 %v2589, 16
    %v2594 = vshll.u32 %v2590, 16
    %v2595 = vshrl.u32 %v2590, 16
    %vm2596 = vc.u32 %v2588, %v2592
    %v2597 = vsel %vm2596, 1, 0
    %v2598 = vadd.s32 %v2588, %v2592
    %v2599 = vadd.s32 %v2591, %v2597
    %vm2600 = vc.u32 %v2598, %v2594
    %v2601 = vsel %vm2600, 1, 0
    %v2602 = vadd.s32 %v2598, %v2594
    %v2603 = vadd.s32 %v2599, %v2601
    %v2604 = vadd.s32 %v2603, %v2593
    %v2605 = vadd.s32 %v2604, %v2595
    %v2606 = vand.u32 %v2583, 65535
    %v2607 = vshrl.u32 %v2583, 16
    %v2608 = vand.u32 %v2578, 65535
    %v2609 = vshrl.u32 %v2578, 16
    %v2610 = vmul.u32 %v2606, %v2608
    %v2611 = vmul.u32 %v2606, %v2609
    %v2612 = vmul.u32 %v2607, %v2608
    %v2613 = vmul.u32 %v2607, %v2609
    %v2614 = vshll.u32 %v2611, 16
    %v2615 = vshrl.u32 %v2611, 16
    %v2616 = vshll.u32 %v2612, 16
    %v2617 = vshrl.u32 %v2612, 16
    %vm2618 = vc.u32 %v2610, %v2614
    %v2619 = vsel %vm2618, 1, 0
    %v2620 = vadd.s32 %v2610, %v2614
    %v2621 = vadd.s32 %v2613, %v2619
    %vm2622 = vc.u32 %v2620, %v2616
    %v2623 = vsel %vm2622, 1, 0
    %v2624 = vadd.s32 %v2620, %v2616
    %v2625 = vadd.s32 %v2621, %v2623
    %v2626 = vadd.s32 %v2625, %v2615
    %v2627 = vadd.s32 %v2626, %v2617
    %v2628 = vmul.u32 %v2583, %v2574
    %v2629 = vadd.s32 %v2605, %v2624
    %vm2630 = vc.u32 %v2605, %v2624
    %v2631 = vadd.s32 %v2627, 1
    %v2632 = vsel %vm2630, %v2631, %v2627
    %v2633 = vadd.s32 %v2628, %v2632
    %v2634 = vadd.s32 %v2633, 536870912
    %v2635 = vshrl.u32 %v2634, 30
    %v2636 = vshll.u32 %v2635, 30
    %v2637 = vsub.s32 %v2633, %v2636
    %vm2638 = vcmp.lt.s32.totalorder %v2637, 0
    %v2639 = vsub.s32 0, %v2637
    %v2640 = vsel %vm2638, %v2639, %v2637
    %v2641 = vclz %v2640
    %v2642 = vsub.s32 %v2641, 2
    %vm2643 = vcmp.gt.s32.totalorder 0, %v2642
    %v2644 = vsel %vm2643, 0, %v2642
    %v2645 = vsub.s32 32, %v2644
    %v2646 = vshll.u32 %v2637, %v2644
    %v2647 = vshrl.u32 %v2629, %v2645
    %v2648 = vor.u32 %v2646, %v2647
    %v2649 = vsub.s32 4294967266, %v2644
    %v2650 = vadd.s32 %v2649, 127
    %v2651 = vshll.u32 %v2650, 23
    %v2652 = vor.u32 4788187, %v2651
    %v2653 = vand.u32 2147483647, %v2652
    %v2655 = vcvt.s32.f32 %v2648
    %v2656 = vmul.f32 %v2655, %v2653
    %v2657 = vxor.u32 %v2656, 2147483648
    %v2658 = vsel %vm2537, %v2657, %v2656
    %v2659 = vsub.s32 4, %v2635
    %v2660 = vsel %vm2537, %v2659, %v2635
    %v2661 = vsel %vm2536, %v509, %v2658
    %v2662 = vsel %vm2536, 0, %v2660
    %v2663 = vmul.f32 %v2661, %v2661
    %v2664 = vmul.f32 %v2663, -0.001358992
    %v2665 = vadd.f32 %v2664, 0.041655596
    %v2666 = vmul.f32 %v2663, %v2665
    %v2667 = vadd.f32 %v2666, -0.4999988
    %v2668 = vmul.f32 %v2663, %v2667
    %v2669 = vadd.f32 1.0, %v2668
    %v2670 = vmul.f32 %v2661, %v2661
    %v2671 = vmul.f32 %v2670, -0.00019511016
    %v2672 = vadd.f32 %v2671, 0.008332121
    %v2673 = vmul.f32 %v2670, %v2672
    %v2674 = vadd.f32 %v2673, -0.16666654
    %v2675 = vmul.f32 %v2670, %v2674
    %v2676 = vadd.f32 %v2675, 1.0
    %v2677 = vmul.f32 %v2676, %v2661
    %vm2678 = vweird.f32 %v509
    %v2679 = vand.u32 %v2662, 3
    %vm2680 = vcmp.lt.s32.totalorder %v2679, 2
    %vm2681 = vcmp.eq.s32.totalorder %v2679, 0
    %v2682 = vxor.u32 %v2677, 2147483648
    %v2683 = vsel %vm2681, %v2669, %v2682
    %vm2684 = vcmp.eq.s32.totalorder %v2679, 2
    %v2685 = vxor.u32 %v2669, 2147483648
    %v2686 = vsel %vm2684, %v2685, %v2677
    %v2687 = vsel %vm2680, %v2683, %v2686
    %v2688 = vsel %vm2678, nan, %v2687
    %v2689 = vand.u32 2147483647, %v462
    %vm2690 = vcmp.le.f32.partialorder %v2689, 0.7853982
    %vm2691 = vcmp.lt.s32.totalorder %v462, 0
    %v2692 = vand.u32 %v462, 2139095040
    %v2693 = vshrl.u32 %v2692, 23
    %v2694 = vsub.s32 %v2693, 127
    %v2695 = vand.u32 2147483647, %v462
    %v2696 = vand.u32 %v2695, 8388607
    %v2697 = vor.u32 %v2696, 8388608
    %v2698 = vsub.s32 0, %v2697
    %v2699 = vadd.s32 %v2694, 1
    %vm2700 = vcmp.gt.s32.totalorder %v2699, 0
    %v2701 = vsel %vm2700, %v2699, 0
    %v2702 = vshrl.u32 %v2701, 5
    %v2703 = vand.u32 %v2701, 31
    %v2704 = vsub.s32 32, %v2703
    %v2705 = vshrl.u32 683565275, %v2704
    %v2706 = vshll.u32 683565275, %v2703
    %v2707 = vshrl.u32 2475754826, %v2704
    %v2708 = vor.u32 %v2706, %v2707
    %v2709 = vshll.u32 2475754826, %v2703
    %v2710 = vshrl.u32 2131351028, %v2704
    %v2711 = vor.u32 %v2709, %v2710
    %v2712 = vshll.u32 2131351028, %v2703
    %v2713 = vshrl.u32 2102212464, %v2704
    %v2714 = vor.u32 %v2712, %v2713
    %v2715 = vshll.u32 2102212464, %v2703
    %v2716 = vshrl.u32 920167782, %v2704
    %v2717 = vor.u32 %v2715, %v2716
    %v2718 = vshll.u32 920167782, %v2703
    %v2719 = vshrl.u32 1326507024, %v2704
    %v2720 = vor.u32 %v2718, %v2719
    %vm2721 = vcmp.lt.s32.totalorder %v2702, 1
    %vm2722 = vcmp.lt.s32.totalorder %v2702, 2
    %vm2723 = vcmp.lt.s32.totalorder %v2702, 3
    %vm2724 = vcmp.lt.s32.totalorder %v2702, 4
    %v2725 = vsel %vm2721, %v2705, %v2708
    %v2726 = vsel %vm2724, %v2714, 2102212464
    %v2727 = vsel %vm2723, %v2711, %v2726
    %v2728 = vsel %vm2722, %v2725, %v2727
    %v2729 = vsel %vm2721, %v2708, %v2711
    %v2730 = vsel %vm2724, %v2717, 920167782
    %v2731 = vsel %vm2723, %v2714, %v2730
    %v2732 = vsel %vm2722, %v2729, %v2731
    %v2733 = vsel %vm2721, %v2711, %v2714
    %v2734 = vsel %vm2724, %v2720, 1326507024
    %v2735 = vsel %vm2723, %v2717, %v2734
    %v2736 = vsel %vm2722, %v2733, %v2735
    %v2737 = vshll.u32 %v2697, 8
    %v2738 = vand.u32 %v2737, 65535
    %v2739 = vshrl.u32 %v2737, 16
    %v2740 = vand.u32 %v2736, 65535
    %v2741 = vshrl.u32 %v2736, 16
    %v2742 = vmul.u32 %v2738, %v2740
    %v2743 = vmul.u32 %v2738, %v2741
    %v2744 = vmul.u32 %v2739, %v2740
    %v2745 = vmul.u32 %v2739, %v2741
    %v2746 = vshll.u32 %v2743, 16
    %v2747 = vshrl.u32 %v2743, 16
    %v2748 = vshll.u32 %v2744, 16
    %v2749 = vshrl.u32 %v2744, 16
    %vm2750 = vc.u32 %v2742, %v2746
    %v2751 = vsel %vm2750, 1, 0
    %v2752 = vadd.s32 %v2742, %v2746
    %v2753 = vadd.s32 %v2745, %v2751
    %vm2754 = vc.u32 %v2752, %v2748
    %v2755 = vsel %vm2754, 1, 0
    %v2756 = vadd.s32 %v2752, %v2748
    %v2757 = vadd.s32 %v2753, %v2755
    %v2758 = vadd.s32 %v2757, %v2747
    %v2759 = vadd.s32 %v2758, %v2749
    %v2760 = vand.u32 %v2737, 65535
    %v2761 = vshrl.u32 %v2737, 16
    %v2762 = vand.u32 %v2732, 65535
    %v2763 = vshrl.u32 %v2732, 16
    %v2764 = vmul.u32 %v2760, %v2762
    %v2765 = vmul.u32 %v2760, %v2763
    %v2766 = vmul.u32 %v2761, %v2762
    %v2767 = vmul.u32 %v2761, %v2763
    %v2768 = vshll.u32 %v2765, 16
    %v2769 = vshrl.u32 %v2765, 16
    %v2770 = vshll.u32 %v2766, 16
    %v2771 = vshrl.u32 %v2766, 16
    %vm2772 = vc.u32 %v2764, %v2768
    %v2773 = vsel %vm2772, 1, 0
    %v2774 = vadd.s32 %v2764, %v2768
    %v2775 = vadd.s32 %v2767, %v2773
    %vm2776 = vc.u32 %v2774, %v2770
    %v2777 = vsel %vm2776, 1, 0
    %v2778 = vadd.s32 %v2774, %v2770
    %v2779 = vadd.s32 %v2775, %v2777
    %v2780 = vadd.s32 %v2779, %v2769
    %v2781 = vadd.s32 %v2780, %v2771
    %v2782 = vmul.u32 %v2737, %v2728
    %v2783 = vadd.s32 %v2759, %v2778
    %vm2784 = vc.u32 %v2759, %v2778
    %v2785 = vadd.s32 %v2781, 1
    %v2786 = vsel %vm2784, %v2785, %v2781
    %v2787 = vadd.s32 %v2782, %v2786
    %v2788 = vadd.s32 %v2787, 536870912
    %v2789 = vshrl.u32 %v2788, 30
    %v2790 = vshll.u32 %v2789, 30
    %v2791 = vsub.s32 %v2787, %v2790
    %vm2792 = vcmp.lt.s32.totalorder %v2791, 0
    %v2793 = vsub.s32 0, %v2791
    %v2794 = vsel %vm2792, %v2793, %v2791
    %v2795 = vclz %v2794
    %v2796 = vsub.s32 %v2795, 2
    %vm2797 = vcmp.gt.s32.totalorder 0, %v2796
    %v2798 = vsel %vm2797, 0, %v2796
    %v2799 = vsub.s32 32, %v2798
    %v2800 = vshll.u32 %v2791, %v2798
    %v2801 = vshrl.u32 %v2783, %v2799
    %v2802 = vor.u32 %v2800, %v2801
    %v2803 = vsub.s32 4294967266, %v2798
    %v2804 = vadd.s32 %v2803, 127
    %v2805 = vshll.u32 %v2804, 23
    %v2806 = vor.u32 4788187, %v2805
    %v2807 = vand.u32 2147483647, %v2806
    %v2809 = vcvt.s32.f32 %v2802
    %v2810 = vmul.f32 %v2809, %v2807
    %v2811 = vxor.u32 %v2810, 2147483648
    %v2812 = vsel %vm2691, %v2811, %v2810
    %v2813 = vsub.s32 4, %v2789
    %v2814 = vsel %vm2691, %v2813, %v2789
    %v2815 = vsel %vm2690, %v462, %v2812
    %v2816 = vsel %vm2690, 0, %v2814
    %v2817 = vmul.f32 %v2815, %v2815
    %v2818 = vmul.f32 %v2817, -0.001358992
    %v2819 = vadd.f32 %v2818, 0.041655596
    %v2820 = vmul.f32 %v2817, %v2819
    %v2821 = vadd.f32 %v2820, -0.4999988
    %v2822 = vmul.f32 %v2817, %v2821
    %v2823 = vadd.f32 1.0, %v2822
    %v2824 = vmul.f32 %v2815, %v2815
    %v2825 = vmul.f32 %v2824, -0.00019511016
    %v2826 = vadd.f32 %v2825, 0.008332121
    %v2827 = vmul.f32 %v2824, %v2826
    %v2828 = vadd.f32 %v2827, -0.16666654
    %v2829 = vmul.f32 %v2824, %v2828
    %v2830 = vadd.f32 %v2829, 1.0
    %v2831 = vmul.f32 %v2830, %v2815
    %vm2832 = vweird.f32 %v462
    %v2833 = vand.u32 %v2816, 3
    %vm2834 = vcmp.lt.s32.totalorder %v2833, 2
    %vm2835 = vcmp.eq.s32.totalorder %v2833, 0
    %v2836 = vxor.u32 %v2831, 2147483648
    %v2837 = vsel %vm2835, %v2823, %v2836
    %vm2838 = vcmp.eq.s32.totalorder %v2833, 2
    %v2839 = vxor.u32 %v2823, 2147483648
    %v2840 = vsel %vm2838, %v2839, %v2831
    %v2841 = vsel %vm2834, %v2837, %v2840
    %v2842 = vsel %vm2832, nan, %v2841
    %v2843 = vand.u32 2147483647, %v511
    %vm2844 = vcmp.le.f32.partialorder %v2843, 0.7853982
    %vm2845 = vcmp.lt.s32.totalorder %v511, 0
    %v2846 = vand.u32 %v511, 2139095040
    %v2847 = vshrl.u32 %v2846, 23
    %v2848 = vsub.s32 %v2847, 127
    %v2849 = vand.u32 2147483647, %v511
    %v2850 = vand.u32 %v2849, 8388607
    %v2851 = vor.u32 %v2850, 8388608
    %v2852 = vsub.s32 0, %v2851
    %v2853 = vadd.s32 %v2848, 1
    %vm2854 = vcmp.gt.s32.totalorder %v2853, 0
    %v2855 = vsel %vm2854, %v2853, 0
    %v2856 = vshrl.u32 %v2855, 5
    %v2857 = vand.u32 %v2855, 31
    %v2858 = vsub.s32 32, %v2857
    %v2859 = vshrl.u32 683565275, %v2858
    %v2860 = vshll.u32 683565275, %v2857
    %v2861 = vshrl.u32 2475754826, %v2858
    %v2862 = vor.u32 %v2860, %v2861
    %v2863 = vshll.u32 2475754826, %v2857
    %v2864 = vshrl.u32 2131351028, %v2858
    %v2865 = vor.u32 %v2863, %v2864
    %v2866 = vshll.u32 2131351028, %v2857
    %v2867 = vshrl.u32 2102212464, %v2858
    %v2868 = vor.u32 %v2866, %v2867
    %v2869 = vshll.u32 2102212464, %v2857
    %v2870 = vshrl.u32 920167782, %v2858
    %v2871 = vor.u32 %v2869, %v2870
    %v2872 = vshll.u32 920167782, %v2857
    %v2873 = vshrl.u32 1326507024, %v2858
    %v2874 = vor.u32 %v2872, %v2873
    %vm2875 = vcmp.lt.s32.totalorder %v2856, 1
    %vm2876 = vcmp.lt.s32.totalorder %v2856, 2
    %vm2877 = vcmp.lt.s32.totalorder %v2856, 3
    %vm2878 = vcmp.lt.s32.totalorder %v2856, 4
    %v2879 = vsel %vm2875, %v2859, %v2862
    %v2880 = vsel %vm2878, %v2868, 2102212464
    %v2881 = vsel %vm2877, %v2865, %v2880
    %v2882 = vsel %vm2876, %v2879, %v2881
    %v2883 = vsel %vm2875, %v2862, %v2865
    %v2884 = vsel %vm2878, %v2871, 920167782
    %v2885 = vsel %vm2877, %v2868, %v2884
    %v2886 = vsel %vm2876, %v2883, %v2885
    %v2887 = vsel %vm2875, %v2865, %v2868
    %v2888 = vsel %vm2878, %v2874, 1326507024
    %v2889 = vsel %vm2877, %v2871, %v2888
    %v2890 = vsel %vm2876, %v2887, %v2889
    %v2891 = vshll.u32 %v2851, 8
    %v2892 = vand.u32 %v2891, 65535
    %v2893 = vshrl.u32 %v2891, 16
    %v2894 = vand.u32 %v2890, 65535
    %v2895 = vshrl.u32 %v2890, 16
    %v2896 = vmul.u32 %v2892, %v2894
    %v2897 = vmul.u32 %v2892, %v2895
    %v2898 = vmul.u32 %v2893, %v2894
    %v2899 = vmul.u32 %v2893, %v2895
    %v2900 = vshll.u32 %v2897, 16
    %v2901 = vshrl.u32 %v2897, 16
    %v2902 = vshll.u32 %v2898, 16
    %v2903 = vshrl.u32 %v2898, 16
    %vm2904 = vc.u32 %v2896, %v2900
    %v2905 = vsel %vm2904, 1, 0
    %v2906 = vadd.s32 %v2896, %v2900
    %v2907 = vadd.s32 %v2899, %v2905
    %vm2908 = vc.u32 %v2906, %v2902
    %v2909 = vsel %vm2908, 1, 0
    %v2910 = vadd.s32 %v2906, %v2902
    %v2911 = vadd.s32 %v2907, %v2909
    %v2912 = vadd.s32 %v2911, %v2901
    %v2913 = vadd.s32 %v2912, %v2903
    %v2914 = vand.u32 %v2891, 65535
    %v2915 = vshrl.u32 %v2891, 16
    %v2916 = vand.u32 %v2886, 65535
    %v2917 = vshrl.u32 %v2886, 16
    %v2918 = vmul.u32 %v2914, %v2916
    %v2919 = vmul.u32 %v2914, %v2917
    %v2920 = vmul.u32 %v2915, %v2916
    %v2921 = vmul.u32 %v2915, %v2917
    %v2922 = vshll.u32 %v2919, 16
    %v2923 = vshrl.u32 %v2919, 16
    %v2924 = vshll.u32 %v2920, 16
    %v2925 = vshrl.u32 %v2920, 16
    %vm2926 = vc.u32 %v2918, %v2922
    %v2927 = vsel %vm2926, 1, 0
    %v2928 = vadd.s32 %v2918, %v2922
    %v2929 = vadd.s32 %v2921, %v2927
    %vm2930 = vc.u32 %v2928, %v2924
    %v2931 = vsel %vm2930, 1, 0
    %v2932 = vadd.s32 %v2928, %v2924
    %v2933 = vadd.s32 %v2929, %v2931
    %v2934 = vadd.s32 %v2933, %v2923
    %v2935 = vadd.s32 %v2934, %v2925
    %v2936 = vmul.u32 %v2891, %v2882
    %v2937 = vadd.s32 %v2913, %v2932
    %vm2938 = vc.u32 %v2913, %v2932
    %v2939 = vadd.s32 %v2935, 1
    %v2940 = vsel %vm2938, %v2939, %v2935
    %v2941 = vadd.s32 %v2936, %v2940
    %v2942 = vadd.s32 %v2941, 536870912
    %v2943 = vshrl.u32 %v2942, 30
    %v2944 = vshll.u32 %v2943, 30
    %v2945 = vsub.s32 %v2941, %v2944
    %vm2946 = vcmp.lt.s32.totalorder %v2945, 0
    %v2947 = vsub.s32 0, %v2945
    %v2948 = vsel %vm2946, %v2947, %v2945
    %v2949 = vclz %v2948
    %v2950 = vsub.s32 %v2949, 2
    %vm2951 = vcmp.gt.s32.totalorder 0, %v2950
    %v2952 = vsel %vm2951, 0, %v2950
    %v2953 = vsub.s32 32, %v2952
    %v2954 = vshll.u32 %v2945, %v2952
    %v2955 = vshrl.u32 %v2937, %v2953
    %v2956 = vor.u32 %v2954, %v2955
    %v2957 = vsub.s32 4294967266, %v2952
    %v2958 = vadd.s32 %v2957, 127
    %v2959 = vshll.u32 %v2958, 23
    %v2960 = vor.u32 4788187, %v2959
    %v2961 = vand.u32 2147483647, %v2960
    %v2963 = vcvt.s32.f32 %v2956
    %v2964 = vmul.f32 %v2963, %v2961
    %v2965 = vxor.u32 %v2964, 2147483648
    %v2966 = vsel %vm2845, %v2965, %v2964
    %v2967 = vsub.s32 4, %v2943
    %v2968 = vsel %vm2845, %v2967, %v2943
    %v2969 = vsel %vm2844, %v511, %v2966
    %v2970 = vsel %vm2844, 0, %v2968
    %v2971 = vmul.f32 %v2969, %v2969
    %v2972 = vmul.f32 %v2971, -0.001358992
    %v2973 = vadd.f32 %v2972, 0.041655596
    %v2974 = vmul.f32 %v2971, %v2973
    %v2975 = vadd.f32 %v2974, -0.4999988
    %v2976 = vmul.f32 %v2971, %v2975
    %v2977 = vadd.f32 1.0, %v2976
    %v2978 = vmul.f32 %v2969, %v2969
    %v2979 = vmul.f32 %v2978, -0.00019511016
    %v2980 = vadd.f32 %v2979, 0.008332121
    %v2981 = vmul.f32 %v2978, %v2980
    %v2982 = vadd.f32 %v2981, -0.16666654
    %v2983 = vmul.f32 %v2978, %v2982
    %v2984 = vadd.f32 %v2983, 1.0
    %v2985 = vmul.f32 %v2984, %v2969
    %vm2986 = vweird.f32 %v511
    %v2987 = vand.u32 %v2970, 3
    %vm2988 = vcmp.lt.s32.totalorder %v2987, 2
    %vm2989 = vcmp.eq.s32.totalorder %v2987, 0
    %v2990 = vxor.u32 %v2985, 2147483648
    %v2991 = vsel %vm2989, %v2977, %v2990
    %vm2992 = vcmp.eq.s32.totalorder %v2987, 2
    %v2993 = vxor.u32 %v2977, 2147483648
    %v2994 = vsel %vm2992, %v2993, %v2985
    %v2995 = vsel %vm2988, %v2991, %v2994
    %v2996 = vsel %vm2986, nan, %v2995
    %v2997 = vand.u32 2147483647, %v465
    %vm2998 = vcmp.le.f32.partialorder %v2997, 0.7853982
    %vm2999 = vcmp.lt.s32.totalorder %v465, 0
    %v3000 = vand.u32 %v465, 2139095040
    %v3001 = vshrl.u32 %v3000, 23
    %v3002 = vsub.s32 %v3001, 127
    %v3003 = vand.u32 2147483647, %v465
    %v3004 = vand.u32 %v3003, 8388607
    %v3005 = vor.u32 %v3004, 8388608
    %v3006 = vsub.s32 0, %v3005
    %v3007 = vadd.s32 %v3002, 1
    %vm3008 = vcmp.gt.s32.totalorder %v3007, 0
    %v3009 = vsel %vm3008, %v3007, 0
    %v3010 = vshrl.u32 %v3009, 5
    %v3011 = vand.u32 %v3009, 31
    %v3012 = vsub.s32 32, %v3011
    %v3013 = vshrl.u32 683565275, %v3012
    %v3014 = vshll.u32 683565275, %v3011
    %v3015 = vshrl.u32 2475754826, %v3012
    %v3016 = vor.u32 %v3014, %v3015
    %v3017 = vshll.u32 2475754826, %v3011
    %v3018 = vshrl.u32 2131351028, %v3012
    %v3019 = vor.u32 %v3017, %v3018
    %v3020 = vshll.u32 2131351028, %v3011
    %v3021 = vshrl.u32 2102212464, %v3012
    %v3022 = vor.u32 %v3020, %v3021
    %v3023 = vshll.u32 2102212464, %v3011
    %v3024 = vshrl.u32 920167782, %v3012
    %v3025 = vor.u32 %v3023, %v3024
    %v3026 = vshll.u32 920167782, %v3011
    %v3027 = vshrl.u32 1326507024, %v3012
    %v3028 = vor.u32 %v3026, %v3027
    %vm3029 = vcmp.lt.s32.totalorder %v3010, 1
    %vm3030 = vcmp.lt.s32.totalorder %v3010, 2
    %vm3031 = vcmp.lt.s32.totalorder %v3010, 3
    %vm3032 = vcmp.lt.s32.totalorder %v3010, 4
    %v3033 = vsel %vm3029, %v3013, %v3016
    %v3034 = vsel %vm3032, %v3022, 2102212464
    %v3035 = vsel %vm3031, %v3019, %v3034
    %v3036 = vsel %vm3030, %v3033, %v3035
    %v3037 = vsel %vm3029, %v3016, %v3019
    %v3038 = vsel %vm3032, %v3025, 920167782
    %v3039 = vsel %vm3031, %v3022, %v3038
    %v3040 = vsel %vm3030, %v3037, %v3039
    %v3041 = vsel %vm3029, %v3019, %v3022
    %v3042 = vsel %vm3032, %v3028, 1326507024
    %v3043 = vsel %vm3031, %v3025, %v3042
    %v3044 = vsel %vm3030, %v3041, %v3043
    %v3045 = vshll.u32 %v3005, 8
    %v3046 = vand.u32 %v3045, 65535
    %v3047 = vshrl.u32 %v3045, 16
    %v3048 = vand.u32 %v3044, 65535
    %v3049 = vshrl.u32 %v3044, 16
    %v3050 = vmul.u32 %v3046, %v3048
    %v3051 = vmul.u32 %v3046, %v3049
    %v3052 = vmul.u32 %v3047, %v3048
    %v3053 = vmul.u32 %v3047, %v3049
    %v3054 = vshll.u32 %v3051, 16
    %v3055 = vshrl.u32 %v3051, 16
    %v3056 = vshll.u32 %v3052, 16
    %v3057 = vshrl.u32 %v3052, 16
    %vm3058 = vc.u32 %v3050, %v3054
    %v3059 = vsel %vm3058, 1, 0
    %v3060 = vadd.s32 %v3050, %v3054
    %v3061 = vadd.s32 %v3053, %v3059
    %vm3062 = vc.u32 %v3060, %v3056
    %v3063 = vsel %vm3062, 1, 0
    %v3064 = vadd.s32 %v3060, %v3056
    %v3065 = vadd.s32 %v3061, %v3063
    %v3066 = vadd.s32 %v3065, %v3055
    %v3067 = vadd.s32 %v3066, %v3057
    %v3068 = vand.u32 %v3045, 65535
    %v3069 = vshrl.u32 %v3045, 16
    %v3070 = vand.u32 %v3040, 65535
    %v3071 = vshrl.u32 %v3040, 16
    %v3072 = vmul.u32 %v3068, %v3070
    %v3073 = vmul.u32 %v3068, %v3071
    %v3074 = vmul.u32 %v3069, %v3070
    %v3075 = vmul.u32 %v3069, %v3071
    %v3076 = vshll.u32 %v3073, 16
    %v3077 = vshrl.u32 %v3073, 16
    %v3078 = vshll.u32 %v3074, 16
    %v3079 = vshrl.u32 %v3074, 16
    %vm3080 = vc.u32 %v3072, %v3076
    %v3081 = vsel %vm3080, 1, 0
    %v3082 = vadd.s32 %v3072, %v3076
    %v3083 = vadd.s32 %v3075, %v3081
    %vm3084 = vc.u32 %v3082, %v3078
    %v3085 = vsel %vm3084, 1, 0
    %v3086 = vadd.s32 %v3082, %v3078
    %v3087 = vadd.s32 %v3083, %v3085
    %v3088 = vadd.s32 %v3087, %v3077
    %v3089 = vadd.s32 %v3088, %v3079
    %v3090 = vmul.u32 %v3045, %v3036
    %v3091 = vadd.s32 %v3067, %v3086
    %vm3092 = vc.u32 %v3067, %v3086
    %v3093 = vadd.s32 %v3089, 1
    %v3094 = vsel %vm3092, %v3093, %v3089
    %v3095 = vadd.s32 %v3090, %v3094
    %v3096 = vadd.s32 %v3095, 536870912
    %v3097 = vshrl.u32 %v3096, 30
    %v3098 = vshll.u32 %v3097, 30
    %v3099 = vsub.s32 %v3095, %v3098
    %vm3100 = vcmp.lt.s32.totalorder %v3099, 0
    %v3101 = vsub.s32 0, %v3099
    %v3102 = vsel %vm3100, %v3101, %v3099
    %v3103 = vclz %v3102
    %v3104 = vsub.s32 %v3103, 2
    %vm3105 = vcmp.gt.s32.totalorder 0, %v3104
    %v3106 = vsel %vm3105, 0, %v3104
    %v3107 = vsub.s32 32, %v3106
    %v3108 = vshll.u32 %v3099, %v3106
    %v3109 = vshrl.u32 %v3091, %v3107
    %v3110 = vor.u32 %v3108, %v3109
    %v3111 = vsub.s32 4294967266, %v3106
    %v3112 = vadd.s32 %v3111, 127
    %v3113 = vshll.u32 %v3112, 23
    %v3114 = vor.u32 4788187, %v3113
    %v3115 = vand.u32 2147483647, %v3114
    %v3117 = vcvt.s32.f32 %v3110
    %v3118 = vmul.f32 %v3117, %v3115
    %v3119 = vxor.u32 %v3118, 2147483648
    %v3120 = vsel %vm2999, %v3119, %v3118
    %v3121 = vsub.s32 4, %v3097
    %v3122 = vsel %vm2999, %v3121, %v3097
    %v3123 = vsel %vm2998, %v465, %v3120
    %v3124 = vsel %vm2998, 0, %v3122
    %v3125 = vmul.f32 %v3123, %v3123
    %v3126 = vmul.f32 %v3125, -0.001358992
    %v3127 = vadd.f32 %v3126, 0.041655596
    %v3128 = vmul.f32 %v3125, %v3127
    %v3129 = vadd.f32 %v3128, -0.4999988
    %v3130 = vmul.f32 %v3125, %v3129
    %v3131 = vadd.f32 1.0, %v3130
    %v3132 = vmul.f32 %v3123, %v3123
    %v3133 = vmul.f32 %v3132, -0.00019511016
    %v3134 = vadd.f32 %v3133, 0.008332121
    %v3135 = vmul.f32 %v3132, %v3134
    %v3136 = vadd.f32 %v3135, -0.16666654
    %v3137 = vmul.f32 %v3132, %v3136
    %v3138 = vadd.f32 %v3137, 1.0
    %v3139 = vmul.f32 %v3138, %v3123
    %vm3140 = vweird.f32 %v465
    %v3141 = vand.u32 %v3124, 3
    %vm3142 = vcmp.lt.s32.totalorder %v3141, 2
    %vm3143 = vcmp.eq.s32.totalorder %v3141, 0
    %v3144 = vxor.u32 %v3139, 2147483648
    %v3145 = vsel %vm3143, %v3131, %v3144
    %vm3146 = vcmp.eq.s32.totalorder %v3141, 2
    %v3147 = vxor.u32 %v3131, 2147483648
    %v3148 = vsel %vm3146, %v3147, %v3139
    %v3149 = vsel %vm3142, %v3145, %v3148
    %v3150 = vsel %vm3140, nan, %v3149
    %v3151 = vand.u32 2147483647, %v514
    %vm3152 = vcmp.le.f32.partialorder %v3151, 0.7853982
    %vm3153 = vcmp.lt.s32.totalorder %v514, 0
    %v3154 = vand.u32 %v514, 2139095040
    %v3155 = vshrl.u32 %v3154, 23
    %v3156 = vsub.s32 %v3155, 127
    %v3157 = vand.u32 2147483647, %v514
    %v3158 = vand.u32 %v3157, 8388607
    %v3159 = vor.u32 %v3158, 8388608
    %v3160 = vsub.s32 0, %v3159
    %v3161 = vadd.s32 %v3156, 1
    %vm3162 = vcmp.gt.s32.totalorder %v3161, 0
    %v3163 = vsel %vm3162, %v3161, 0
    %v3164 = vshrl.u32 %v3163, 5
    %v3165 = vand.u32 %v3163, 31
    %v3166 = vsub.s32 32, %v3165
    %v3167 = vshrl.u32 683565275, %v3166
    %v3168 = vshll.u32 683565275, %v3165
    %v3169 = vshrl.u32 2475754826, %v3166
    %v3170 = vor.u32 %v3168, %v3169
    %v3171 = vshll.u32 2475754826, %v3165
    %v3172 = vshrl.u32 2131351028, %v3166
    %v3173 = vor.u32 %v3171, %v3172
    %v3174 = vshll.u32 2131351028, %v3165
    %v3175 = vshrl.u32 2102212464, %v3166
    %v3176 = vor.u32 %v3174, %v3175
    %v3177 = vshll.u32 2102212464, %v3165
    %v3178 = vshrl.u32 920167782, %v3166
    %v3179 = vor.u32 %v3177, %v3178
    %v3180 = vshll.u32 920167782, %v3165
    %v3181 = vshrl.u32 1326507024, %v3166
    %v3182 = vor.u32 %v3180, %v3181
    %vm3183 = vcmp.lt.s32.totalorder %v3164, 1
    %vm3184 = vcmp.lt.s32.totalorder %v3164, 2
    %vm3185 = vcmp.lt.s32.totalorder %v3164, 3
    %vm3186 = vcmp.lt.s32.totalorder %v3164, 4
    %v3187 = vsel %vm3183, %v3167, %v3170
    %v3188 = vsel %vm3186, %v3176, 2102212464
    %v3189 = vsel %vm3185, %v3173, %v3188
    %v3190 = vsel %vm3184, %v3187, %v3189
    %v3191 = vsel %vm3183, %v3170, %v3173
    %v3192 = vsel %vm3186, %v3179, 920167782
    %v3193 = vsel %vm3185, %v3176, %v3192
    %v3194 = vsel %vm3184, %v3191, %v3193
    %v3195 = vsel %vm3183, %v3173, %v3176
    %v3196 = vsel %vm3186, %v3182, 1326507024
    %v3197 = vsel %vm3185, %v3179, %v3196
    %v3198 = vsel %vm3184, %v3195, %v3197
    %v3199 = vshll.u32 %v3159, 8
    %v3200 = vand.u32 %v3199, 65535
    %v3201 = vshrl.u32 %v3199, 16
    %v3202 = vand.u32 %v3198, 65535
    %v3203 = vshrl.u32 %v3198, 16
    %v3204 = vmul.u32 %v3200, %v3202
    %v3205 = vmul.u32 %v3200, %v3203
    %v3206 = vmul.u32 %v3201, %v3202
    %v3207 = vmul.u32 %v3201, %v3203
    %v3208 = vshll.u32 %v3205, 16
    %v3209 = vshrl.u32 %v3205, 16
    %v3210 = vshll.u32 %v3206, 16
    %v3211 = vshrl.u32 %v3206, 16
    %vm3212 = vc.u32 %v3204, %v3208
    %v3213 = vsel %vm3212, 1, 0
    %v3214 = vadd.s32 %v3204, %v3208
    %v3215 = vadd.s32 %v3207, %v3213
    %vm3216 = vc.u32 %v3214, %v3210
    %v3217 = vsel %vm3216, 1, 0
    %v3218 = vadd.s32 %v3214, %v3210
    %v3219 = vadd.s32 %v3215, %v3217
    %v3220 = vadd.s32 %v3219, %v3209
    %v3221 = vadd.s32 %v3220, %v3211
    %v3222 = vand.u32 %v3199, 65535
    %v3223 = vshrl.u32 %v3199, 16
    %v3224 = vand.u32 %v3194, 65535
    %v3225 = vshrl.u32 %v3194, 16
    %v3226 = vmul.u32 %v3222, %v3224
    %v3227 = vmul.u32 %v3222, %v3225
    %v3228 = vmul.u32 %v3223, %v3224
    %v3229 = vmul.u32 %v3223, %v3225
    %v3230 = vshll.u32 %v3227, 16
    %v3231 = vshrl.u32 %v3227, 16
    %v3232 = vshll.u32 %v3228, 16
    %v3233 = vshrl.u32 %v3228, 16
    %vm3234 = vc.u32 %v3226, %v3230
    %v3235 = vsel %vm3234, 1, 0
    %v3236 = vadd.s32 %v3226, %v3230
    %v3237 = vadd.s32 %v3229, %v3235
    %vm3238 = vc.u32 %v3236, %v3232
    %v3239 = vsel %vm3238, 1, 0
    %v3240 = vadd.s32 %v3236, %v3232
    %v3241 = vadd.s32 %v3237, %v3239
    %v3242 = vadd.s32 %v3241, %v3231
    %v3243 = vadd.s32 %v3242, %v3233
    %v3244 = vmul.u32 %v3199, %v3190
    %v3245 = vadd.s32 %v3221, %v3240
    %vm3246 = vc.u32 %v3221, %v3240
    %v3247 = vadd.s32 %v3243, 1
    %v3248 = vsel %vm3246, %v3247, %v3243
    %v3249 = vadd.s32 %v3244, %v3248
    %v3250 = vadd.s32 %v3249, 536870912
    %v3251 = vshrl.u32 %v3250, 30
    %v3252 = vshll.u32 %v3251, 30
    %v3253 = vsub.s32 %v3249, %v3252
    %vm3254 = vcmp.lt.s32.totalorder %v3253, 0
    %v3255 = vsub.s32 0, %v3253
    %v3256 = vsel %vm3254, %v3255, %v3253
    %v3257 = vclz %v3256
    %v3258 = vsub.s32 %v3257, 2
    %vm3259 = vcmp.gt.s32.totalorder 0, %v3258
    %v3260 = vsel %vm3259, 0, %v3258
    %v3261 = vsub.s32 32, %v3260
    %v3262 = vshll.u32 %v3253, %v3260
    %v3263 = vshrl.u32 %v3245, %v3261
    %v3264 = vor.u32 %v3262, %v3263
    %v3265 = vsub.s32 4294967266, %v3260
    %v3266 = vadd.s32 %v3265, 127
    %v3267 = vshll.u32 %v3266, 23
    %v3268 = vor.u32 4788187, %v3267
    %v3269 = vand.u32 2147483647, %v3268
    %v3271 = vcvt.s32.f32 %v3264
    %v3272 = vmul.f32 %v3271, %v3269
    %v3273 = vxor.u32 %v3272, 2147483648
    %v3274 = vsel %vm3153, %v3273, %v3272
    %v3275 = vsub.s32 4, %v3251
    %v3276 = vsel %vm3153, %v3275, %v3251
    %v3277 = vsel %vm3152, %v514, %v3274
    %v3278 = vsel %vm3152, 0, %v3276
    %v3279 = vmul.f32 %v3277, %v3277
    %v3280 = vmul.f32 %v3279, -0.001358992
    %v3281 = vadd.f32 %v3280, 0.041655596
    %v3282 = vmul.f32 %v3279, %v3281
    %v3283 = vadd.f32 %v3282, -0.4999988
    %v3284 = vmul.f32 %v3279, %v3283
    %v3285 = vadd.f32 1.0, %v3284
    %v3286 = vmul.f32 %v3277, %v3277
    %v3287 = vmul.f32 %v3286, -0.00019511016
    %v3288 = vadd.f32 %v3287, 0.008332121
    %v3289 = vmul.f32 %v3286, %v3288
    %v3290 = vadd.f32 %v3289, -0.16666654
    %v3291 = vmul.f32 %v3286, %v3290
    %v3292 = vadd.f32 %v3291, 1.0
    %v3293 = vmul.f32 %v3292, %v3277
    %vm3294 = vweird.f32 %v514
    %v3295 = vand.u32 %v3278, 3
    %vm3296 = vcmp.lt.s32.totalorder %v3295, 2
    %vm3297 = vcmp.eq.s32.totalorder %v3295, 0
    %v3298 = vxor.u32 %v3293, 2147483648
    %v3299 = vsel %vm3297, %v3285, %v3298
    %vm3300 = vcmp.eq.s32.totalorder %v3295, 2
    %v3301 = vxor.u32 %v3285, 2147483648
    %v3302 = vsel %vm3300, %v3301, %v3293
    %v3303 = vsel %vm3296, %v3299, %v3302
    %v3304 = vsel %vm3294, nan, %v3303
    %v3305 = vand.u32 2147483647, %v467
    %vm3306 = vcmp.le.f32.partialorder %v3305, 0.7853982
    %vm3307 = vcmp.lt.s32.totalorder %v467, 0
    %v3308 = vand.u32 %v467, 2139095040
    %v3309 = vshrl.u32 %v3308, 23
    %v3310 = vsub.s32 %v3309, 127
    %v3311 = vand.u32 2147483647, %v467
    %v3312 = vand.u32 %v3311, 8388607
    %v3313 = vor.u32 %v3312, 8388608
    %v3314 = vsub.s32 0, %v3313
    %v3315 = vadd.s32 %v3310, 1
    %vm3316 = vcmp.gt.s32.totalorder %v3315, 0
    %v3317 = vsel %vm3316, %v3315, 0
    %v3318 = vshrl.u32 %v3317, 5
    %v3319 = vand.u32 %v3317, 31
    %v3320 = vsub.s32 32, %v3319
    %v3321 = vshrl.u32 683565275, %v3320
    %v3322 = vshll.u32 683565275, %v3319
    %v3323 = vshrl.u32 2475754826, %v3320
    %v3324 = vor.u32 %v3322, %v3323
    %v3325 = vshll.u32 2475754826, %v3319
    %v3326 = vshrl.u32 2131351028, %v3320
    %v3327 = vor.u32 %v3325, %v3326
    %v3328 = vshll.u32 2131351028, %v3319
    %v3329 = vshrl.u32 2102212464, %v3320
    %v3330 = vor.u32 %v3328, %v3329
    %v3331 = vshll.u32 2102212464, %v3319
    %v3332 = vshrl.u32 920167782, %v3320
    %v3333 = vor.u32 %v3331, %v3332
    %v3334 = vshll.u32 920167782, %v3319
    %v3335 = vshrl.u32 1326507024, %v3320
    %v3336 = vor.u32 %v3334, %v3335
    %vm3337 = vcmp.lt.s32.totalorder %v3318, 1
    %vm3338 = vcmp.lt.s32.totalorder %v3318, 2
    %vm3339 = vcmp.lt.s32.totalorder %v3318, 3
    %vm3340 = vcmp.lt.s32.totalorder %v3318, 4
    %v3341 = vsel %vm3337, %v3321, %v3324
    %v3342 = vsel %vm3340, %v3330, 2102212464
    %v3343 = vsel %vm3339, %v3327, %v3342
    %v3344 = vsel %vm3338, %v3341, %v3343
    %v3345 = vsel %vm3337, %v3324, %v3327
    %v3346 = vsel %vm3340, %v3333, 920167782
    %v3347 = vsel %vm3339, %v3330, %v3346
    %v3348 = vsel %vm3338, %v3345, %v3347
    %v3349 = vsel %vm3337, %v3327, %v3330
    %v3350 = vsel %vm3340, %v3336, 1326507024
    %v3351 = vsel %vm3339, %v3333, %v3350
    %v3352 = vsel %vm3338, %v3349, %v3351
    %v3353 = vshll.u32 %v3313, 8
    %v3354 = vand.u32 %v3353, 65535
    %v3355 = vshrl.u32 %v3353, 16
    %v3356 = vand.u32 %v3352, 65535
    %v3357 = vshrl.u32 %v3352, 16
    %v3358 = vmul.u32 %v3354, %v3356
    %v3359 = vmul.u32 %v3354, %v3357
    %v3360 = vmul.u32 %v3355, %v3356
    %v3361 = vmul.u32 %v3355, %v3357
    %v3362 = vshll.u32 %v3359, 16
    %v3363 = vshrl.u32 %v3359, 16
    %v3364 = vshll.u32 %v3360, 16
    %v3365 = vshrl.u32 %v3360, 16
    %vm3366 = vc.u32 %v3358, %v3362
    %v3367 = vsel %vm3366, 1, 0
    %v3368 = vadd.s32 %v3358, %v3362
    %v3369 = vadd.s32 %v3361, %v3367
    %vm3370 = vc.u32 %v3368, %v3364
    %v3371 = vsel %vm3370, 1, 0
    %v3372 = vadd.s32 %v3368, %v3364
    %v3373 = vadd.s32 %v3369, %v3371
    %v3374 = vadd.s32 %v3373, %v3363
    %v3375 = vadd.s32 %v3374, %v3365
    %v3376 = vand.u32 %v3353, 65535
    %v3377 = vshrl.u32 %v3353, 16
    %v3378 = vand.u32 %v3348, 65535
    %v3379 = vshrl.u32 %v3348, 16
    %v3380 = vmul.u32 %v3376, %v3378
    %v3381 = vmul.u32 %v3376, %v3379
    %v3382 = vmul.u32 %v3377, %v3378
    %v3383 = vmul.u32 %v3377, %v3379
    %v3384 = vshll.u32 %v3381, 16
    %v3385 = vshrl.u32 %v3381, 16
    %v3386 = vshll.u32 %v3382, 16
    %v3387 = vshrl.u32 %v3382, 16
    %vm3388 = vc.u32 %v3380, %v3384
    %v3389 = vsel %vm3388, 1, 0
    %v3390 = vadd.s32 %v3380, %v3384
    %v3391 = vadd.s32 %v3383, %v3389
    %vm3392 = vc.u32 %v3390, %v3386
    %v3393 = vsel %vm3392, 1, 0
    %v3394 = vadd.s32 %v3390, %v3386
    %v3395 = vadd.s32 %v3391, %v3393
    %v3396 = vadd.s32 %v3395, %v3385
    %v3397 = vadd.s32 %v3396, %v3387
    %v3398 = vmul.u32 %v3353, %v3344
    %v3399 = vadd.s32 %v3375, %v3394
    %vm3400 = vc.u32 %v3375, %v3394
    %v3401 = vadd.s32 %v3397, 1
    %v3402 = vsel %vm3400, %v3401, %v3397
    %v3403 = vadd.s32 %v3398, %v3402
    %v3404 = vadd.s32 %v3403, 536870912
    %v3405 = vshrl.u32 %v3404, 30
    %v3406 = vshll.u32 %v3405, 30
    %v3407 = vsub.s32 %v3403, %v3406
    %vm3408 = vcmp.lt.s32.totalorder %v3407, 0
    %v3409 = vsub.s32 0, %v3407
    %v3410 = vsel %vm3408, %v3409, %v3407
    %v3411 = vclz %v3410
    %v3412 = vsub.s32 %v3411, 2
    %vm3413 = vcmp.gt.s32.totalorder 0, %v3412
    %v3414 = vsel %vm3413, 0, %v3412
    %v3415 = vsub.s32 32, %v3414
    %v3416 = vshll.u32 %v3407, %v3414
    %v3417 = vshrl.u32 %v3399, %v3415
    %v3418 = vor.u32 %v3416, %v3417
    %v3419 = vsub.s32 4294967266, %v3414
    %v3420 = vadd.s32 %v3419, 127
    %v3421 = vshll.u32 %v3420, 23
    %v3422 = vor.u32 4788187, %v3421
    %v3423 = vand.u32 2147483647, %v3422
    %v3425 = vcvt.s32.f32 %v3418
    %v3426 = vmul.f32 %v3425, %v3423
    %v3427 = vxor.u32 %v3426, 2147483648
    %v3428 = vsel %vm3307, %v3427, %v3426
    %v3429 = vsub.s32 4, %v3405
    %v3430 = vsel %vm3307, %v3429, %v3405
    %v3431 = vsel %vm3306, %v467, %v3428
    %v3432 = vsel %vm3306, 0, %v3430
    %v3433 = vmul.f32 %v3431, %v3431
    %v3434 = vmul.f32 %v3433, -0.001358992
    %v3435 = vadd.f32 %v3434, 0.041655596
    %v3436 = vmul.f32 %v3433, %v3435
    %v3437 = vadd.f32 %v3436, -0.4999988
    %v3438 = vmul.f32 %v3433, %v3437
    %v3439 = vadd.f32 1.0, %v3438
    %v3440 = vmul.f32 %v3431, %v3431
    %v3441 = vmul.f32 %v3440, -0.00019511016
    %v3442 = vadd.f32 %v3441, 0.008332121
    %v3443 = vmul.f32 %v3440, %v3442
    %v3444 = vadd.f32 %v3443, -0.16666654
    %v3445 = vmul.f32 %v3440, %v3444
    %v3446 = vadd.f32 %v3445, 1.0
    %v3447 = vmul.f32 %v3446, %v3431
    %vm3448 = vweird.f32 %v467
    %v3449 = vand.u32 %v3432, 3
    %vm3450 = vcmp.lt.s32.totalorder %v3449, 2
    %vm3451 = vcmp.eq.s32.totalorder %v3449, 0
    %v3452 = vxor.u32 %v3447, 2147483648
    %v3453 = vsel %vm3451, %v3439, %v3452
    %vm3454 = vcmp.eq.s32.totalorder %v3449, 2
    %v3455 = vxor.u32 %v3439, 2147483648
    %v3456 = vsel %vm3454, %v3455, %v3447
    %v3457 = vsel %vm3450, %v3453, %v3456
    %v3458 = vsel %vm3448, nan, %v3457
    %v3459 = vand.u32 2147483647, %v516
    %vm3460 = vcmp.le.f32.partialorder %v3459, 0.7853982
    %vm3461 = vcmp.lt.s32.totalorder %v516, 0
    %v3462 = vand.u32 %v516, 2139095040
    %v3463 = vshrl.u32 %v3462, 23
    %v3464 = vsub.s32 %v3463, 127
    %v3465 = vand.u32 2147483647, %v516
    %v3466 = vand.u32 %v3465, 8388607
    %v3467 = vor.u32 %v3466, 8388608
    %v3468 = vsub.s32 0, %v3467
    %v3469 = vadd.s32 %v3464, 1
    %vm3470 = vcmp.gt.s32.totalorder %v3469, 0
    %v3471 = vsel %vm3470, %v3469, 0
    %v3472 = vshrl.u32 %v3471, 5
    %v3473 = vand.u32 %v3471, 31
    %v3474 = vsub.s32 32, %v3473
    %v3475 = vshrl.u32 683565275, %v3474
    %v3476 = vshll.u32 683565275, %v3473
    %v3477 = vshrl.u32 2475754826, %v3474
    %v3478 = vor.u32 %v3476, %v3477
    %v3479 = vshll.u32 2475754826, %v3473
    %v3480 = vshrl.u32 2131351028, %v3474
    %v3481 = vor.u32 %v3479, %v3480
    %v3482 = vshll.u32 2131351028, %v3473
    %v3483 = vshrl.u32 2102212464, %v3474
    %v3484 = vor.u32 %v3482, %v3483
    %v3485 = vshll.u32 2102212464, %v3473
    %v3486 = vshrl.u32 920167782, %v3474
    %v3487 = vor.u32 %v3485, %v3486
    %v3488 = vshll.u32 920167782, %v3473
    %v3489 = vshrl.u32 1326507024, %v3474
    %v3490 = vor.u32 %v3488, %v3489
    %vm3491 = vcmp.lt.s32.totalorder %v3472, 1
    %vm3492 = vcmp.lt.s32.totalorder %v3472, 2
    %vm3493 = vcmp.lt.s32.totalorder %v3472, 3
    %vm3494 = vcmp.lt.s32.totalorder %v3472, 4
    %v3495 = vsel %vm3491, %v3475, %v3478
    %v3496 = vsel %vm3494, %v3484, 2102212464
    %v3497 = vsel %vm3493, %v3481, %v3496
    %v3498 = vsel %vm3492, %v3495, %v3497
    %v3499 = vsel %vm3491, %v3478, %v3481
    %v3500 = vsel %vm3494, %v3487, 920167782
    %v3501 = vsel %vm3493, %v3484, %v3500
    %v3502 = vsel %vm3492, %v3499, %v3501
    %v3503 = vsel %vm3491, %v3481, %v3484
    %v3504 = vsel %vm3494, %v3490, 1326507024
    %v3505 = vsel %vm3493, %v3487, %v3504
    %v3506 = vsel %vm3492, %v3503, %v3505
    %v3507 = vshll.u32 %v3467, 8
    %v3508 = vand.u32 %v3507, 65535
    %v3509 = vshrl.u32 %v3507, 16
    %v3510 = vand.u32 %v3506, 65535
    %v3511 = vshrl.u32 %v3506, 16
    %v3512 = vmul.u32 %v3508, %v3510
    %v3513 = vmul.u32 %v3508, %v3511
    %v3514 = vmul.u32 %v3509, %v3510
    %v3515 = vmul.u32 %v3509, %v3511
    %v3516 = vshll.u32 %v3513, 16
    %v3517 = vshrl.u32 %v3513, 16
    %v3518 = vshll.u32 %v3514, 16
    %v3519 = vshrl.u32 %v3514, 16
    %vm3520 = vc.u32 %v3512, %v3516
    %v3521 = vsel %vm3520, 1, 0
    %v3522 = vadd.s32 %v3512, %v3516
    %v3523 = vadd.s32 %v3515, %v3521
    %vm3524 = vc.u32 %v3522, %v3518
    %v3525 = vsel %vm3524, 1, 0
    %v3526 = vadd.s32 %v3522, %v3518
    %v3527 = vadd.s32 %v3523, %v3525
    %v3528 = vadd.s32 %v3527, %v3517
    %v3529 = vadd.s32 %v3528, %v3519
    %v3530 = vand.u32 %v3507, 65535
    %v3531 = vshrl.u32 %v3507, 16
    %v3532 = vand.u32 %v3502, 65535
    %v3533 = vshrl.u32 %v3502, 16
    %v3534 = vmul.u32 %v3530, %v3532
    %v3535 = vmul.u32 %v3530, %v3533
    %v3536 = vmul.u32 %v3531, %v3532
    %v3537 = vmul.u32 %v3531, %v3533
    %v3538 = vshll.u32 %v3535, 16
    %v3539 = vshrl.u32 %v3535, 16
    %v3540 = vshll.u32 %v3536, 16
    %v3541 = vshrl.u32 %v3536, 16
    %vm3542 = vc.u32 %v3534, %v3538
    %v3543 = vsel %vm3542, 1, 0
    %v3544 = vadd.s32 %v3534, %v3538
    %v3545 = vadd.s32 %v3537, %v3543
    %vm3546 = vc.u32 %v3544, %v3540
    %v3547 = vsel %vm3546, 1, 0
    %v3548 = vadd.s32 %v3544, %v3540
    %v3549 = vadd.s32 %v3545, %v3547
    %v3550 = vadd.s32 %v3549, %v3539
    %v3551 = vadd.s32 %v3550, %v3541
    %v3552 = vmul.u32 %v3507, %v3498
    %v3553 = vadd.s32 %v3529, %v3548
    %vm3554 = vc.u32 %v3529, %v3548
    %v3555 = vadd.s32 %v3551, 1
    %v3556 = vsel %vm3554, %v3555, %v3551
    %v3557 = vadd.s32 %v3552, %v3556
    %v3558 = vadd.s32 %v3557, 536870912
    %v3559 = vshrl.u32 %v3558, 30
    %v3560 = vshll.u32 %v3559, 30
    %v3561 = vsub.s32 %v3557, %v3560
    %vm3562 = vcmp.lt.s32.totalorder %v3561, 0
    %v3563 = vsub.s32 0, %v3561
    %v3564 = vsel %vm3562, %v3563, %v3561
    %v3565 = vclz %v3564
    %v3566 = vsub.s32 %v3565, 2
    %vm3567 = vcmp.gt.s32.totalorder 0, %v3566
    %v3568 = vsel %vm3567, 0, %v3566
    %v3569 = vsub.s32 32, %v3568
    %v3570 = vshll.u32 %v3561, %v3568
    %v3571 = vshrl.u32 %v3553, %v3569
    %v3572 = vor.u32 %v3570, %v3571
    %v3573 = vsub.s32 4294967266, %v3568
    %v3574 = vadd.s32 %v3573, 127
    %v3575 = vshll.u32 %v3574, 23
    %v3576 = vor.u32 4788187, %v3575
    %v3577 = vand.u32 2147483647, %v3576
    %v3579 = vcvt.s32.f32 %v3572
    %v3580 = vmul.f32 %v3579, %v3577
    %v3581 = vxor.u32 %v3580, 2147483648
    %v3582 = vsel %vm3461, %v3581, %v3580
    %v3583 = vsub.s32 4, %v3559
    %v3584 = vsel %vm3461, %v3583, %v3559
    %v3585 = vsel %vm3460, %v516, %v3582
    %v3586 = vsel %vm3460, 0, %v3584
    %v3587 = vmul.f32 %v3585, %v3585
    %v3588 = vmul.f32 %v3587, -0.001358992
    %v3589 = vadd.f32 %v3588, 0.041655596
    %v3590 = vmul.f32 %v3587, %v3589
    %v3591 = vadd.f32 %v3590, -0.4999988
    %v3592 = vmul.f32 %v3587, %v3591
    %v3593 = vadd.f32 1.0, %v3592
    %v3594 = vmul.f32 %v3585, %v3585
    %v3595 = vmul.f32 %v3594, -0.00019511016
    %v3596 = vadd.f32 %v3595, 0.008332121
    %v3597 = vmul.f32 %v3594, %v3596
    %v3598 = vadd.f32 %v3597, -0.16666654
    %v3599 = vmul.f32 %v3594, %v3598
    %v3600 = vadd.f32 %v3599, 1.0
    %v3601 = vmul.f32 %v3600, %v3585
    %vm3602 = vweird.f32 %v516
    %v3603 = vand.u32 %v3586, 3
    %vm3604 = vcmp.lt.s32.totalorder %v3603, 2
    %vm3605 = vcmp.eq.s32.totalorder %v3603, 0
    %v3606 = vxor.u32 %v3601, 2147483648
    %v3607 = vsel %vm3605, %v3593, %v3606
    %vm3608 = vcmp.eq.s32.totalorder %v3603, 2
    %v3609 = vxor.u32 %v3593, 2147483648
    %v3610 = vsel %vm3608, %v3609, %v3601
    %v3611 = vsel %vm3604, %v3607, %v3610
    %v3612 = vsel %vm3602, nan, %v3611
    %v3613 = vand.u32 2147483647, %v470
    %vm3614 = vcmp.le.f32.partialorder %v3613, 0.7853982
    %vm3615 = vcmp.lt.s32.totalorder %v470, 0
    %v3616 = vand.u32 %v470, 2139095040
    %v3617 = vshrl.u32 %v3616, 23
    %v3618 = vsub.s32 %v3617, 127
    %v3619 = vand.u32 2147483647, %v470
    %v3620 = vand.u32 %v3619, 8388607
    %v3621 = vor.u32 %v3620, 8388608
    %v3622 = vsub.s32 0, %v3621
    %v3623 = vadd.s32 %v3618, 1
    %vm3624 = vcmp.gt.s32.totalorder %v3623, 0
    %v3625 = vsel %vm3624, %v3623, 0
    %v3626 = vshrl.u32 %v3625, 5
    %v3627 = vand.u32 %v3625, 31
    %v3628 = vsub.s32 32, %v3627
    %v3629 = vshrl.u32 683565275, %v3628
    %v3630 = vshll.u32 683565275, %v3627
    %v3631 = vshrl.u32 2475754826, %v3628
    %v3632 = vor.u32 %v3630, %v3631
    %v3633 = vshll.u32 2475754826, %v3627
    %v3634 = vshrl.u32 2131351028, %v3628
    %v3635 = vor.u32 %v3633, %v3634
    %v3636 = vshll.u32 2131351028, %v3627
    %v3637 = vshrl.u32 2102212464, %v3628
    %v3638 = vor.u32 %v3636, %v3637
    %v3639 = vshll.u32 2102212464, %v3627
    %v3640 = vshrl.u32 920167782, %v3628
    %v3641 = vor.u32 %v3639, %v3640
    %v3642 = vshll.u32 920167782, %v3627
    %v3643 = vshrl.u32 1326507024, %v3628
    %v3644 = vor.u32 %v3642, %v3643
    %vm3645 = vcmp.lt.s32.totalorder %v3626, 1
    %vm3646 = vcmp.lt.s32.totalorder %v3626, 2
    %vm3647 = vcmp.lt.s32.totalorder %v3626, 3
    %vm3648 = vcmp.lt.s32.totalorder %v3626, 4
    %v3649 = vsel %vm3645, %v3629, %v3632
    %v3650 = vsel %vm3648, %v3638, 2102212464
    %v3651 = vsel %vm3647, %v3635, %v3650
    %v3652 = vsel %vm3646, %v3649, %v3651
    %v3653 = vsel %vm3645, %v3632, %v3635
    %v3654 = vsel %vm3648, %v3641, 920167782
    %v3655 = vsel %vm3647, %v3638, %v3654
    %v3656 = vsel %vm3646, %v3653, %v3655
    %v3657 = vsel %vm3645, %v3635, %v3638
    %v3658 = vsel %vm3648, %v3644, 1326507024
    %v3659 = vsel %vm3647, %v3641, %v3658
    %v3660 = vsel %vm3646, %v3657, %v3659
    %v3661 = vshll.u32 %v3621, 8
    %v3662 = vand.u32 %v3661, 65535
    %v3663 = vshrl.u32 %v3661, 16
    %v3664 = vand.u32 %v3660, 65535
    %v3665 = vshrl.u32 %v3660, 16
    %v3666 = vmul.u32 %v3662, %v3664
    %v3667 = vmul.u32 %v3662, %v3665
    %v3668 = vmul.u32 %v3663, %v3664
    %v3669 = vmul.u32 %v3663, %v3665
    %v3670 = vshll.u32 %v3667, 16
    %v3671 = vshrl.u32 %v3667, 16
    %v3672 = vshll.u32 %v3668, 16
    %v3673 = vshrl.u32 %v3668, 16
    %vm3674 = vc.u32 %v3666, %v3670
    %v3675 = vsel %vm3674, 1, 0
    %v3676 = vadd.s32 %v3666, %v3670
    %v3677 = vadd.s32 %v3669, %v3675
    %vm3678 = vc.u32 %v3676, %v3672
    %v3679 = vsel %vm3678, 1, 0
    %v3680 = vadd.s32 %v3676, %v3672
    %v3681 = vadd.s32 %v3677, %v3679
    %v3682 = vadd.s32 %v3681, %v3671
    %v3683 = vadd.s32 %v3682, %v3673
    %v3684 = vand.u32 %v3661, 65535
    %v3685 = vshrl.u32 %v3661, 16
    %v3686 = vand.u32 %v3656, 65535
    %v3687 = vshrl.u32 %v3656, 16
    %v3688 = vmul.u32 %v3684, %v3686
    %v3689 = vmul.u32 %v3684, %v3687
    %v3690 = vmul.u32 %v3685, %v3686
    %v3691 = vmul.u32 %v3685, %v3687
    %v3692 = vshll.u32 %v3689, 16
    %v3693 = vshrl.u32 %v3689, 16
    %v3694 = vshll.u32 %v3690, 16
    %v3695 = vshrl.u32 %v3690, 16
    %vm3696 = vc.u32 %v3688, %v3692
    %v3697 = vsel %vm3696, 1, 0
    %v3698 = vadd.s32 %v3688, %v3692
    %v3699 = vadd.s32 %v3691, %v3697
    %vm3700 = vc.u32 %v3698, %v3694
    %v3701 = vsel %vm3700, 1, 0
    %v3702 = vadd.s32 %v3698, %v3694
    %v3703 = vadd.s32 %v3699, %v3701
    %v3704 = vadd.s32 %v3703, %v3693
    %v3705 = vadd.s32 %v3704, %v3695
    %v3706 = vmul.u32 %v3661, %v3652
    %v3707 = vadd.s32 %v3683, %v3702
    %vm3708 = vc.u32 %v3683, %v3702
    %v3709 = vadd.s32 %v3705, 1
    %v3710 = vsel %vm3708, %v3709, %v3705
    %v3711 = vadd.s32 %v3706, %v3710
    %v3712 = vadd.s32 %v3711, 536870912
    %v3713 = vshrl.u32 %v3712, 30
    %v3714 = vshll.u32 %v3713, 30
    %v3715 = vsub.s32 %v3711, %v3714
    %vm3716 = vcmp.lt.s32.totalorder %v3715, 0
    %v3717 = vsub.s32 0, %v3715
    %v3718 = vsel %vm3716, %v3717, %v3715
    %v3719 = vclz %v3718
    %v3720 = vsub.s32 %v3719, 2
    %vm3721 = vcmp.gt.s32.totalorder 0, %v3720
    %v3722 = vsel %vm3721, 0, %v3720
    %v3723 = vsub.s32 32, %v3722
    %v3724 = vshll.u32 %v3715, %v3722
    %v3725 = vshrl.u32 %v3707, %v3723
    %v3726 = vor.u32 %v3724, %v3725
    %v3727 = vsub.s32 4294967266, %v3722
    %v3728 = vadd.s32 %v3727, 127
    %v3729 = vshll.u32 %v3728, 23
    %v3730 = vor.u32 4788187, %v3729
    %v3731 = vand.u32 2147483647, %v3730
    %v3733 = vcvt.s32.f32 %v3726
    %v3734 = vmul.f32 %v3733, %v3731
    %v3735 = vxor.u32 %v3734, 2147483648
    %v3736 = vsel %vm3615, %v3735, %v3734
    %v3737 = vsub.s32 4, %v3713
    %v3738 = vsel %vm3615, %v3737, %v3713
    %v3739 = vsel %vm3614, %v470, %v3736
    %v3740 = vsel %vm3614, 0, %v3738
    %v3741 = vmul.f32 %v3739, %v3739
    %v3742 = vmul.f32 %v3741, -0.001358992
    %v3743 = vadd.f32 %v3742, 0.041655596
    %v3744 = vmul.f32 %v3741, %v3743
    %v3745 = vadd.f32 %v3744, -0.4999988
    %v3746 = vmul.f32 %v3741, %v3745
    %v3747 = vadd.f32 1.0, %v3746
    %v3748 = vmul.f32 %v3739, %v3739
    %v3749 = vmul.f32 %v3748, -0.00019511016
    %v3750 = vadd.f32 %v3749, 0.008332121
    %v3751 = vmul.f32 %v3748, %v3750
    %v3752 = vadd.f32 %v3751, -0.16666654
    %v3753 = vmul.f32 %v3748, %v3752
    %v3754 = vadd.f32 %v3753, 1.0
    %v3755 = vmul.f32 %v3754, %v3739
    %vm3756 = vweird.f32 %v470
    %v3757 = vand.u32 %v3740, 3
    %vm3758 = vcmp.lt.s32.totalorder %v3757, 2
    %vm3759 = vcmp.eq.s32.totalorder %v3757, 0
    %v3760 = vxor.u32 %v3755, 2147483648
    %v3761 = vsel %vm3759, %v3747, %v3760
    %vm3762 = vcmp.eq.s32.totalorder %v3757, 2
    %v3763 = vxor.u32 %v3747, 2147483648
    %v3764 = vsel %vm3762, %v3763, %v3755
    %v3765 = vsel %vm3758, %v3761, %v3764
    %v3766 = vsel %vm3756, nan, %v3765
    %v3767 = vand.u32 2147483647, %v519
    %vm3768 = vcmp.le.f32.partialorder %v3767, 0.7853982
    %vm3769 = vcmp.lt.s32.totalorder %v519, 0
    %v3770 = vand.u32 %v519, 2139095040
    %v3771 = vshrl.u32 %v3770, 23
    %v3772 = vsub.s32 %v3771, 127
    %v3773 = vand.u32 2147483647, %v519
    %v3774 = vand.u32 %v3773, 8388607
    %v3775 = vor.u32 %v3774, 8388608
    %v3776 = vsub.s32 0, %v3775
    %v3777 = vadd.s32 %v3772, 1
    %vm3778 = vcmp.gt.s32.totalorder %v3777, 0
    %v3779 = vsel %vm3778, %v3777, 0
    %v3780 = vshrl.u32 %v3779, 5
    %v3781 = vand.u32 %v3779, 31
    %v3782 = vsub.s32 32, %v3781
    %v3783 = vshrl.u32 683565275, %v3782
    %v3784 = vshll.u32 683565275, %v3781
    %v3785 = vshrl.u32 2475754826, %v3782
    %v3786 = vor.u32 %v3784, %v3785
    %v3787 = vshll.u32 2475754826, %v3781
    %v3788 = vshrl.u32 2131351028, %v3782
    %v3789 = vor.u32 %v3787, %v3788
    %v3790 = vshll.u32 2131351028, %v3781
    %v3791 = vshrl.u32 2102212464, %v3782
    %v3792 = vor.u32 %v3790, %v3791
    %v3793 = vshll.u32 2102212464, %v3781
    %v3794 = vshrl.u32 920167782, %v3782
    %v3795 = vor.u32 %v3793, %v3794
    %v3796 = vshll.u32 920167782, %v3781
    %v3797 = vshrl.u32 1326507024, %v3782
    %v3798 = vor.u32 %v3796, %v3797
    %vm3799 = vcmp.lt.s32.totalorder %v3780, 1
    %vm3800 = vcmp.lt.s32.totalorder %v3780, 2
    %vm3801 = vcmp.lt.s32.totalorder %v3780, 3
    %vm3802 = vcmp.lt.s32.totalorder %v3780, 4
    %v3803 = vsel %vm3799, %v3783, %v3786
    %v3804 = vsel %vm3802, %v3792, 2102212464
    %v3805 = vsel %vm3801, %v3789, %v3804
    %v3806 = vsel %vm3800, %v3803, %v3805
    %v3807 = vsel %vm3799, %v3786, %v3789
    %v3808 = vsel %vm3802, %v3795, 920167782
    %v3809 = vsel %vm3801, %v3792, %v3808
    %v3810 = vsel %vm3800, %v3807, %v3809
    %v3811 = vsel %vm3799, %v3789, %v3792
    %v3812 = vsel %vm3802, %v3798, 1326507024
    %v3813 = vsel %vm3801, %v3795, %v3812
    %v3814 = vsel %vm3800, %v3811, %v3813
    %v3815 = vshll.u32 %v3775, 8
    %v3816 = vand.u32 %v3815, 65535
    %v3817 = vshrl.u32 %v3815, 16
    %v3818 = vand.u32 %v3814, 65535
    %v3819 = vshrl.u32 %v3814, 16
    %v3820 = vmul.u32 %v3816, %v3818
    %v3821 = vmul.u32 %v3816, %v3819
    %v3822 = vmul.u32 %v3817, %v3818
    %v3823 = vmul.u32 %v3817, %v3819
    %v3824 = vshll.u32 %v3821, 16
    %v3825 = vshrl.u32 %v3821, 16
    %v3826 = vshll.u32 %v3822, 16
    %v3827 = vshrl.u32 %v3822, 16
    %vm3828 = vc.u32 %v3820, %v3824
    %v3829 = vsel %vm3828, 1, 0
    %v3830 = vadd.s32 %v3820, %v3824
    %v3831 = vadd.s32 %v3823, %v3829
    %vm3832 = vc.u32 %v3830, %v3826
    %v3833 = vsel %vm3832, 1, 0
    %v3834 = vadd.s32 %v3830, %v3826
    %v3835 = vadd.s32 %v3831, %v3833
    %v3836 = vadd.s32 %v3835, %v3825
    %v3837 = vadd.s32 %v3836, %v3827
    %v3838 = vand.u32 %v3815, 65535
    %v3839 = vshrl.u32 %v3815, 16
    %v3840 = vand.u32 %v3810, 65535
    %v3841 = vshrl.u32 %v3810, 16
    %v3842 = vmul.u32 %v3838, %v3840
    %v3843 = vmul.u32 %v3838, %v3841
    %v3844 = vmul.u32 %v3839, %v3840
    %v3845 = vmul.u32 %v3839, %v3841
    %v3846 = vshll.u32 %v3843, 16
    %v3847 = vshrl.u32 %v3843, 16
    %v3848 = vshll.u32 %v3844, 16
    %v3849 = vshrl.u32 %v3844, 16
    %vm3850 = vc.u32 %v3842, %v3846
    %v3851 = vsel %vm3850, 1, 0
    %v3852 = vadd.s32 %v3842, %v3846
    %v3853 = vadd.s32 %v3845, %v3851
    %vm3854 = vc.u32 %v3852, %v3848
    %v3855 = vsel %vm3854, 1, 0
    %v3856 = vadd.s32 %v3852, %v3848
    %v3857 = vadd.s32 %v3853, %v3855
    %v3858 = vadd.s32 %v3857, %v3847
    %v3859 = vadd.s32 %v3858, %v3849
    %v3860 = vmul.u32 %v3815, %v3806
    %v3861 = vadd.s32 %v3837, %v3856
    %vm3862 = vc.u32 %v3837, %v3856
    %v3863 = vadd.s32 %v3859, 1
    %v3864 = vsel %vm3862, %v3863, %v3859
    %v3865 = vadd.s32 %v3860, %v3864
    %v3866 = vadd.s32 %v3865, 536870912
    %v3867 = vshrl.u32 %v3866, 30
    %v3868 = vshll.u32 %v3867, 30
    %v3869 = vsub.s32 %v3865, %v3868
    %vm3870 = vcmp.lt.s32.totalorder %v3869, 0
    %v3871 = vsub.s32 0, %v3869
    %v3872 = vsel %vm3870, %v3871, %v3869
    %v3873 = vclz %v3872
    %v3874 = vsub.s32 %v3873, 2
    %vm3875 = vcmp.gt.s32.totalorder 0, %v3874
    %v3876 = vsel %vm3875, 0, %v3874
    %v3877 = vsub.s32 32, %v3876
    %v3878 = vshll.u32 %v3869, %v3876
    %v3879 = vshrl.u32 %v3861, %v3877
    %v3880 = vor.u32 %v3878, %v3879
    %v3881 = vsub.s32 4294967266, %v3876
    %v3882 = vadd.s32 %v3881, 127
    %v3883 = vshll.u32 %v3882, 23
    %v3884 = vor.u32 4788187, %v3883
    %v3885 = vand.u32 2147483647, %v3884
    %v3887 = vcvt.s32.f32 %v3880
    %v3888 = vmul.f32 %v3887, %v3885
    %v3889 = vxor.u32 %v3888, 2147483648
    %v3890 = vsel %vm3769, %v3889, %v3888
    %v3891 = vsub.s32 4, %v3867
    %v3892 = vsel %vm3769, %v3891, %v3867
    %v3893 = vsel %vm3768, %v519, %v3890
    %v3894 = vsel %vm3768, 0, %v3892
    %v3895 = vmul.f32 %v3893, %v3893
    %v3896 = vmul.f32 %v3895, -0.001358992
    %v3897 = vadd.f32 %v3896, 0.041655596
    %v3898 = vmul.f32 %v3895, %v3897
    %v3899 = vadd.f32 %v3898, -0.4999988
    %v3900 = vmul.f32 %v3895, %v3899
    %v3901 = vadd.f32 1.0, %v3900
    %v3902 = vmul.f32 %v3893, %v3893
    %v3903 = vmul.f32 %v3902, -0.00019511016
    %v3904 = vadd.f32 %v3903, 0.008332121
    %v3905 = vmul.f32 %v3902, %v3904
    %v3906 = vadd.f32 %v3905, -0.16666654
    %v3907 = vmul.f32 %v3902, %v3906
    %v3908 = vadd.f32 %v3907, 1.0
    %v3909 = vmul.f32 %v3908, %v3893
    %vm3910 = vweird.f32 %v519
    %v3911 = vand.u32 %v3894, 3
    %vm3912 = vcmp.lt.s32.totalorder %v3911, 2
    %vm3913 = vcmp.eq.s32.totalorder %v3911, 0
    %v3914 = vxor.u32 %v3909, 2147483648
    %v3915 = vsel %vm3913, %v3901, %v3914
    %vm3916 = vcmp.eq.s32.totalorder %v3911, 2
    %v3917 = vxor.u32 %v3901, 2147483648
    %v3918 = vsel %vm3916, %v3917, %v3909
    %v3919 = vsel %vm3912, %v3915, %v3918
    %v3920 = vsel %vm3910, nan, %v3919
    %v3921 = vand.u32 2147483647, %v472
    %vm3922 = vcmp.le.f32.partialorder %v3921, 0.7853982
    %vm3923 = vcmp.lt.s32.totalorder %v472, 0
    %v3924 = vand.u32 %v472, 2139095040
    %v3925 = vshrl.u32 %v3924, 23
    %v3926 = vsub.s32 %v3925, 127
    %v3927 = vand.u32 2147483647, %v472
    %v3928 = vand.u32 %v3927, 8388607
    %v3929 = vor.u32 %v3928, 8388608
    %v3930 = vsub.s32 0, %v3929
    %v3931 = vadd.s32 %v3926, 1
    %vm3932 = vcmp.gt.s32.totalorder %v3931, 0
    %v3933 = vsel %vm3932, %v3931, 0
    %v3934 = vshrl.u32 %v3933, 5
    %v3935 = vand.u32 %v3933, 31
    %v3936 = vsub.s32 32, %v3935
    %v3937 = vshrl.u32 683565275, %v3936
    %v3938 = vshll.u32 683565275, %v3935
    %v3939 = vshrl.u32 2475754826, %v3936
    %v3940 = vor.u32 %v3938, %v3939
    %v3941 = vshll.u32 2475754826, %v3935
    %v3942 = vshrl.u32 2131351028, %v3936
    %v3943 = vor.u32 %v3941, %v3942
    %v3944 = vshll.u32 2131351028, %v3935
    %v3945 = vshrl.u32 2102212464, %v3936
    %v3946 = vor.u32 %v3944, %v3945
    %v3947 = vshll.u32 2102212464, %v3935
    %v3948 = vshrl.u32 920167782, %v3936
    %v3949 = vor.u32 %v3947, %v3948
    %v3950 = vshll.u32 920167782, %v3935
    %v3951 = vshrl.u32 1326507024, %v3936
    %v3952 = vor.u32 %v3950, %v3951
    %vm3953 = vcmp.lt.s32.totalorder %v3934, 1
    %vm3954 = vcmp.lt.s32.totalorder %v3934, 2
    %vm3955 = vcmp.lt.s32.totalorder %v3934, 3
    %vm3956 = vcmp.lt.s32.totalorder %v3934, 4
    %v3957 = vsel %vm3953, %v3937, %v3940
    %v3958 = vsel %vm3956, %v3946, 2102212464
    %v3959 = vsel %vm3955, %v3943, %v3958
    %v3960 = vsel %vm3954, %v3957, %v3959
    %v3961 = vsel %vm3953, %v3940, %v3943
    %v3962 = vsel %vm3956, %v3949, 920167782
    %v3963 = vsel %vm3955, %v3946, %v3962
    %v3964 = vsel %vm3954, %v3961, %v3963
    %v3965 = vsel %vm3953, %v3943, %v3946
    %v3966 = vsel %vm3956, %v3952, 1326507024
    %v3967 = vsel %vm3955, %v3949, %v3966
    %v3968 = vsel %vm3954, %v3965, %v3967
    %v3969 = vshll.u32 %v3929, 8
    %v3970 = vand.u32 %v3969, 65535
    %v3971 = vshrl.u32 %v3969, 16
    %v3972 = vand.u32 %v3968, 65535
    %v3973 = vshrl.u32 %v3968, 16
    %v3974 = vmul.u32 %v3970, %v3972
    %v3975 = vmul.u32 %v3970, %v3973
    %v3976 = vmul.u32 %v3971, %v3972
    %v3977 = vmul.u32 %v3971, %v3973
    %v3978 = vshll.u32 %v3975, 16
    %v3979 = vshrl.u32 %v3975, 16
    %v3980 = vshll.u32 %v3976, 16
    %v3981 = vshrl.u32 %v3976, 16
    %vm3982 = vc.u32 %v3974, %v3978
    %v3983 = vsel %vm3982, 1, 0
    %v3984 = vadd.s32 %v3974, %v3978
    %v3985 = vadd.s32 %v3977, %v3983
    %vm3986 = vc.u32 %v3984, %v3980
    %v3987 = vsel %vm3986, 1, 0
    %v3988 = vadd.s32 %v3984, %v3980
    %v3989 = vadd.s32 %v3985, %v3987
    %v3990 = vadd.s32 %v3989, %v3979
    %v3991 = vadd.s32 %v3990, %v3981
    %v3992 = vand.u32 %v3969, 65535
    %v3993 = vshrl.u32 %v3969, 16
    %v3994 = vand.u32 %v3964, 65535
    %v3995 = vshrl.u32 %v3964, 16
    %v3996 = vmul.u32 %v3992, %v3994
    %v3997 = vmul.u32 %v3992, %v3995
    %v3998 = vmul.u32 %v3993, %v3994
    %v3999 = vmul.u32 %v3993, %v3995
    %v4000 = vshll.u32 %v3997, 16
    %v4001 = vshrl.u32 %v3997, 16
    %v4002 = vshll.u32 %v3998, 16
    %v4003 = vshrl.u32 %v3998, 16
    %vm4004 = vc.u32 %v3996, %v4000
    %v4005 = vsel %vm4004, 1, 0
    %v4006 = vadd.s32 %v3996, %v4000
    %v4007 = vadd.s32 %v3999, %v4005
    %vm4008 = vc.u32 %v4006, %v4002
    %v4009 = vsel %vm4008, 1, 0
    %v4010 = vadd.s32 %v4006, %v4002
    %v4011 = vadd.s32 %v4007, %v4009
    %v4012 = vadd.s32 %v4011, %v4001
    %v4013 = vadd.s32 %v4012, %v4003
    %v4014 = vmul.u32 %v3969, %v3960
    %v4015 = vadd.s32 %v3991, %v4010
    %vm4016 = vc.u32 %v3991, %v4010
    %v4017 = vadd.s32 %v4013, 1
    %v4018 = vsel %vm4016, %v4017, %v4013
    %v4019 = vadd.s32 %v4014, %v4018
    %v4020 = vadd.s32 %v4019, 536870912
    %v4021 = vshrl.u32 %v4020, 30
    %v4022 = vshll.u32 %v4021, 30
    %v4023 = vsub.s32 %v4019, %v4022
    %vm4024 = vcmp.lt.s32.totalorder %v4023, 0
    %v4025 = vsub.s32 0, %v4023
    %v4026 = vsel %vm4024, %v4025, %v4023
    %v4027 = vclz %v4026
    %v4028 = vsub.s32 %v4027, 2
    %vm4029 = vcmp.gt.s32.totalorder 0, %v4028
    %v4030 = vsel %vm4029, 0, %v4028
    %v4031 = vsub.s32 32, %v4030
    %v4032 = vshll.u32 %v4023, %v4030
    %v4033 = vshrl.u32 %v4015, %v4031
    %v4034 = vor.u32 %v4032, %v4033
    %v4035 = vsub.s32 4294967266, %v4030
    %v4036 = vadd.s32 %v4035, 127
    %v4037 = vshll.u32 %v4036, 23
    %v4038 = vor.u32 4788187, %v4037
    %v4039 = vand.u32 2147483647, %v4038
    %v4041 = vcvt.s32.f32 %v4034
    %v4042 = vmul.f32 %v4041, %v4039
    %v4043 = vxor.u32 %v4042, 2147483648
    %v4044 = vsel %vm3923, %v4043, %v4042
    %v4045 = vsub.s32 4, %v4021
    %v4046 = vsel %vm3923, %v4045, %v4021
    %v4047 = vsel %vm3922, %v472, %v4044
    %v4048 = vsel %vm3922, 0, %v4046
    %v4049 = vmul.f32 %v4047, %v4047
    %v4050 = vmul.f32 %v4049, -0.001358992
    %v4051 = vadd.f32 %v4050, 0.041655596
    %v4052 = vmul.f32 %v4049, %v4051
    %v4053 = vadd.f32 %v4052, -0.4999988
    %v4054 = vmul.f32 %v4049, %v4053
    %v4055 = vadd.f32 1.0, %v4054
    %v4056 = vmul.f32 %v4047, %v4047
    %v4057 = vmul.f32 %v4056, -0.00019511016
    %v4058 = vadd.f32 %v4057, 0.008332121
    %v4059 = vmul.f32 %v4056, %v4058
    %v4060 = vadd.f32 %v4059, -0.16666654
    %v4061 = vmul.f32 %v4056, %v4060
    %v4062 = vadd.f32 %v4061, 1.0
    %v4063 = vmul.f32 %v4062, %v4047
    %vm4064 = vweird.f32 %v472
    %v4065 = vand.u32 %v4048, 3
    %vm4066 = vcmp.lt.s32.totalorder %v4065, 2
    %vm4067 = vcmp.eq.s32.totalorder %v4065, 0
    %v4068 = vxor.u32 %v4063, 2147483648
    %v4069 = vsel %vm4067, %v4055, %v4068
    %vm4070 = vcmp.eq.s32.totalorder %v4065, 2
    %v4071 = vxor.u32 %v4055, 2147483648
    %v4072 = vsel %vm4070, %v4071, %v4063
    %v4073 = vsel %vm4066, %v4069, %v4072
    %v4074 = vsel %vm4064, nan, %v4073
    %v4075 = vand.u32 2147483647, %v521
    %vm4076 = vcmp.le.f32.partialorder %v4075, 0.7853982
    %vm4077 = vcmp.lt.s32.totalorder %v521, 0
    %v4078 = vand.u32 %v521, 2139095040
    %v4079 = vshrl.u32 %v4078, 23
    %v4080 = vsub.s32 %v4079, 127
    %v4081 = vand.u32 2147483647, %v521
    %v4082 = vand.u32 %v4081, 8388607
    %v4083 = vor.u32 %v4082, 8388608
    %v4084 = vsub.s32 0, %v4083
    %v4085 = vadd.s32 %v4080, 1
    %vm4086 = vcmp.gt.s32.totalorder %v4085, 0
    %v4087 = vsel %vm4086, %v4085, 0
    %v4088 = vshrl.u32 %v4087, 5
    %v4089 = vand.u32 %v4087, 31
    %v4090 = vsub.s32 32, %v4089
    %v4091 = vshrl.u32 683565275, %v4090
    %v4092 = vshll.u32 683565275, %v4089
    %v4093 = vshrl.u32 2475754826, %v4090
    %v4094 = vor.u32 %v4092, %v4093
    %v4095 = vshll.u32 2475754826, %v4089
    %v4096 = vshrl.u32 2131351028, %v4090
    %v4097 = vor.u32 %v4095, %v4096
    %v4098 = vshll.u32 2131351028, %v4089
    %v4099 = vshrl.u32 2102212464, %v4090
    %v4100 = vor.u32 %v4098, %v4099
    %v4101 = vshll.u32 2102212464, %v4089
    %v4102 = vshrl.u32 920167782, %v4090
    %v4103 = vor.u32 %v4101, %v4102
    %v4104 = vshll.u32 920167782, %v4089
    %v4105 = vshrl.u32 1326507024, %v4090
    %v4106 = vor.u32 %v4104, %v4105
    %vm4107 = vcmp.lt.s32.totalorder %v4088, 1
    %vm4108 = vcmp.lt.s32.totalorder %v4088, 2
    %vm4109 = vcmp.lt.s32.totalorder %v4088, 3
    %vm4110 = vcmp.lt.s32.totalorder %v4088, 4
    %v4111 = vsel %vm4107, %v4091, %v4094
    %v4112 = vsel %vm4110, %v4100, 2102212464
    %v4113 = vsel %vm4109, %v4097, %v4112
    %v4114 = vsel %vm4108, %v4111, %v4113
    %v4115 = vsel %vm4107, %v4094, %v4097
    %v4116 = vsel %vm4110, %v4103, 920167782
    %v4117 = vsel %vm4109, %v4100, %v4116
    %v4118 = vsel %vm4108, %v4115, %v4117
    %v4119 = vsel %vm4107, %v4097, %v4100
    %v4120 = vsel %vm4110, %v4106, 1326507024
    %v4121 = vsel %vm4109, %v4103, %v4120
    %v4122 = vsel %vm4108, %v4119, %v4121
    %v4123 = vshll.u32 %v4083, 8
    %v4124 = vand.u32 %v4123, 65535
    %v4125 = vshrl.u32 %v4123, 16
    %v4126 = vand.u32 %v4122, 65535
    %v4127 = vshrl.u32 %v4122, 16
    %v4128 = vmul.u32 %v4124, %v4126
    %v4129 = vmul.u32 %v4124, %v4127
    %v4130 = vmul.u32 %v4125, %v4126
    %v4131 = vmul.u32 %v4125, %v4127
    %v4132 = vshll.u32 %v4129, 16
    %v4133 = vshrl.u32 %v4129, 16
    %v4134 = vshll.u32 %v4130, 16
    %v4135 = vshrl.u32 %v4130, 16
    %vm4136 = vc.u32 %v4128, %v4132
    %v4137 = vsel %vm4136, 1, 0
    %v4138 = vadd.s32 %v4128, %v4132
    %v4139 = vadd.s32 %v4131, %v4137
    %vm4140 = vc.u32 %v4138, %v4134
    %v4141 = vsel %vm4140, 1, 0
    %v4142 = vadd.s32 %v4138, %v4134
    %v4143 = vadd.s32 %v4139, %v4141
    %v4144 = vadd.s32 %v4143, %v4133
    %v4145 = vadd.s32 %v4144, %v4135
    %v4146 = vand.u32 %v4123, 65535
    %v4147 = vshrl.u32 %v4123, 16
    %v4148 = vand.u32 %v4118, 65535
    %v4149 = vshrl.u32 %v4118, 16
    %v4150 = vmul.u32 %v4146, %v4148
    %v4151 = vmul.u32 %v4146, %v4149
    %v4152 = vmul.u32 %v4147, %v4148
    %v4153 = vmul.u32 %v4147, %v4149
    %v4154 = vshll.u32 %v4151, 16
    %v4155 = vshrl.u32 %v4151, 16
    %v4156 = vshll.u32 %v4152, 16
    %v4157 = vshrl.u32 %v4152, 16
    %vm4158 = vc.u32 %v4150, %v4154
    %v4159 = vsel %vm4158, 1, 0
    %v4160 = vadd.s32 %v4150, %v4154
    %v4161 = vadd.s32 %v4153, %v4159
    %vm4162 = vc.u32 %v4160, %v4156
    %v4163 = vsel %vm4162, 1, 0
    %v4164 = vadd.s32 %v4160, %v4156
    %v4165 = vadd.s32 %v4161, %v4163
    %v4166 = vadd.s32 %v4165, %v4155
    %v4167 = vadd.s32 %v4166, %v4157
    %v4168 = vmul.u32 %v4123, %v4114
    %v4169 = vadd.s32 %v4145, %v4164
    %vm4170 = vc.u32 %v4145, %v4164
    %v4171 = vadd.s32 %v4167, 1
    %v4172 = vsel %vm4170, %v4171, %v4167
    %v4173 = vadd.s32 %v4168, %v4172
    %v4174 = vadd.s32 %v4173, 536870912
    %v4175 = vshrl.u32 %v4174, 30
    %v4176 = vshll.u32 %v4175, 30
    %v4177 = vsub.s32 %v4173, %v4176
    %vm4178 = vcmp.lt.s32.totalorder %v4177, 0
    %v4179 = vsub.s32 0, %v4177
    %v4180 = vsel %vm4178, %v4179, %v4177
    %v4181 = vclz %v4180
    %v4182 = vsub.s32 %v4181, 2
    %vm4183 = vcmp.gt.s32.totalorder 0, %v4182
    %v4184 = vsel %vm4183, 0, %v4182
    %v4185 = vsub.s32 32, %v4184
    %v4186 = vshll.u32 %v4177, %v4184
    %v4187 = vshrl.u32 %v4169, %v4185
    %v4188 = vor.u32 %v4186, %v4187
    %v4189 = vsub.s32 4294967266, %v4184
    %v4190 = vadd.s32 %v4189, 127
    %v4191 = vshll.u32 %v4190, 23
    %v4192 = vor.u32 4788187, %v4191
    %v4193 = vand.u32 2147483647, %v4192
    %v4195 = vcvt.s32.f32 %v4188
    %v4196 = vmul.f32 %v4195, %v4193
    %v4197 = vxor.u32 %v4196, 2147483648
    %v4198 = vsel %vm4077, %v4197, %v4196
    %v4199 = vsub.s32 4, %v4175
    %v4200 = vsel %vm4077, %v4199, %v4175
    %v4201 = vsel %vm4076, %v521, %v4198
    %v4202 = vsel %vm4076, 0, %v4200
    %v4203 = vmul.f32 %v4201, %v4201
    %v4204 = vmul.f32 %v4203, -0.001358992
    %v4205 = vadd.f32 %v4204, 0.041655596
    %v4206 = vmul.f32 %v4203, %v4205
    %v4207 = vadd.f32 %v4206, -0.4999988
    %v4208 = vmul.f32 %v4203, %v4207
    %v4209 = vadd.f32 1.0, %v4208
    %v4210 = vmul.f32 %v4201, %v4201
    %v4211 = vmul.f32 %v4210, -0.00019511016
    %v4212 = vadd.f32 %v4211, 0.008332121
    %v4213 = vmul.f32 %v4210, %v4212
    %v4214 = vadd.f32 %v4213, -0.16666654
    %v4215 = vmul.f32 %v4210, %v4214
    %v4216 = vadd.f32 %v4215, 1.0
    %v4217 = vmul.f32 %v4216, %v4201
    %vm4218 = vweird.f32 %v521
    %v4219 = vand.u32 %v4202, 3
    %vm4220 = vcmp.lt.s32.totalorder %v4219, 2
    %vm4221 = vcmp.eq.s32.totalorder %v4219, 0
    %v4222 = vxor.u32 %v4217, 2147483648
    %v4223 = vsel %vm4221, %v4209, %v4222
    %vm4224 = vcmp.eq.s32.totalorder %v4219, 2
    %v4225 = vxor.u32 %v4209, 2147483648
    %v4226 = vsel %vm4224, %v4225, %v4217
    %v4227 = vsel %vm4220, %v4223, %v4226
    %v4228 = vsel %vm4218, nan, %v4227
    %v4229 = vand.u32 2147483647, %v475
    %vm4230 = vcmp.le.f32.partialorder %v4229, 0.7853982
    %vm4231 = vcmp.lt.s32.totalorder %v475, 0
    %v4232 = vand.u32 %v475, 2139095040
    %v4233 = vshrl.u32 %v4232, 23
    %v4234 = vsub.s32 %v4233, 127
    %v4235 = vand.u32 2147483647, %v475
    %v4236 = vand.u32 %v4235, 8388607
    %v4237 = vor.u32 %v4236, 8388608
    %v4238 = vsub.s32 0, %v4237
    %v4239 = vadd.s32 %v4234, 1
    %vm4240 = vcmp.gt.s32.totalorder %v4239, 0
    %v4241 = vsel %vm4240, %v4239, 0
    %v4242 = vshrl.u32 %v4241, 5
    %v4243 = vand.u32 %v4241, 31
    %v4244 = vsub.s32 32, %v4243
    %v4245 = vshrl.u32 683565275, %v4244
    %v4246 = vshll.u32 683565275, %v4243
    %v4247 = vshrl.u32 2475754826, %v4244
    %v4248 = vor.u32 %v4246, %v4247
    %v4249 = vshll.u32 2475754826, %v4243
    %v4250 = vshrl.u32 2131351028, %v4244
    %v4251 = vor.u32 %v4249, %v4250
    %v4252 = vshll.u32 2131351028, %v4243
    %v4253 = vshrl.u32 2102212464, %v4244
    %v4254 = vor.u32 %v4252, %v4253
    %v4255 = vshll.u32 2102212464, %v4243
    %v4256 = vshrl.u32 920167782, %v4244
    %v4257 = vor.u32 %v4255, %v4256
    %v4258 = vshll.u32 920167782, %v4243
    %v4259 = vshrl.u32 1326507024, %v4244
    %v4260 = vor.u32 %v4258, %v4259
    %vm4261 = vcmp.lt.s32.totalorder %v4242, 1
    %vm4262 = vcmp.lt.s32.totalorder %v4242, 2
    %vm4263 = vcmp.lt.s32.totalorder %v4242, 3
    %vm4264 = vcmp.lt.s32.totalorder %v4242, 4
    %v4265 = vsel %vm4261, %v4245, %v4248
    %v4266 = vsel %vm4264, %v4254, 2102212464
    %v4267 = vsel %vm4263, %v4251, %v4266
    %v4268 = vsel %vm4262, %v4265, %v4267
    %v4269 = vsel %vm4261, %v4248, %v4251
    %v4270 = vsel %vm4264, %v4257, 920167782
    %v4271 = vsel %vm4263, %v4254, %v4270
    %v4272 = vsel %vm4262, %v4269, %v4271
    %v4273 = vsel %vm4261, %v4251, %v4254
    %v4274 = vsel %vm4264, %v4260, 1326507024
    %v4275 = vsel %vm4263, %v4257, %v4274
    %v4276 = vsel %vm4262, %v4273, %v4275
    %v4277 = vshll.u32 %v4237, 8
    %v4278 = vand.u32 %v4277, 65535
    %v4279 = vshrl.u32 %v4277, 16
    %v4280 = vand.u32 %v4276, 65535
    %v4281 = vshrl.u32 %v4276, 16
    %v4282 = vmul.u32 %v4278, %v4280
    %v4283 = vmul.u32 %v4278, %v4281
    %v4284 = vmul.u32 %v4279, %v4280
    %v4285 = vmul.u32 %v4279, %v4281
    %v4286 = vshll.u32 %v4283, 16
    %v4287 = vshrl.u32 %v4283, 16
    %v4288 = vshll.u32 %v4284, 16
    %v4289 = vshrl.u32 %v4284, 16
    %vm4290 = vc.u32 %v4282, %v4286
    %v4291 = vsel %vm4290, 1, 0
    %v4292 = vadd.s32 %v4282, %v4286
    %v4293 = vadd.s32 %v4285, %v4291
    %vm4294 = vc.u32 %v4292, %v4288
    %v4295 = vsel %vm4294, 1, 0
    %v4296 = vadd.s32 %v4292, %v4288
    %v4297 = vadd.s32 %v4293, %v4295
    %v4298 = vadd.s32 %v4297, %v4287
    %v4299 = vadd.s32 %v4298, %v4289
    %v4300 = vand.u32 %v4277, 65535
    %v4301 = vshrl.u32 %v4277, 16
    %v4302 = vand.u32 %v4272, 65535
    %v4303 = vshrl.u32 %v4272, 16
    %v4304 = vmul.u32 %v4300, %v4302
    %v4305 = vmul.u32 %v4300, %v4303
    %v4306 = vmul.u32 %v4301, %v4302
    %v4307 = vmul.u32 %v4301, %v4303
    %v4308 = vshll.u32 %v4305, 16
    %v4309 = vshrl.u32 %v4305, 16
    %v4310 = vshll.u32 %v4306, 16
    %v4311 = vshrl.u32 %v4306, 16
    %vm4312 = vc.u32 %v4304, %v4308
    %v4313 = vsel %vm4312, 1, 0
    %v4314 = vadd.s32 %v4304, %v4308
    %v4315 = vadd.s32 %v4307, %v4313
    %vm4316 = vc.u32 %v4314, %v4310
    %v4317 = vsel %vm4316, 1, 0
    %v4318 = vadd.s32 %v4314, %v4310
    %v4319 = vadd.s32 %v4315, %v4317
    %v4320 = vadd.s32 %v4319, %v4309
    %v4321 = vadd.s32 %v4320, %v4311
    %v4322 = vmul.u32 %v4277, %v4268
    %v4323 = vadd.s32 %v4299, %v4318
    %vm4324 = vc.u32 %v4299, %v4318
    %v4325 = vadd.s32 %v4321, 1
    %v4326 = vsel %vm4324, %v4325, %v4321
    %v4327 = vadd.s32 %v4322, %v4326
    %v4328 = vadd.s32 %v4327, 536870912
    %v4329 = vshrl.u32 %v4328, 30
    %v4330 = vshll.u32 %v4329, 30
    %v4331 = vsub.s32 %v4327, %v4330
    %vm4332 = vcmp.lt.s32.totalorder %v4331, 0
    %v4333 = vsub.s32 0, %v4331
    %v4334 = vsel %vm4332, %v4333, %v4331
    %v4335 = vclz %v4334
    %v4336 = vsub.s32 %v4335, 2
    %vm4337 = vcmp.gt.s32.totalorder 0, %v4336
    %v4338 = vsel %vm4337, 0, %v4336
    %v4339 = vsub.s32 32, %v4338
    %v4340 = vshll.u32 %v4331, %v4338
    %v4341 = vshrl.u32 %v4323, %v4339
    %v4342 = vor.u32 %v4340, %v4341
    %v4343 = vsub.s32 4294967266, %v4338
    %v4344 = vadd.s32 %v4343, 127
    %v4345 = vshll.u32 %v4344, 23
    %v4346 = vor.u32 4788187, %v4345
    %v4347 = vand.u32 2147483647, %v4346
    %v4349 = vcvt.s32.f32 %v4342
    %v4350 = vmul.f32 %v4349, %v4347
    %v4351 = vxor.u32 %v4350, 2147483648
    %v4352 = vsel %vm4231, %v4351, %v4350
    %v4353 = vsub.s32 4, %v4329
    %v4354 = vsel %vm4231, %v4353, %v4329
    %v4355 = vsel %vm4230, %v475, %v4352
    %v4356 = vsel %vm4230, 0, %v4354
    %v4357 = vmul.f32 %v4355, %v4355
    %v4358 = vmul.f32 %v4357, -0.001358992
    %v4359 = vadd.f32 %v4358, 0.041655596
    %v4360 = vmul.f32 %v4357, %v4359
    %v4361 = vadd.f32 %v4360, -0.4999988
    %v4362 = vmul.f32 %v4357, %v4361
    %v4363 = vadd.f32 1.0, %v4362
    %v4364 = vmul.f32 %v4355, %v4355
    %v4365 = vmul.f32 %v4364, -0.00019511016
    %v4366 = vadd.f32 %v4365, 0.008332121
    %v4367 = vmul.f32 %v4364, %v4366
    %v4368 = vadd.f32 %v4367, -0.16666654
    %v4369 = vmul.f32 %v4364, %v4368
    %v4370 = vadd.f32 %v4369, 1.0
    %v4371 = vmul.f32 %v4370, %v4355
    %vm4372 = vweird.f32 %v475
    %v4373 = vand.u32 %v4356, 3
    %vm4374 = vcmp.lt.s32.totalorder %v4373, 2
    %vm4375 = vcmp.eq.s32.totalorder %v4373, 0
    %v4376 = vxor.u32 %v4371, 2147483648
    %v4377 = vsel %vm4375, %v4363, %v4376
    %vm4378 = vcmp.eq.s32.totalorder %v4373, 2
    %v4379 = vxor.u32 %v4363, 2147483648
    %v4380 = vsel %vm4378, %v4379, %v4371
    %v4381 = vsel %vm4374, %v4377, %v4380
    %v4382 = vsel %vm4372, nan, %v4381
    %v4383 = vand.u32 2147483647, %v524
    %vm4384 = vcmp.le.f32.partialorder %v4383, 0.7853982
    %vm4385 = vcmp.lt.s32.totalorder %v524, 0
    %v4386 = vand.u32 %v524, 2139095040
    %v4387 = vshrl.u32 %v4386, 23
    %v4388 = vsub.s32 %v4387, 127
    %v4389 = vand.u32 2147483647, %v524
    %v4390 = vand.u32 %v4389, 8388607
    %v4391 = vor.u32 %v4390, 8388608
    %v4392 = vsub.s32 0, %v4391
    %v4393 = vadd.s32 %v4388, 1
    %vm4394 = vcmp.gt.s32.totalorder %v4393, 0
    %v4395 = vsel %vm4394, %v4393, 0
    %v4396 = vshrl.u32 %v4395, 5
    %v4397 = vand.u32 %v4395, 31
    %v4398 = vsub.s32 32, %v4397
    %v4399 = vshrl.u32 683565275, %v4398
    %v4400 = vshll.u32 683565275, %v4397
    %v4401 = vshrl.u32 2475754826, %v4398
    %v4402 = vor.u32 %v4400, %v4401
    %v4403 = vshll.u32 2475754826, %v4397
    %v4404 = vshrl.u32 2131351028, %v4398
    %v4405 = vor.u32 %v4403, %v4404
    %v4406 = vshll.u32 2131351028, %v4397
    %v4407 = vshrl.u32 2102212464, %v4398
    %v4408 = vor.u32 %v4406, %v4407
    %v4409 = vshll.u32 2102212464, %v4397
    %v4410 = vshrl.u32 920167782, %v4398
    %v4411 = vor.u32 %v4409, %v4410
    %v4412 = vshll.u32 920167782, %v4397
    %v4413 = vshrl.u32 1326507024, %v4398
    %v4414 = vor.u32 %v4412, %v4413
    %vm4415 = vcmp.lt.s32.totalorder %v4396, 1
    %vm4416 = vcmp.lt.s32.totalorder %v4396, 2
    %vm4417 = vcmp.lt.s32.totalorder %v4396, 3
    %vm4418 = vcmp.lt.s32.totalorder %v4396, 4
    %v4419 = vsel %vm4415, %v4399, %v4402
    %v4420 = vsel %vm4418, %v4408, 2102212464
    %v4421 = vsel %vm4417, %v4405, %v4420
    %v4422 = vsel %vm4416, %v4419, %v4421
    %v4423 = vsel %vm4415, %v4402, %v4405
    %v4424 = vsel %vm4418, %v4411, 920167782
    %v4425 = vsel %vm4417, %v4408, %v4424
    %v4426 = vsel %vm4416, %v4423, %v4425
    %v4427 = vsel %vm4415, %v4405, %v4408
    %v4428 = vsel %vm4418, %v4414, 1326507024
    %v4429 = vsel %vm4417, %v4411, %v4428
    %v4430 = vsel %vm4416, %v4427, %v4429
    %v4431 = vshll.u32 %v4391, 8
    %v4432 = vand.u32 %v4431, 65535
    %v4433 = vshrl.u32 %v4431, 16
    %v4434 = vand.u32 %v4430, 65535
    %v4435 = vshrl.u32 %v4430, 16
    %v4436 = vmul.u32 %v4432, %v4434
    %v4437 = vmul.u32 %v4432, %v4435
    %v4438 = vmul.u32 %v4433, %v4434
    %v4439 = vmul.u32 %v4433, %v4435
    %v4440 = vshll.u32 %v4437, 16
    %v4441 = vshrl.u32 %v4437, 16
    %v4442 = vshll.u32 %v4438, 16
    %v4443 = vshrl.u32 %v4438, 16
    %vm4444 = vc.u32 %v4436, %v4440
    %v4445 = vsel %vm4444, 1, 0
    %v4446 = vadd.s32 %v4436, %v4440
    %v4447 = vadd.s32 %v4439, %v4445
    %vm4448 = vc.u32 %v4446, %v4442
    %v4449 = vsel %vm4448, 1, 0
    %v4450 = vadd.s32 %v4446, %v4442
    %v4451 = vadd.s32 %v4447, %v4449
    %v4452 = vadd.s32 %v4451, %v4441
    %v4453 = vadd.s32 %v4452, %v4443
    %v4454 = vand.u32 %v4431, 65535
    %v4455 = vshrl.u32 %v4431, 16
    %v4456 = vand.u32 %v4426, 65535
    %v4457 = vshrl.u32 %v4426, 16
    %v4458 = vmul.u32 %v4454, %v4456
    %v4459 = vmul.u32 %v4454, %v4457
    %v4460 = vmul.u32 %v4455, %v4456
    %v4461 = vmul.u32 %v4455, %v4457
    %v4462 = vshll.u32 %v4459, 16
    %v4463 = vshrl.u32 %v4459, 16
    %v4464 = vshll.u32 %v4460, 16
    %v4465 = vshrl.u32 %v4460, 16
    %vm4466 = vc.u32 %v4458, %v4462
    %v4467 = vsel %vm4466, 1, 0
    %v4468 = vadd.s32 %v4458, %v4462
    %v4469 = vadd.s32 %v4461, %v4467
    %vm4470 = vc.u32 %v4468, %v4464
    %v4471 = vsel %vm4470, 1, 0
    %v4472 = vadd.s32 %v4468, %v4464
    %v4473 = vadd.s32 %v4469, %v4471
    %v4474 = vadd.s32 %v4473, %v4463
    %v4475 = vadd.s32 %v4474, %v4465
    %v4476 = vmul.u32 %v4431, %v4422
    %v4477 = vadd.s32 %v4453, %v4472
    %vm4478 = vc.u32 %v4453, %v4472
    %v4479 = vadd.s32 %v4475, 1
    %v4480 = vsel %vm4478, %v4479, %v4475
    %v4481 = vadd.s32 %v4476, %v4480
    %v4482 = vadd.s32 %v4481, 536870912
    %v4483 = vshrl.u32 %v4482, 30
    %v4484 = vshll.u32 %v4483, 30
    %v4485 = vsub.s32 %v4481, %v4484
    %vm4486 = vcmp.lt.s32.totalorder %v4485, 0
    %v4487 = vsub.s32 0, %v4485
    %v4488 = vsel %vm4486, %v4487, %v4485
    %v4489 = vclz %v4488
    %v4490 = vsub.s32 %v4489, 2
    %vm4491 = vcmp.gt.s32.totalorder 0, %v4490
    %v4492 = vsel %vm4491, 0, %v4490
    %v4493 = vsub.s32 32, %v4492
    %v4494 = vshll.u32 %v4485, %v4492
    %v4495 = vshrl.u32 %v4477, %v4493
    %v4496 = vor.u32 %v4494, %v4495
    %v4497 = vsub.s32 4294967266, %v4492
    %v4498 = vadd.s32 %v4497, 127
    %v4499 = vshll.u32 %v4498, 23
    %v4500 = vor.u32 4788187, %v4499
    %v4501 = vand.u32 2147483647, %v4500
    %v4503 = vcvt.s32.f32 %v4496
    %v4504 = vmul.f32 %v4503, %v4501
    %v4505 = vxor.u32 %v4504, 2147483648
    %v4506 = vsel %vm4385, %v4505, %v4504
    %v4507 = vsub.s32 4, %v4483
    %v4508 = vsel %vm4385, %v4507, %v4483
    %v4509 = vsel %vm4384, %v524, %v4506
    %v4510 = vsel %vm4384, 0, %v4508
    %v4511 = vmul.f32 %v4509, %v4509
    %v4512 = vmul.f32 %v4511, -0.001358992
    %v4513 = vadd.f32 %v4512, 0.041655596
    %v4514 = vmul.f32 %v4511, %v4513
    %v4515 = vadd.f32 %v4514, -0.4999988
    %v4516 = vmul.f32 %v4511, %v4515
    %v4517 = vadd.f32 1.0, %v4516
    %v4518 = vmul.f32 %v4509, %v4509
    %v4519 = vmul.f32 %v4518, -0.00019511016
    %v4520 = vadd.f32 %v4519, 0.008332121
    %v4521 = vmul.f32 %v4518, %v4520
    %v4522 = vadd.f32 %v4521, -0.16666654
    %v4523 = vmul.f32 %v4518, %v4522
    %v4524 = vadd.f32 %v4523, 1.0
    %v4525 = vmul.f32 %v4524, %v4509
    %vm4526 = vweird.f32 %v524
    %v4527 = vand.u32 %v4510, 3
    %vm4528 = vcmp.lt.s32.totalorder %v4527, 2
    %vm4529 = vcmp.eq.s32.totalorder %v4527, 0
    %v4530 = vxor.u32 %v4525, 2147483648
    %v4531 = vsel %vm4529, %v4517, %v4530
    %vm4532 = vcmp.eq.s32.totalorder %v4527, 2
    %v4533 = vxor.u32 %v4517, 2147483648
    %v4534 = vsel %vm4532, %v4533, %v4525
    %v4535 = vsel %vm4528, %v4531, %v4534
    %v4536 = vsel %vm4526, nan, %v4535
    %v4537 = vand.u32 2147483647, %v477
    %vm4538 = vcmp.le.f32.partialorder %v4537, 0.7853982
    %vm4539 = vcmp.lt.s32.totalorder %v477, 0
    %v4540 = vand.u32 %v477, 2139095040
    %v4541 = vshrl.u32 %v4540, 23
    %v4542 = vsub.s32 %v4541, 127
    %v4543 = vand.u32 2147483647, %v477
    %v4544 = vand.u32 %v4543, 8388607
    %v4545 = vor.u32 %v4544, 8388608
    %v4546 = vsub.s32 0, %v4545
    %v4547 = vadd.s32 %v4542, 1
    %vm4548 = vcmp.gt.s32.totalorder %v4547, 0
    %v4549 = vsel %vm4548, %v4547, 0
    %v4550 = vshrl.u32 %v4549, 5
    %v4551 = vand.u32 %v4549, 31
    %v4552 = vsub.s32 32, %v4551
    %v4553 = vshrl.u32 683565275, %v4552
    %v4554 = vshll.u32 683565275, %v4551
    %v4555 = vshrl.u32 2475754826, %v4552
    %v4556 = vor.u32 %v4554, %v4555
    %v4557 = vshll.u32 2475754826, %v4551
    %v4558 = vshrl.u32 2131351028, %v4552
    %v4559 = vor.u32 %v4557, %v4558
    %v4560 = vshll.u32 2131351028, %v4551
    %v4561 = vshrl.u32 2102212464, %v4552
    %v4562 = vor.u32 %v4560, %v4561
    %v4563 = vshll.u32 2102212464, %v4551
    %v4564 = vshrl.u32 920167782, %v4552
    %v4565 = vor.u32 %v4563, %v4564
    %v4566 = vshll.u32 920167782, %v4551
    %v4567 = vshrl.u32 1326507024, %v4552
    %v4568 = vor.u32 %v4566, %v4567
    %vm4569 = vcmp.lt.s32.totalorder %v4550, 1
    %vm4570 = vcmp.lt.s32.totalorder %v4550, 2
    %vm4571 = vcmp.lt.s32.totalorder %v4550, 3
    %vm4572 = vcmp.lt.s32.totalorder %v4550, 4
    %v4573 = vsel %vm4569, %v4553, %v4556
    %v4574 = vsel %vm4572, %v4562, 2102212464
    %v4575 = vsel %vm4571, %v4559, %v4574
    %v4576 = vsel %vm4570, %v4573, %v4575
    %v4577 = vsel %vm4569, %v4556, %v4559
    %v4578 = vsel %vm4572, %v4565, 920167782
    %v4579 = vsel %vm4571, %v4562, %v4578
    %v4580 = vsel %vm4570, %v4577, %v4579
    %v4581 = vsel %vm4569, %v4559, %v4562
    %v4582 = vsel %vm4572, %v4568, 1326507024
    %v4583 = vsel %vm4571, %v4565, %v4582
    %v4584 = vsel %vm4570, %v4581, %v4583
    %v4585 = vshll.u32 %v4545, 8
    %v4586 = vand.u32 %v4585, 65535
    %v4587 = vshrl.u32 %v4585, 16
    %v4588 = vand.u32 %v4584, 65535
    %v4589 = vshrl.u32 %v4584, 16
    %v4590 = vmul.u32 %v4586, %v4588
    %v4591 = vmul.u32 %v4586, %v4589
    %v4592 = vmul.u32 %v4587, %v4588
    %v4593 = vmul.u32 %v4587, %v4589
    %v4594 = vshll.u32 %v4591, 16
    %v4595 = vshrl.u32 %v4591, 16
    %v4596 = vshll.u32 %v4592, 16
    %v4597 = vshrl.u32 %v4592, 16
    %vm4598 = vc.u32 %v4590, %v4594
    %v4599 = vsel %vm4598, 1, 0
    %v4600 = vadd.s32 %v4590, %v4594
    %v4601 = vadd.s32 %v4593, %v4599
    %vm4602 = vc.u32 %v4600, %v4596
    %v4603 = vsel %vm4602, 1, 0
    %v4604 = vadd.s32 %v4600, %v4596
    %v4605 = vadd.s32 %v4601, %v4603
    %v4606 = vadd.s32 %v4605, %v4595
    %v4607 = vadd.s32 %v4606, %v4597
    %v4608 = vand.u32 %v4585, 65535
    %v4609 = vshrl.u32 %v4585, 16
    %v4610 = vand.u32 %v4580, 65535
    %v4611 = vshrl.u32 %v4580, 16
    %v4612 = vmul.u32 %v4608, %v4610
    %v4613 = vmul.u32 %v4608, %v4611
    %v4614 = vmul.u32 %v4609, %v4610
    %v4615 = vmul.u32 %v4609, %v4611
    %v4616 = vshll.u32 %v4613, 16
    %v4617 = vshrl.u32 %v4613, 16
    %v4618 = vshll.u32 %v4614, 16
    %v4619 = vshrl.u32 %v4614, 16
    %vm4620 = vc.u32 %v4612, %v4616
    %v4621 = vsel %vm4620, 1, 0
    %v4622 = vadd.s32 %v4612, %v4616
    %v4623 = vadd.s32 %v4615, %v4621
    %vm4624 = vc.u32 %v4622, %v4618
    %v4625 = vsel %vm4624, 1, 0
    %v4626 = vadd.s32 %v4622, %v4618
    %v4627 = vadd.s32 %v4623, %v4625
    %v4628 = vadd.s32 %v4627, %v4617
    %v4629 = vadd.s32 %v4628, %v4619
    %v4630 = vmul.u32 %v4585, %v4576
    %v4631 = vadd.s32 %v4607, %v4626
    %vm4632 = vc.u32 %v4607, %v4626
    %v4633 = vadd.s32 %v4629, 1
    %v4634 = vsel %vm4632, %v4633, %v4629
    %v4635 = vadd.s32 %v4630, %v4634
    %v4636 = vadd.s32 %v4635, 536870912
    %v4637 = vshrl.u32 %v4636, 30
    %v4638 = vshll.u32 %v4637, 30
    %v4639 = vsub.s32 %v4635, %v4638
    %vm4640 = vcmp.lt.s32.totalorder %v4639, 0
    %v4641 = vsub.s32 0, %v4639
    %v4642 = vsel %vm4640, %v4641, %v4639
    %v4643 = vclz %v4642
    %v4644 = vsub.s32 %v4643, 2
    %vm4645 = vcmp.gt.s32.totalorder 0, %v4644
    %v4646 = vsel %vm4645, 0, %v4644
    %v4647 = vsub.s32 32, %v4646
    %v4648 = vshll.u32 %v4639, %v4646
    %v4649 = vshrl.u32 %v4631, %v4647
    %v4650 = vor.u32 %v4648, %v4649
    %v4651 = vsub.s32 4294967266, %v4646
    %v4652 = vadd.s32 %v4651, 127
    %v4653 = vshll.u32 %v4652, 23
    %v4654 = vor.u32 4788187, %v4653
    %v4655 = vand.u32 2147483647, %v4654
    %v4657 = vcvt.s32.f32 %v4650
    %v4658 = vmul.f32 %v4657, %v4655
    %v4659 = vxor.u32 %v4658, 2147483648
    %v4660 = vsel %vm4539, %v4659, %v4658
    %v4661 = vsub.s32 4, %v4637
    %v4662 = vsel %vm4539, %v4661, %v4637
    %v4663 = vsel %vm4538, %v477, %v4660
    %v4664 = vsel %vm4538, 0, %v4662
    %v4665 = vmul.f32 %v4663, %v4663
    %v4666 = vmul.f32 %v4665, -0.001358992
    %v4667 = vadd.f32 %v4666, 0.041655596
    %v4668 = vmul.f32 %v4665, %v4667
    %v4669 = vadd.f32 %v4668, -0.4999988
    %v4670 = vmul.f32 %v4665, %v4669
    %v4671 = vadd.f32 1.0, %v4670
    %v4672 = vmul.f32 %v4663, %v4663
    %v4673 = vmul.f32 %v4672, -0.00019511016
    %v4674 = vadd.f32 %v4673, 0.008332121
    %v4675 = vmul.f32 %v4672, %v4674
    %v4676 = vadd.f32 %v4675, -0.16666654
    %v4677 = vmul.f32 %v4672, %v4676
    %v4678 = vadd.f32 %v4677, 1.0
    %v4679 = vmul.f32 %v4678, %v4663
    %vm4680 = vweird.f32 %v477
    %v4681 = vand.u32 %v4664, 3
    %vm4682 = vcmp.lt.s32.totalorder %v4681, 2
    %vm4683 = vcmp.eq.s32.totalorder %v4681, 0
    %v4684 = vxor.u32 %v4679, 2147483648
    %v4685 = vsel %vm4683, %v4671, %v4684
    %vm4686 = vcmp.eq.s32.totalorder %v4681, 2
    %v4687 = vxor.u32 %v4671, 2147483648
    %v4688 = vsel %vm4686, %v4687, %v4679
    %v4689 = vsel %vm4682, %v4685, %v4688
    %v4690 = vsel %vm4680, nan, %v4689
    %v4691 = vand.u32 2147483647, %v526
    %vm4692 = vcmp.le.f32.partialorder %v4691, 0.7853982
    %vm4693 = vcmp.lt.s32.totalorder %v526, 0
    %v4694 = vand.u32 %v526, 2139095040
    %v4695 = vshrl.u32 %v4694, 23
    %v4696 = vsub.s32 %v4695, 127
    %v4697 = vand.u32 2147483647, %v526
    %v4698 = vand.u32 %v4697, 8388607
    %v4699 = vor.u32 %v4698, 8388608
    %v4700 = vsub.s32 0, %v4699
    %v4701 = vadd.s32 %v4696, 1
    %vm4702 = vcmp.gt.s32.totalorder %v4701, 0
    %v4703 = vsel %vm4702, %v4701, 0
    %v4704 = vshrl.u32 %v4703, 5
    %v4705 = vand.u32 %v4703, 31
    %v4706 = vsub.s32 32, %v4705
    %v4707 = vshrl.u32 683565275, %v4706
    %v4708 = vshll.u32 683565275, %v4705
    %v4709 = vshrl.u32 2475754826, %v4706
    %v4710 = vor.u32 %v4708, %v4709
    %v4711 = vshll.u32 2475754826, %v4705
    %v4712 = vshrl.u32 2131351028, %v4706
    %v4713 = vor.u32 %v4711, %v4712
    %v4714 = vshll.u32 2131351028, %v4705
    %v4715 = vshrl.u32 2102212464, %v4706
    %v4716 = vor.u32 %v4714, %v4715
    %v4717 = vshll.u32 2102212464, %v4705
    %v4718 = vshrl.u32 920167782, %v4706
    %v4719 = vor.u32 %v4717, %v4718
    %v4720 = vshll.u32 920167782, %v4705
    %v4721 = vshrl.u32 1326507024, %v4706
    %v4722 = vor.u32 %v4720, %v4721
    %vm4723 = vcmp.lt.s32.totalorder %v4704, 1
    %vm4724 = vcmp.lt.s32.totalorder %v4704, 2
    %vm4725 = vcmp.lt.s32.totalorder %v4704, 3
    %vm4726 = vcmp.lt.s32.totalorder %v4704, 4
    %v4727 = vsel %vm4723, %v4707, %v4710
    %v4728 = vsel %vm4726, %v4716, 2102212464
    %v4729 = vsel %vm4725, %v4713, %v4728
    %v4730 = vsel %vm4724, %v4727, %v4729
    %v4731 = vsel %vm4723, %v4710, %v4713
    %v4732 = vsel %vm4726, %v4719, 920167782
    %v4733 = vsel %vm4725, %v4716, %v4732
    %v4734 = vsel %vm4724, %v4731, %v4733
    %v4735 = vsel %vm4723, %v4713, %v4716
    %v4736 = vsel %vm4726, %v4722, 1326507024
    %v4737 = vsel %vm4725, %v4719, %v4736
    %v4738 = vsel %vm4724, %v4735, %v4737
    %v4739 = vshll.u32 %v4699, 8
    %v4740 = vand.u32 %v4739, 65535
    %v4741 = vshrl.u32 %v4739, 16
    %v4742 = vand.u32 %v4738, 65535
    %v4743 = vshrl.u32 %v4738, 16
    %v4744 = vmul.u32 %v4740, %v4742
    %v4745 = vmul.u32 %v4740, %v4743
    %v4746 = vmul.u32 %v4741, %v4742
    %v4747 = vmul.u32 %v4741, %v4743
    %v4748 = vshll.u32 %v4745, 16
    %v4749 = vshrl.u32 %v4745, 16
    %v4750 = vshll.u32 %v4746, 16
    %v4751 = vshrl.u32 %v4746, 16
    %vm4752 = vc.u32 %v4744, %v4748
    %v4753 = vsel %vm4752, 1, 0
    %v4754 = vadd.s32 %v4744, %v4748
    %v4755 = vadd.s32 %v4747, %v4753
    %vm4756 = vc.u32 %v4754, %v4750
    %v4757 = vsel %vm4756, 1, 0
    %v4758 = vadd.s32 %v4754, %v4750
    %v4759 = vadd.s32 %v4755, %v4757
    %v4760 = vadd.s32 %v4759, %v4749
    %v4761 = vadd.s32 %v4760, %v4751
    %v4762 = vand.u32 %v4739, 65535
    %v4763 = vshrl.u32 %v4739, 16
    %v4764 = vand.u32 %v4734, 65535
    %v4765 = vshrl.u32 %v4734, 16
    %v4766 = vmul.u32 %v4762, %v4764
    %v4767 = vmul.u32 %v4762, %v4765
    %v4768 = vmul.u32 %v4763, %v4764
    %v4769 = vmul.u32 %v4763, %v4765
    %v4770 = vshll.u32 %v4767, 16
    %v4771 = vshrl.u32 %v4767, 16
    %v4772 = vshll.u32 %v4768, 16
    %v4773 = vshrl.u32 %v4768, 16
    %vm4774 = vc.u32 %v4766, %v4770
    %v4775 = vsel %vm4774, 1, 0
    %v4776 = vadd.s32 %v4766, %v4770
    %v4777 = vadd.s32 %v4769, %v4775
    %vm4778 = vc.u32 %v4776, %v4772
    %v4779 = vsel %vm4778, 1, 0
    %v4780 = vadd.s32 %v4776, %v4772
    %v4781 = vadd.s32 %v4777, %v4779
    %v4782 = vadd.s32 %v4781, %v4771
    %v4783 = vadd.s32 %v4782, %v4773
    %v4784 = vmul.u32 %v4739, %v4730
    %v4785 = vadd.s32 %v4761, %v4780
    %vm4786 = vc.u32 %v4761, %v4780
    %v4787 = vadd.s32 %v4783, 1
    %v4788 = vsel %vm4786, %v4787, %v4783
    %v4789 = vadd.s32 %v4784, %v4788
    %v4790 = vadd.s32 %v4789, 536870912
    %v4791 = vshrl.u32 %v4790, 30
    %v4792 = vshll.u32 %v4791, 30
    %v4793 = vsub.s32 %v4789, %v4792
    %vm4794 = vcmp.lt.s32.totalorder %v4793, 0
    %v4795 = vsub.s32 0, %v4793
    %v4796 = vsel %vm4794, %v4795, %v4793
    %v4797 = vclz %v4796
    %v4798 = vsub.s32 %v4797, 2
    %vm4799 = vcmp.gt.s32.totalorder 0, %v4798
    %v4800 = vsel %vm4799, 0, %v4798
    %v4801 = vsub.s32 32, %v4800
    %v4802 = vshll.u32 %v4793, %v4800
    %v4803 = vshrl.u32 %v4785, %v4801
    %v4804 = vor.u32 %v4802, %v4803
    %v4805 = vsub.s32 4294967266, %v4800
    %v4806 = vadd.s32 %v4805, 127
    %v4807 = vshll.u32 %v4806, 23
    %v4808 = vor.u32 4788187, %v4807
    %v4809 = vand.u32 2147483647, %v4808
    %v4811 = vcvt.s32.f32 %v4804
    %v4812 = vmul.f32 %v4811, %v4809
    %v4813 = vxor.u32 %v4812, 2147483648
    %v4814 = vsel %vm4693, %v4813, %v4812
    %v4815 = vsub.s32 4, %v4791
    %v4816 = vsel %vm4693, %v4815, %v4791
    %v4817 = vsel %vm4692, %v526, %v4814
    %v4818 = vsel %vm4692, 0, %v4816
    %v4819 = vmul.f32 %v4817, %v4817
    %v4820 = vmul.f32 %v4819, -0.001358992
    %v4821 = vadd.f32 %v4820, 0.041655596
    %v4822 = vmul.f32 %v4819, %v4821
    %v4823 = vadd.f32 %v4822, -0.4999988
    %v4824 = vmul.f32 %v4819, %v4823
    %v4825 = vadd.f32 1.0, %v4824
    %v4826 = vmul.f32 %v4817, %v4817
    %v4827 = vmul.f32 %v4826, -0.00019511016
    %v4828 = vadd.f32 %v4827, 0.008332121
    %v4829 = vmul.f32 %v4826, %v4828
    %v4830 = vadd.f32 %v4829, -0.16666654
    %v4831 = vmul.f32 %v4826, %v4830
    %v4832 = vadd.f32 %v4831, 1.0
    %v4833 = vmul.f32 %v4832, %v4817
    %vm4834 = vweird.f32 %v526
    %v4835 = vand.u32 %v4818, 3
    %vm4836 = vcmp.lt.s32.totalorder %v4835, 2
    %vm4837 = vcmp.eq.s32.totalorder %v4835, 0
    %v4838 = vxor.u32 %v4833, 2147483648
    %v4839 = vsel %vm4837, %v4825, %v4838
    %vm4840 = vcmp.eq.s32.totalorder %v4835, 2
    %v4841 = vxor.u32 %v4825, 2147483648
    %v4842 = vsel %vm4840, %v4841, %v4833
    %v4843 = vsel %vm4836, %v4839, %v4842
    %v4844 = vsel %vm4834, nan, %v4843
    %v4845 = vand.u32 2147483647, %v480
    %vm4846 = vcmp.le.f32.partialorder %v4845, 0.7853982
    %vm4847 = vcmp.lt.s32.totalorder %v480, 0
    %v4848 = vand.u32 %v480, 2139095040
    %v4849 = vshrl.u32 %v4848, 23
    %v4850 = vsub.s32 %v4849, 127
    %v4851 = vand.u32 2147483647, %v480
    %v4852 = vand.u32 %v4851, 8388607
    %v4853 = vor.u32 %v4852, 8388608
    %v4854 = vsub.s32 0, %v4853
    %v4855 = vadd.s32 %v4850, 1
    %vm4856 = vcmp.gt.s32.totalorder %v4855, 0
    %v4857 = vsel %vm4856, %v4855, 0
    %v4858 = vshrl.u32 %v4857, 5
    %v4859 = vand.u32 %v4857, 31
    %v4860 = vsub.s32 32, %v4859
    %v4861 = vshrl.u32 683565275, %v4860
    %v4862 = vshll.u32 683565275, %v4859
    %v4863 = vshrl.u32 2475754826, %v4860
    %v4864 = vor.u32 %v4862, %v4863
    %v4865 = vshll.u32 2475754826, %v4859
    %v4866 = vshrl.u32 2131351028, %v4860
    %v4867 = vor.u32 %v4865, %v4866
    %v4868 = vshll.u32 2131351028, %v4859
    %v4869 = vshrl.u32 2102212464, %v4860
    %v4870 = vor.u32 %v4868, %v4869
    %v4871 = vshll.u32 2102212464, %v4859
    %v4872 = vshrl.u32 920167782, %v4860
    %v4873 = vor.u32 %v4871, %v4872
    %v4874 = vshll.u32 920167782, %v4859
    %v4875 = vshrl.u32 1326507024, %v4860
    %v4876 = vor.u32 %v4874, %v4875
    %vm4877 = vcmp.lt.s32.totalorder %v4858, 1
    %vm4878 = vcmp.lt.s32.totalorder %v4858, 2
    %vm4879 = vcmp.lt.s32.totalorder %v4858, 3
    %vm4880 = vcmp.lt.s32.totalorder %v4858, 4
    %v4881 = vsel %vm4877, %v4861, %v4864
    %v4882 = vsel %vm4880, %v4870, 2102212464
    %v4883 = vsel %vm4879, %v4867, %v4882
    %v4884 = vsel %vm4878, %v4881, %v4883
    %v4885 = vsel %vm4877, %v4864, %v4867
    %v4886 = vsel %vm4880, %v4873, 920167782
    %v4887 = vsel %vm4879, %v4870, %v4886
    %v4888 = vsel %vm4878, %v4885, %v4887
    %v4889 = vsel %vm4877, %v4867, %v4870
    %v4890 = vsel %vm4880, %v4876, 1326507024
    %v4891 = vsel %vm4879, %v4873, %v4890
    %v4892 = vsel %vm4878, %v4889, %v4891
    %v4893 = vshll.u32 %v4853, 8
    %v4894 = vand.u32 %v4893, 65535
    %v4895 = vshrl.u32 %v4893, 16
    %v4896 = vand.u32 %v4892, 65535
    %v4897 = vshrl.u32 %v4892, 16
    %v4898 = vmul.u32 %v4894, %v4896
    %v4899 = vmul.u32 %v4894, %v4897
    %v4900 = vmul.u32 %v4895, %v4896
    %v4901 = vmul.u32 %v4895, %v4897
    %v4902 = vshll.u32 %v4899, 16
    %v4903 = vshrl.u32 %v4899, 16
    %v4904 = vshll.u32 %v4900, 16
    %v4905 = vshrl.u32 %v4900, 16
    %vm4906 = vc.u32 %v4898, %v4902
    %v4907 = vsel %vm4906, 1, 0
    %v4908 = vadd.s32 %v4898, %v4902
    %v4909 = vadd.s32 %v4901, %v4907
    %vm4910 = vc.u32 %v4908, %v4904
    %v4911 = vsel %vm4910, 1, 0
    %v4912 = vadd.s32 %v4908, %v4904
    %v4913 = vadd.s32 %v4909, %v4911
    %v4914 = vadd.s32 %v4913, %v4903
    %v4915 = vadd.s32 %v4914, %v4905
    %v4916 = vand.u32 %v4893, 65535
    %v4917 = vshrl.u32 %v4893, 16
    %v4918 = vand.u32 %v4888, 65535
    %v4919 = vshrl.u32 %v4888, 16
    %v4920 = vmul.u32 %v4916, %v4918
    %v4921 = vmul.u32 %v4916, %v4919
    %v4922 = vmul.u32 %v4917, %v4918
    %v4923 = vmul.u32 %v4917, %v4919
    %v4924 = vshll.u32 %v4921, 16
    %v4925 = vshrl.u32 %v4921, 16
    %v4926 = vshll.u32 %v4922, 16
    %v4927 = vshrl.u32 %v4922, 16
    %vm4928 = vc.u32 %v4920, %v4924
    %v4929 = vsel %vm4928, 1, 0
    %v4930 = vadd.s32 %v4920, %v4924
    %v4931 = vadd.s32 %v4923, %v4929
    %vm4932 = vc.u32 %v4930, %v4926
    %v4933 = vsel %vm4932, 1, 0
    %v4934 = vadd.s32 %v4930, %v4926
    %v4935 = vadd.s32 %v4931, %v4933
    %v4936 = vadd.s32 %v4935, %v4925
    %v4937 = vadd.s32 %v4936, %v4927
    %v4938 = vmul.u32 %v4893, %v4884
    %v4939 = vadd.s32 %v4915, %v4934
    %vm4940 = vc.u32 %v4915, %v4934
    %v4941 = vadd.s32 %v4937, 1
    %v4942 = vsel %vm4940, %v4941, %v4937
    %v4943 = vadd.s32 %v4938, %v4942
    %v4944 = vadd.s32 %v4943, 536870912
    %v4945 = vshrl.u32 %v4944, 30
    %v4946 = vshll.u32 %v4945, 30
    %v4947 = vsub.s32 %v4943, %v4946
    %vm4948 = vcmp.lt.s32.totalorder %v4947, 0
    %v4949 = vsub.s32 0, %v4947
    %v4950 = vsel %vm4948, %v4949, %v4947
    %v4951 = vclz %v4950
    %v4952 = vsub.s32 %v4951, 2
    %vm4953 = vcmp.gt.s32.totalorder 0, %v4952
    %v4954 = vsel %vm4953, 0, %v4952
    %v4955 = vsub.s32 32, %v4954
    %v4956 = vshll.u32 %v4947, %v4954
    %v4957 = vshrl.u32 %v4939, %v4955
    %v4958 = vor.u32 %v4956, %v4957
    %v4959 = vsub.s32 4294967266, %v4954
    %v4960 = vadd.s32 %v4959, 127
    %v4961 = vshll.u32 %v4960, 23
    %v4962 = vor.u32 4788187, %v4961
    %v4963 = vand.u32 2147483647, %v4962
    %v4965 = vcvt.s32.f32 %v4958
    %v4966 = vmul.f32 %v4965, %v4963
    %v4967 = vxor.u32 %v4966, 2147483648
    %v4968 = vsel %vm4847, %v4967, %v4966
    %v4969 = vsub.s32 4, %v4945
    %v4970 = vsel %vm4847, %v4969, %v4945
    %v4971 = vsel %vm4846, %v480, %v4968
    %v4972 = vsel %vm4846, 0, %v4970
    %v4973 = vmul.f32 %v4971, %v4971
    %v4974 = vmul.f32 %v4973, -0.001358992
    %v4975 = vadd.f32 %v4974, 0.041655596
    %v4976 = vmul.f32 %v4973, %v4975
    %v4977 = vadd.f32 %v4976, -0.4999988
    %v4978 = vmul.f32 %v4973, %v4977
    %v4979 = vadd.f32 1.0, %v4978
    %v4980 = vmul.f32 %v4971, %v4971
    %v4981 = vmul.f32 %v4980, -0.00019511016
    %v4982 = vadd.f32 %v4981, 0.008332121
    %v4983 = vmul.f32 %v4980, %v4982
    %v4984 = vadd.f32 %v4983, -0.16666654
    %v4985 = vmul.f32 %v4980, %v4984
    %v4986 = vadd.f32 %v4985, 1.0
    %v4987 = vmul.f32 %v4986, %v4971
    %vm4988 = vweird.f32 %v480
    %v4989 = vand.u32 %v4972, 3
    %vm4990 = vcmp.lt.s32.totalorder %v4989, 2
    %vm4991 = vcmp.eq.s32.totalorder %v4989, 0
    %v4992 = vxor.u32 %v4987, 2147483648
    %v4993 = vsel %vm4991, %v4979, %v4992
    %vm4994 = vcmp.eq.s32.totalorder %v4989, 2
    %v4995 = vxor.u32 %v4979, 2147483648
    %v4996 = vsel %vm4994, %v4995, %v4987
    %v4997 = vsel %vm4990, %v4993, %v4996
    %v4998 = vsel %vm4988, nan, %v4997
    %v4999 = vand.u32 2147483647, %v529
    %vm5000 = vcmp.le.f32.partialorder %v4999, 0.7853982
    %vm5001 = vcmp.lt.s32.totalorder %v529, 0
    %v5002 = vand.u32 %v529, 2139095040
    %v5003 = vshrl.u32 %v5002, 23
    %v5004 = vsub.s32 %v5003, 127
    %v5005 = vand.u32 2147483647, %v529
    %v5006 = vand.u32 %v5005, 8388607
    %v5007 = vor.u32 %v5006, 8388608
    %v5008 = vsub.s32 0, %v5007
    %v5009 = vadd.s32 %v5004, 1
    %vm5010 = vcmp.gt.s32.totalorder %v5009, 0
    %v5011 = vsel %vm5010, %v5009, 0
    %v5012 = vshrl.u32 %v5011, 5
    %v5013 = vand.u32 %v5011, 31
    %v5014 = vsub.s32 32, %v5013
    %v5015 = vshrl.u32 683565275, %v5014
    %v5016 = vshll.u32 683565275, %v5013
    %v5017 = vshrl.u32 2475754826, %v5014
    %v5018 = vor.u32 %v5016, %v5017
    %v5019 = vshll.u32 2475754826, %v5013
    %v5020 = vshrl.u32 2131351028, %v5014
    %v5021 = vor.u32 %v5019, %v5020
    %v5022 = vshll.u32 2131351028, %v5013
    %v5023 = vshrl.u32 2102212464, %v5014
    %v5024 = vor.u32 %v5022, %v5023
    %v5025 = vshll.u32 2102212464, %v5013
    %v5026 = vshrl.u32 920167782, %v5014
    %v5027 = vor.u32 %v5025, %v5026
    %v5028 = vshll.u32 920167782, %v5013
    %v5029 = vshrl.u32 1326507024, %v5014
    %v5030 = vor.u32 %v5028, %v5029
    %vm5031 = vcmp.lt.s32.totalorder %v5012, 1
    %vm5032 = vcmp.lt.s32.totalorder %v5012, 2
    %vm5033 = vcmp.lt.s32.totalorder %v5012, 3
    %vm5034 = vcmp.lt.s32.totalorder %v5012, 4
    %v5035 = vsel %vm5031, %v5015, %v5018
    %v5036 = vsel %vm5034, %v5024, 2102212464
    %v5037 = vsel %vm5033, %v5021, %v5036
    %v5038 = vsel %vm5032, %v5035, %v5037
    %v5039 = vsel %vm5031, %v5018, %v5021
    %v5040 = vsel %vm5034, %v5027, 920167782
    %v5041 = vsel %vm5033, %v5024, %v5040
    %v5042 = vsel %vm5032, %v5039, %v5041
    %v5043 = vsel %vm5031, %v5021, %v5024
    %v5044 = vsel %vm5034, %v5030, 1326507024
    %v5045 = vsel %vm5033, %v5027, %v5044
    %v5046 = vsel %vm5032, %v5043, %v5045
    %v5047 = vshll.u32 %v5007, 8
    %v5048 = vand.u32 %v5047, 65535
    %v5049 = vshrl.u32 %v5047, 16
    %v5050 = vand.u32 %v5046, 65535
    %v5051 = vshrl.u32 %v5046, 16
    %v5052 = vmul.u32 %v5048, %v5050
    %v5053 = vmul.u32 %v5048, %v5051
    %v5054 = vmul.u32 %v5049, %v5050
    %v5055 = vmul.u32 %v5049, %v5051
    %v5056 = vshll.u32 %v5053, 16
    %v5057 = vshrl.u32 %v5053, 16
    %v5058 = vshll.u32 %v5054, 16
    %v5059 = vshrl.u32 %v5054, 16
    %vm5060 = vc.u32 %v5052, %v5056
    %v5061 = vsel %vm5060, 1, 0
    %v5062 = vadd.s32 %v5052, %v5056
    %v5063 = vadd.s32 %v5055, %v5061
    %vm5064 = vc.u32 %v5062, %v5058
    %v5065 = vsel %vm5064, 1, 0
    %v5066 = vadd.s32 %v5062, %v5058
    %v5067 = vadd.s32 %v5063, %v5065
    %v5068 = vadd.s32 %v5067, %v5057
    %v5069 = vadd.s32 %v5068, %v5059
    %v5070 = vand.u32 %v5047, 65535
    %v5071 = vshrl.u32 %v5047, 16
    %v5072 = vand.u32 %v5042, 65535
    %v5073 = vshrl.u32 %v5042, 16
    %v5074 = vmul.u32 %v5070, %v5072
    %v5075 = vmul.u32 %v5070, %v5073
    %v5076 = vmul.u32 %v5071, %v5072
    %v5077 = vmul.u32 %v5071, %v5073
    %v5078 = vshll.u32 %v5075, 16
    %v5079 = vshrl.u32 %v5075, 16
    %v5080 = vshll.u32 %v5076, 16
    %v5081 = vshrl.u32 %v5076, 16
    %vm5082 = vc.u32 %v5074, %v5078
    %v5083 = vsel %vm5082, 1, 0
    %v5084 = vadd.s32 %v5074, %v5078
    %v5085 = vadd.s32 %v5077, %v5083
    %vm5086 = vc.u32 %v5084, %v5080
    %v5087 = vsel %vm5086, 1, 0
    %v5088 = vadd.s32 %v5084, %v5080
    %v5089 = vadd.s32 %v5085, %v5087
    %v5090 = vadd.s32 %v5089, %v5079
    %v5091 = vadd.s32 %v5090, %v5081
    %v5092 = vmul.u32 %v5047, %v5038
    %v5093 = vadd.s32 %v5069, %v5088
    %vm5094 = vc.u32 %v5069, %v5088
    %v5095 = vadd.s32 %v5091, 1
    %v5096 = vsel %vm5094, %v5095, %v5091
    %v5097 = vadd.s32 %v5092, %v5096
    %v5098 = vadd.s32 %v5097, 536870912
    %v5099 = vshrl.u32 %v5098, 30
    %v5100 = vshll.u32 %v5099, 30
    %v5101 = vsub.s32 %v5097, %v5100
    %vm5102 = vcmp.lt.s32.totalorder %v5101, 0
    %v5103 = vsub.s32 0, %v5101
    %v5104 = vsel %vm5102, %v5103, %v5101
    %v5105 = vclz %v5104
    %v5106 = vsub.s32 %v5105, 2
    %vm5107 = vcmp.gt.s32.totalorder 0, %v5106
    %v5108 = vsel %vm5107, 0, %v5106
    %v5109 = vsub.s32 32, %v5108
    %v5110 = vshll.u32 %v5101, %v5108
    %v5111 = vshrl.u32 %v5093, %v5109
    %v5112 = vor.u32 %v5110, %v5111
    %v5113 = vsub.s32 4294967266, %v5108
    %v5114 = vadd.s32 %v5113, 127
    %v5115 = vshll.u32 %v5114, 23
    %v5116 = vor.u32 4788187, %v5115
    %v5117 = vand.u32 2147483647, %v5116
    %v5119 = vcvt.s32.f32 %v5112
    %v5120 = vmul.f32 %v5119, %v5117
    %v5121 = vxor.u32 %v5120, 2147483648
    %v5122 = vsel %vm5001, %v5121, %v5120
    %v5123 = vsub.s32 4, %v5099
    %v5124 = vsel %vm5001, %v5123, %v5099
    %v5125 = vsel %vm5000, %v529, %v5122
    %v5126 = vsel %vm5000, 0, %v5124
    %v5127 = vmul.f32 %v5125, %v5125
    %v5128 = vmul.f32 %v5127, -0.001358992
    %v5129 = vadd.f32 %v5128, 0.041655596
    %v5130 = vmul.f32 %v5127, %v5129
    %v5131 = vadd.f32 %v5130, -0.4999988
    %v5132 = vmul.f32 %v5127, %v5131
    %v5133 = vadd.f32 1.0, %v5132
    %v5134 = vmul.f32 %v5125, %v5125
    %v5135 = vmul.f32 %v5134, -0.00019511016
    %v5136 = vadd.f32 %v5135, 0.008332121
    %v5137 = vmul.f32 %v5134, %v5136
    %v5138 = vadd.f32 %v5137, -0.16666654
    %v5139 = vmul.f32 %v5134, %v5138
    %v5140 = vadd.f32 %v5139, 1.0
    %v5141 = vmul.f32 %v5140, %v5125
    %vm5142 = vweird.f32 %v529
    %v5143 = vand.u32 %v5126, 3
    %vm5144 = vcmp.lt.s32.totalorder %v5143, 2
    %vm5145 = vcmp.eq.s32.totalorder %v5143, 0
    %v5146 = vxor.u32 %v5141, 2147483648
    %v5147 = vsel %vm5145, %v5133, %v5146
    %vm5148 = vcmp.eq.s32.totalorder %v5143, 2
    %v5149 = vxor.u32 %v5133, 2147483648
    %v5150 = vsel %vm5148, %v5149, %v5141
    %v5151 = vsel %vm5144, %v5147, %v5150
    %v5152 = vsel %vm5142, nan, %v5151
    %v5153 = vand.u32 2147483647, %v482
    %vm5154 = vcmp.le.f32.partialorder %v5153, 0.7853982
    %vm5155 = vcmp.lt.s32.totalorder %v482, 0
    %v5156 = vand.u32 %v482, 2139095040
    %v5157 = vshrl.u32 %v5156, 23
    %v5158 = vsub.s32 %v5157, 127
    %v5159 = vand.u32 2147483647, %v482
    %v5160 = vand.u32 %v5159, 8388607
    %v5161 = vor.u32 %v5160, 8388608
    %v5162 = vsub.s32 0, %v5161
    %v5163 = vadd.s32 %v5158, 1
    %vm5164 = vcmp.gt.s32.totalorder %v5163, 0
    %v5165 = vsel %vm5164, %v5163, 0
    %v5166 = vshrl.u32 %v5165, 5
    %v5167 = vand.u32 %v5165, 31
    %v5168 = vsub.s32 32, %v5167
    %v5169 = vshrl.u32 683565275, %v5168
    %v5170 = vshll.u32 683565275, %v5167
    %v5171 = vshrl.u32 2475754826, %v5168
    %v5172 = vor.u32 %v5170, %v5171
    %v5173 = vshll.u32 2475754826, %v5167
    %v5174 = vshrl.u32 2131351028, %v5168
    %v5175 = vor.u32 %v5173, %v5174
    %v5176 = vshll.u32 2131351028, %v5167
    %v5177 = vshrl.u32 2102212464, %v5168
    %v5178 = vor.u32 %v5176, %v5177
    %v5179 = vshll.u32 2102212464, %v5167
    %v5180 = vshrl.u32 920167782, %v5168
    %v5181 = vor.u32 %v5179, %v5180
    %v5182 = vshll.u32 920167782, %v5167
    %v5183 = vshrl.u32 1326507024, %v5168
    %v5184 = vor.u32 %v5182, %v5183
    %vm5185 = vcmp.lt.s32.totalorder %v5166, 1
    %vm5186 = vcmp.lt.s32.totalorder %v5166, 2
    %vm5187 = vcmp.lt.s32.totalorder %v5166, 3
    %vm5188 = vcmp.lt.s32.totalorder %v5166, 4
    %v5189 = vsel %vm5185, %v5169, %v5172
    %v5190 = vsel %vm5188, %v5178, 2102212464
    %v5191 = vsel %vm5187, %v5175, %v5190
    %v5192 = vsel %vm5186, %v5189, %v5191
    %v5193 = vsel %vm5185, %v5172, %v5175
    %v5194 = vsel %vm5188, %v5181, 920167782
    %v5195 = vsel %vm5187, %v5178, %v5194
    %v5196 = vsel %vm5186, %v5193, %v5195
    %v5197 = vsel %vm5185, %v5175, %v5178
    %v5198 = vsel %vm5188, %v5184, 1326507024
    %v5199 = vsel %vm5187, %v5181, %v5198
    %v5200 = vsel %vm5186, %v5197, %v5199
    %v5201 = vshll.u32 %v5161, 8
    %v5202 = vand.u32 %v5201, 65535
    %v5203 = vshrl.u32 %v5201, 16
    %v5204 = vand.u32 %v5200, 65535
    %v5205 = vshrl.u32 %v5200, 16
    %v5206 = vmul.u32 %v5202, %v5204
    %v5207 = vmul.u32 %v5202, %v5205
    %v5208 = vmul.u32 %v5203, %v5204
    %v5209 = vmul.u32 %v5203, %v5205
    %v5210 = vshll.u32 %v5207, 16
    %v5211 = vshrl.u32 %v5207, 16
    %v5212 = vshll.u32 %v5208, 16
    %v5213 = vshrl.u32 %v5208, 16
    %vm5214 = vc.u32 %v5206, %v5210
    %v5215 = vsel %vm5214, 1, 0
    %v5216 = vadd.s32 %v5206, %v5210
    %v5217 = vadd.s32 %v5209, %v5215
    %vm5218 = vc.u32 %v5216, %v5212
    %v5219 = vsel %vm5218, 1, 0
    %v5220 = vadd.s32 %v5216, %v5212
    %v5221 = vadd.s32 %v5217, %v5219
    %v5222 = vadd.s32 %v5221, %v5211
    %v5223 = vadd.s32 %v5222, %v5213
    %v5224 = vand.u32 %v5201, 65535
    %v5225 = vshrl.u32 %v5201, 16
    %v5226 = vand.u32 %v5196, 65535
    %v5227 = vshrl.u32 %v5196, 16
    %v5228 = vmul.u32 %v5224, %v5226
    %v5229 = vmul.u32 %v5224, %v5227
    %v5230 = vmul.u32 %v5225, %v5226
    %v5231 = vmul.u32 %v5225, %v5227
    %v5232 = vshll.u32 %v5229, 16
    %v5233 = vshrl.u32 %v5229, 16
    %v5234 = vshll.u32 %v5230, 16
    %v5235 = vshrl.u32 %v5230, 16
    %vm5236 = vc.u32 %v5228, %v5232
    %v5237 = vsel %vm5236, 1, 0
    %v5238 = vadd.s32 %v5228, %v5232
    %v5239 = vadd.s32 %v5231, %v5237
    %vm5240 = vc.u32 %v5238, %v5234
    %v5241 = vsel %vm5240, 1, 0
    %v5242 = vadd.s32 %v5238, %v5234
    %v5243 = vadd.s32 %v5239, %v5241
    %v5244 = vadd.s32 %v5243, %v5233
    %v5245 = vadd.s32 %v5244, %v5235
    %v5246 = vmul.u32 %v5201, %v5192
    %v5247 = vadd.s32 %v5223, %v5242
    %vm5248 = vc.u32 %v5223, %v5242
    %v5249 = vadd.s32 %v5245, 1
    %v5250 = vsel %vm5248, %v5249, %v5245
    %v5251 = vadd.s32 %v5246, %v5250
    %v5252 = vadd.s32 %v5251, 536870912
    %v5253 = vshrl.u32 %v5252, 30
    %v5254 = vshll.u32 %v5253, 30
    %v5255 = vsub.s32 %v5251, %v5254
    %vm5256 = vcmp.lt.s32.totalorder %v5255, 0
    %v5257 = vsub.s32 0, %v5255
    %v5258 = vsel %vm5256, %v5257, %v5255
    %v5259 = vclz %v5258
    %v5260 = vsub.s32 %v5259, 2
    %vm5261 = vcmp.gt.s32.totalorder 0, %v5260
    %v5262 = vsel %vm5261, 0, %v5260
    %v5263 = vsub.s32 32, %v5262
    %v5264 = vshll.u32 %v5255, %v5262
    %v5265 = vshrl.u32 %v5247, %v5263
    %v5266 = vor.u32 %v5264, %v5265
    %v5267 = vsub.s32 4294967266, %v5262
    %v5268 = vadd.s32 %v5267, 127
    %v5269 = vshll.u32 %v5268, 23
    %v5270 = vor.u32 4788187, %v5269
    %v5271 = vand.u32 2147483647, %v5270
    %v5273 = vcvt.s32.f32 %v5266
    %v5274 = vmul.f32 %v5273, %v5271
    %v5275 = vxor.u32 %v5274, 2147483648
    %v5276 = vsel %vm5155, %v5275, %v5274
    %v5277 = vsub.s32 4, %v5253
    %v5278 = vsel %vm5155, %v5277, %v5253
    %v5279 = vsel %vm5154, %v482, %v5276
    %v5280 = vsel %vm5154, 0, %v5278
    %v5281 = vmul.f32 %v5279, %v5279
    %v5282 = vmul.f32 %v5281, -0.001358992
    %v5283 = vadd.f32 %v5282, 0.041655596
    %v5284 = vmul.f32 %v5281, %v5283
    %v5285 = vadd.f32 %v5284, -0.4999988
    %v5286 = vmul.f32 %v5281, %v5285
    %v5287 = vadd.f32 1.0, %v5286
    %v5288 = vmul.f32 %v5279, %v5279
    %v5289 = vmul.f32 %v5288, -0.00019511016
    %v5290 = vadd.f32 %v5289, 0.008332121
    %v5291 = vmul.f32 %v5288, %v5290
    %v5292 = vadd.f32 %v5291, -0.16666654
    %v5293 = vmul.f32 %v5288, %v5292
    %v5294 = vadd.f32 %v5293, 1.0
    %v5295 = vmul.f32 %v5294, %v5279
    %vm5296 = vweird.f32 %v482
    %v5297 = vand.u32 %v5280, 3
    %vm5298 = vcmp.lt.s32.totalorder %v5297, 2
    %vm5299 = vcmp.eq.s32.totalorder %v5297, 0
    %v5300 = vxor.u32 %v5295, 2147483648
    %v5301 = vsel %vm5299, %v5287, %v5300
    %vm5302 = vcmp.eq.s32.totalorder %v5297, 2
    %v5303 = vxor.u32 %v5287, 2147483648
    %v5304 = vsel %vm5302, %v5303, %v5295
    %v5305 = vsel %vm5298, %v5301, %v5304
    %v5306 = vsel %vm5296, nan, %v5305
    %v5307 = vand.u32 2147483647, %v531
    %vm5308 = vcmp.le.f32.partialorder %v5307, 0.7853982
    %vm5309 = vcmp.lt.s32.totalorder %v531, 0
    %v5310 = vand.u32 %v531, 2139095040
    %v5311 = vshrl.u32 %v5310, 23
    %v5312 = vsub.s32 %v5311, 127
    %v5313 = vand.u32 2147483647, %v531
    %v5314 = vand.u32 %v5313, 8388607
    %v5315 = vor.u32 %v5314, 8388608
    %v5316 = vsub.s32 0, %v5315
    %v5317 = vadd.s32 %v5312, 1
    %vm5318 = vcmp.gt.s32.totalorder %v5317, 0
    %v5319 = vsel %vm5318, %v5317, 0
    %v5320 = vshrl.u32 %v5319, 5
    %v5321 = vand.u32 %v5319, 31
    %v5322 = vsub.s32 32, %v5321
    %v5323 = vshrl.u32 683565275, %v5322
    %v5324 = vshll.u32 683565275, %v5321
    %v5325 = vshrl.u32 2475754826, %v5322
    %v5326 = vor.u32 %v5324, %v5325
    %v5327 = vshll.u32 2475754826, %v5321
    %v5328 = vshrl.u32 2131351028, %v5322
    %v5329 = vor.u32 %v5327, %v5328
    %v5330 = vshll.u32 2131351028, %v5321
    %v5331 = vshrl.u32 2102212464, %v5322
    %v5332 = vor.u32 %v5330, %v5331
    %v5333 = vshll.u32 2102212464, %v5321
    %v5334 = vshrl.u32 920167782, %v5322
    %v5335 = vor.u32 %v5333, %v5334
    %v5336 = vshll.u32 920167782, %v5321
    %v5337 = vshrl.u32 1326507024, %v5322
    %v5338 = vor.u32 %v5336, %v5337
    %vm5339 = vcmp.lt.s32.totalorder %v5320, 1
    %vm5340 = vcmp.lt.s32.totalorder %v5320, 2
    %vm5341 = vcmp.lt.s32.totalorder %v5320, 3
    %vm5342 = vcmp.lt.s32.totalorder %v5320, 4
    %v5343 = vsel %vm5339, %v5323, %v5326
    %v5344 = vsel %vm5342, %v5332, 2102212464
    %v5345 = vsel %vm5341, %v5329, %v5344
    %v5346 = vsel %vm5340, %v5343, %v5345
    %v5347 = vsel %vm5339, %v5326, %v5329
    %v5348 = vsel %vm5342, %v5335, 920167782
    %v5349 = vsel %vm5341, %v5332, %v5348
    %v5350 = vsel %vm5340, %v5347, %v5349
    %v5351 = vsel %vm5339, %v5329, %v5332
    %v5352 = vsel %vm5342, %v5338, 1326507024
    %v5353 = vsel %vm5341, %v5335, %v5352
    %v5354 = vsel %vm5340, %v5351, %v5353
    %v5355 = vshll.u32 %v5315, 8
    %v5356 = vand.u32 %v5355, 65535
    %v5357 = vshrl.u32 %v5355, 16
    %v5358 = vand.u32 %v5354, 65535
    %v5359 = vshrl.u32 %v5354, 16
    %v5360 = vmul.u32 %v5356, %v5358
    %v5361 = vmul.u32 %v5356, %v5359
    %v5362 = vmul.u32 %v5357, %v5358
    %v5363 = vmul.u32 %v5357, %v5359
    %v5364 = vshll.u32 %v5361, 16
    %v5365 = vshrl.u32 %v5361, 16
    %v5366 = vshll.u32 %v5362, 16
    %v5367 = vshrl.u32 %v5362, 16
    %vm5368 = vc.u32 %v5360, %v5364
    %v5369 = vsel %vm5368, 1, 0
    %v5370 = vadd.s32 %v5360, %v5364
    %v5371 = vadd.s32 %v5363, %v5369
    %vm5372 = vc.u32 %v5370, %v5366
    %v5373 = vsel %vm5372, 1, 0
    %v5374 = vadd.s32 %v5370, %v5366
    %v5375 = vadd.s32 %v5371, %v5373
    %v5376 = vadd.s32 %v5375, %v5365
    %v5377 = vadd.s32 %v5376, %v5367
    %v5378 = vand.u32 %v5355, 65535
    %v5379 = vshrl.u32 %v5355, 16
    %v5380 = vand.u32 %v5350, 65535
    %v5381 = vshrl.u32 %v5350, 16
    %v5382 = vmul.u32 %v5378, %v5380
    %v5383 = vmul.u32 %v5378, %v5381
    %v5384 = vmul.u32 %v5379, %v5380
    %v5385 = vmul.u32 %v5379, %v5381
    %v5386 = vshll.u32 %v5383, 16
    %v5387 = vshrl.u32 %v5383, 16
    %v5388 = vshll.u32 %v5384, 16
    %v5389 = vshrl.u32 %v5384, 16
    %vm5390 = vc.u32 %v5382, %v5386
    %v5391 = vsel %vm5390, 1, 0
    %v5392 = vadd.s32 %v5382, %v5386
    %v5393 = vadd.s32 %v5385, %v5391
    %vm5394 = vc.u32 %v5392, %v5388
    %v5395 = vsel %vm5394, 1, 0
    %v5396 = vadd.s32 %v5392, %v5388
    %v5397 = vadd.s32 %v5393, %v5395
    %v5398 = vadd.s32 %v5397, %v5387
    %v5399 = vadd.s32 %v5398, %v5389
    %v5400 = vmul.u32 %v5355, %v5346
    %v5401 = vadd.s32 %v5377, %v5396
    %vm5402 = vc.u32 %v5377, %v5396
    %v5403 = vadd.s32 %v5399, 1
    %v5404 = vsel %vm5402, %v5403, %v5399
    %v5405 = vadd.s32 %v5400, %v5404
    %v5406 = vadd.s32 %v5405, 536870912
    %v5407 = vshrl.u32 %v5406, 30
    %v5408 = vshll.u32 %v5407, 30
    %v5409 = vsub.s32 %v5405, %v5408
    %vm5410 = vcmp.lt.s32.totalorder %v5409, 0
    %v5411 = vsub.s32 0, %v5409
    %v5412 = vsel %vm5410, %v5411, %v5409
    %v5413 = vclz %v5412
    %v5414 = vsub.s32 %v5413, 2
    %vm5415 = vcmp.gt.s32.totalorder 0, %v5414
    %v5416 = vsel %vm5415, 0, %v5414
    %v5417 = vsub.s32 32, %v5416
    %v5418 = vshll.u32 %v5409, %v5416
    %v5419 = vshrl.u32 %v5401, %v5417
    %v5420 = vor.u32 %v5418, %v5419
    %v5421 = vsub.s32 4294967266, %v5416
    %v5422 = vadd.s32 %v5421, 127
    %v5423 = vshll.u32 %v5422, 23
    %v5424 = vor.u32 4788187, %v5423
    %v5425 = vand.u32 2147483647, %v5424
    %v5427 = vcvt.s32.f32 %v5420
    %v5428 = vmul.f32 %v5427, %v5425
    %v5429 = vxor.u32 %v5428, 2147483648
    %v5430 = vsel %vm5309, %v5429, %v5428
    %v5431 = vsub.s32 4, %v5407
    %v5432 = vsel %vm5309, %v5431, %v5407
    %v5433 = vsel %vm5308, %v531, %v5430
    %v5434 = vsel %vm5308, 0, %v5432
    %v5435 = vmul.f32 %v5433, %v5433
    %v5436 = vmul.f32 %v5435, -0.001358992
    %v5437 = vadd.f32 %v5436, 0.041655596
    %v5438 = vmul.f32 %v5435, %v5437
    %v5439 = vadd.f32 %v5438, -0.4999988
    %v5440 = vmul.f32 %v5435, %v5439
    %v5441 = vadd.f32 1.0, %v5440
    %v5442 = vmul.f32 %v5433, %v5433
    %v5443 = vmul.f32 %v5442, -0.00019511016
    %v5444 = vadd.f32 %v5443, 0.008332121
    %v5445 = vmul.f32 %v5442, %v5444
    %v5446 = vadd.f32 %v5445, -0.16666654
    %v5447 = vmul.f32 %v5442, %v5446
    %v5448 = vadd.f32 %v5447, 1.0
    %v5449 = vmul.f32 %v5448, %v5433
    %vm5450 = vweird.f32 %v531
    %v5451 = vand.u32 %v5434, 3
    %vm5452 = vcmp.lt.s32.totalorder %v5451, 2
    %vm5453 = vcmp.eq.s32.totalorder %v5451, 0
    %v5454 = vxor.u32 %v5449, 2147483648
    %v5455 = vsel %vm5453, %v5441, %v5454
    %vm5456 = vcmp.eq.s32.totalorder %v5451, 2
    %v5457 = vxor.u32 %v5441, 2147483648
    %v5458 = vsel %vm5456, %v5457, %v5449
    %v5459 = vsel %vm5452, %v5455, %v5458
    %v5460 = vsel %vm5450, nan, %v5459
    %v5461 = vmul.f32 %v686, 0.35355338
    %v5462 = vmul.f32 %v840, 0.35355338
    %v5463 = vmul.f32 %v994, 0.35355338
    %v5464 = vmul.f32 %v1148, 0.35355338
    %v5465 = vmul.f32 %v1302, 0.35355338
    %v5466 = vmul.f32 %v1456, 0.35355338
    %v5467 = vmul.f32 %v1610, 0.35355338
    %v5468 = vmul.f32 %v1764, 0.35355338
    %v5469 = vmul.f32 %v1918, 0.35355338
    %v5470 = vmul.f32 %v2072, 0.35355338
    %v5471 = vmul.f32 %v2226, 0.35355338
    %v5472 = vmul.f32 %v2380, 0.35355338
    %v5473 = vmul.f32 %v2534, 0.35355338
    %v5474 = vmul.f32 %v2688, 0.35355338
    %v5475 = vmul.f32 %v2842, 0.35355338
    %v5476 = vmul.f32 %v2996, 0.35355338
    %v5477 = vmul.f32 %v3150, 0.35355338
    %v5478 = vmul.f32 %v3304, 0.35355338
    %v5479 = vmul.f32 %v3458, 0.35355338
    %v5480 = vmul.f32 %v3612, 0.35355338
    %v5481 = vmul.f32 %v3766, 0.35355338
    %v5482 = vmul.f32 %v3920, 0.35355338
    %v5483 = vmul.f32 %v4074, 0.35355338
    %v5484 = vmul.f32 %v4228, 0.35355338
    %v5485 = vmul.f32 %v4382, 0.35355338
    %v5486 = vmul.f32 %v4536, 0.35355338
    %v5487 = vmul.f32 %v4690, 0.35355338
    %v5488 = vmul.f32 %v4844, 0.35355338
    %v5489 = vmul.f32 %v4998, 0.35355338
    %v5490 = vmul.f32 %v5152, 0.35355338
    %v5491 = vmul.f32 %v5306, 0.35355338
    %v5492 = vmul.f32 %v5460, 0.35355338
    %5493 = vst [vmem:[#allocation3] sm:$0xff] %v5461
    %5494 = vst [vmem:[#allocation3 + $0x8] sm:$0xff] %v5462
    %5495 = vst [vmem:[#allocation3 + $0x10] sm:$0xff] %v5463
    %5496 = vst [vmem:[#allocation3 + $0x18] sm:$0xff] %v5464
    %5497 = vst [vmem:[#allocation3 + $0x20] sm:$0xff] %v5465
    %5498 = vst [vmem:[#allocation3 + $0x28] sm:$0xff] %v5466
    %5499 = vst [vmem:[#allocation3 + $0x30] sm:$0xff] %v5467
    %5500 = vst [vmem:[#allocation3 + $0x38] sm:$0xff] %v5468
    %5501 = vst [vmem:[#allocation3 + $0x40] sm:$0xff] %v5469
    %5502 = vst [vmem:[#allocation3 + $0x48] sm:$0xff] %v5470
    %5503 = vst [vmem:[#allocation3 + $0x50] sm:$0xff] %v5471
    %5504 = vst [vmem:[#allocation3 + $0x58] sm:$0xff] %v5472
    %5505 = vst [vmem:[#allocation3 + $0x60] sm:$0xff] %v5473
    %5506 = vst [vmem:[#allocation3 + $0x68] sm:$0xff] %v5474
    %5507 = vst [vmem:[#allocation3 + $0x70] sm:$0xff] %v5475
    %5508 = vst [vmem:[#allocation3 + $0x78] sm:$0xff] %v5476
    %5509 = vst [vmem:[#allocation3 + $0x80] sm:$0xff] %v5477
    %5510 = vst [vmem:[#allocation3 + $0x88] sm:$0xff] %v5478
    %5511 = vst [vmem:[#allocation3 + $0x90] sm:$0xff] %v5479
    %5512 = vst [vmem:[#allocation3 + $0x98] sm:$0xff] %v5480
    %5513 = vst [vmem:[#allocation3 + $0xa0] sm:$0xff] %v5481
    %5514 = vst [vmem:[#allocation3 + $0xa8] sm:$0xff] %v5482
    %5515 = vst [vmem:[#allocation3 + $0xb0] sm:$0xff] %v5483
    %5516 = vst [vmem:[#allocation3 + $0xb8] sm:$0xff] %v5484
    %5517 = vst [vmem:[#allocation3 + $0xc0] sm:$0xff] %v5485
    %5518 = vst [vmem:[#allocation3 + $0xc8] sm:$0xff] %v5486
    %5519 = vst [vmem:[#allocation3 + $0xd0] sm:$0xff] %v5487
    %5520 = vst [vmem:[#allocation3 + $0xd8] sm:$0xff] %v5488
    %5521 = vst [vmem:[#allocation3 + $0xe0] sm:$0xff] %v5489
    %5522 = vst [vmem:[#allocation3 + $0xe8] sm:$0xff] %v5490
    %5523 = vst [vmem:[#allocation3 + $0xf0] sm:$0xff] %v5491
    %5524 = vst [vmem:[#allocation3 + $0xf8] sm:$0xff] %v5492
    // Predicated region
    $region18: #{tpu_custom_call.1} parent=1 // pred_check
      _
    $region19: #{tpu_custom_call.1} parent=1 // pred_check_branch
      %5526 = sbr.rel (0) target = $region21
    $region20: #{tpu_custom_call.1} parent=1 // pred_region
      %5528 = vsyncadd [#allocation4], 0
      %s5529 = sshll.u32 [#allocation3], 4
      %s5530 = int_to_ptr.vmem [resolvable:$true] %s5529
      %s5531 = sshll.u32 %s3, 4
      %s5532 = int_to_ptr.hbm [resolvable:$true] %s5531
      %5537 = dma.vmem_to_hbm [thread:$0]  %s5530, 4096, %s5532, [#allocation4], 256, 256, 16
    $region21: #{tpu_custom_call.1} parent=1 // pred_fallthru
      _
    // Predicated region
    $region22: #{tpu_custom_call.1} parent=1 // pred_check
      _
    $region23: #{tpu_custom_call.1} parent=1 // pred_check_branch
      %5539 = sbr.rel (0) target = $region25
    $region24: #{tpu_custom_call.1} parent=1 // pred_region
      %5541 = dma.done [#allocation4], 4096
    $region25: #{tpu_custom_call.1} parent=1 // pred_fallthru
      _
    %5542 = vsyncpa [#allocation4], 1

</llo_original>
